<compile_context>
chip_gen: v7x
topology: tpu7x:2x2x1
jax: 0.10.0
libtpu: 0.0.40
codegen_flags: <defaults>
</compile_context>

<pallas_src>
import numpy as np
import jax
import jax.numpy as jnp
from jax.experimental import pallas as pl
from jax.experimental.pallas import tpu as pltpu

F32 = jnp.float32
EPS = 1e-5


# ------------------------------------------------------------------ in-kernel math utils
def _erf(x):
    # torch GELU(approximate='none') uses exact erf; Abramowitz & Stegun 7.1.26 rational
    # approximation (|err| < 1.5e-7), effectively exact in float32.
    a1, a2, a3, a4, a5 = (0.254829592, -0.284496736, 1.421413741,
                          -1.453152027, 1.061405429)
    p = 0.3275911
    ax = jnp.abs(x)
    t = 1.0 / (1.0 + p * ax)
    poly = ((((a5 * t + a4) * t + a3) * t + a2) * t + a1) * t
    y = 1.0 - poly * jnp.exp(-ax * ax)
    return jnp.where(x >= 0, y, -y)


def _gelu(x):
    return 0.5 * x * (1.0 + _erf(x * 0.7071067811865476))


def _shift_lanes(x, s):
    """y[..., n] = x[..., n + s] (static s), zero padded outside [0, N)."""
    if s == 0:
        return x
    n = x.shape[-1]
    pad = jnp.zeros(x.shape[:-1] + (abs(s),), x.dtype)
    if s > 0:
        return jnp.concatenate([x[..., s:], pad], axis=-1)
    return jnp.concatenate([pad, x[..., :n + s]], axis=-1)


def _dw_conv(x, w_ref, b_ref, shifts, mask_ref):
    """Depthwise conv over flattened tokens.

    x: (C, N);  w_ref: (K, C, 1) per-tap per-channel weights;  b_ref: (C, 1);
    shifts: static per-tap token offsets;  mask_ref: (K, 1, N) 0/1 column masks or None.
    """
    acc = None
    for k, s in enumerate(shifts):
        t = _shift_lanes(x, s)
        if mask_ref is not None:
            t = t * mask_ref[k]
        t = t * w_ref[k]
        acc = t if acc is None else acc + t
    return acc + b_ref[...]


def _channel_stats(y):
    """Per-channel (mean, sum of squared deviations) over the token (lane) axis."""
    mu = jnp.mean(y, axis=1, keepdims=True)
    m2 = jnp.sum(jnp.square(y - mu), axis=1, keepdims=True)
    return mu, m2


# ------------------------------------------------------------------ structural constants
def upsample_bilinear2_matrix(h, w):
    # nn.Upsample(scale_factor=2, mode='bilinear', align_corners=True) as (N2, N) matrix.
    def axis_mat(n_in, n_out):
        A = np.zeros((n_out, n_in), np.float32)
        if n_in == 1:
            A[:, 0] = 1.0
            return A
        scale = (n_in - 1) / (n_out - 1)
        for i in range(n_out):
            src = i * scale
            i0 = int(np.floor(src))
            i1 = min(i0 + 1, n_in - 1)
            f = src - i0
            A[i, i0] += 1.0 - f
            A[i, i1] += f
        return A
    return np.kron(axis_mat(h, 2 * h), axis_mat(w, 2 * w))  # (4hw, hw)


def col_masks(H, W, col_shifts):
    """0/1 masks over flattened tokens: valid iff 0 <= (n % W) + shift < W."""
    j = np.arange(H * W) % W
    m = np.stack([((j + s >= 0) & (j + s < W)).astype(np.float32) for s in col_shifts])
    return m.reshape(len(col_shifts), 1, H * W)


# --------------------------------------------------------------------------- kernels
def _make_stage1(shifts_h, shifts_v):
    # forward_lpg (channel-major) + sc_h / sc_v up to the pre-BatchNorm activations.
    def kernel(xc_ref,
               wq_ref, bq_ref, wk_ref, bk_ref, wl_ref, bl_ref,
               wh_ref, bh_ref, w1h_ref, b1h_ref,
               wv_ref, bv_ref, mv_ref, w1v_ref, b1v_ref,
               pl_out, yh_out, yv_out, hmu_out, hm2_out, vmu_out, vm2_out):
        xc = xc_ref[...]                                      # (C, N)

        # ---- forward_lpg, channel-major: Linear(y = x @ W^T + b) == W @ x_ch + b_col --
        gap = jnp.mean(xc, axis=1, keepdims=True)             # AdaptiveAvgPool2d((1,1))
        xg = gap * xc
        xq = jnp.dot(wq_ref[...], xg, preferred_element_type=F32) + bq_ref[...]
        xk = jnp.dot(wk_ref[...], xg, preferred_element_type=F32) + bk_ref[...]
        xval = jax.nn.sigmoid(xq) * xk + xg
        pl_out[...] = jnp.dot(wl_ref[...], xval,
                              preferred_element_type=F32) + bl_ref[...]   # prompt_l (C,N)

        # ---- forward_hpg pre-BN branches ----
        h_br = _gelu(_dw_conv(xc, wh_ref, bh_ref, shifts_h, None))        # dw 5x1
        yh = jnp.dot(w1h_ref[...], h_br, preferred_element_type=F32) + b1h_ref[...]
        yh_out[...] = yh
        hmu_out[...], hm2_out[...] = _channel_stats(yh)

        v_br = _gelu(_dw_conv(xc, wv_ref, bv_ref, shifts_v, mv_ref))      # dw 1x5
        yv = jnp.dot(w1v_ref[...], v_br, preferred_element_type=F32) + b1v_ref[...]
        yv_out[...] = yv
        vmu_out[...], vm2_out[...] = _channel_stats(yv)
    return kernel


def _make_stage2(scale, shifts_d):
    # folded BN -> conv_h -> attention -> linear_p -> LayerNorm -> upsample -> dsc(pre-BN)
    def kernel(xc_ref, plc_ref, yh_ref, yv_ref,
               bnh_s_ref, bnh_t_ref, bnv_s_ref, bnv_t_ref,
               wch_ref, bch_ref,
               wo_ref, bo_ref, wp_ref, bp_ref, g_ref, beta_ref,
               um_ref,
               wd_ref, bd_ref, md_ref, w1d_ref, b1d_ref,
               up_out, yd_out, dmu_out, dm2_out):
        xc = xc_ref[...]                                                  # (C, N)
        x_v = jnp.dot(wo_ref[...], xc, preferred_element_type=F32) + bo_ref[...]

        h_br = yh_ref[...] * bnh_s_ref[...] + bnh_t_ref[...]              # BN(sc_h)
        v_br = yv_ref[...] * bnv_s_ref[...] + bnv_t_ref[...]              # BN(sc_v)
        x_q = jnp.dot(wch_ref[...], h_br + v_br,
                      preferred_element_type=F32) + bch_ref[...]          # prompt_h (C,N)
        x_k = plc_ref[...]                                                # prompt_l (C,N)

        # attention, stored transposed: attn_t[m, n] = sum_c K[c, m] * Q[c, n] * scale
        attn_t = jax.lax.dot_general(x_k, x_q, (((0,), (0,)), ((), ())),
                                     preferred_element_type=F32) * scale
        attn_t = attn_t - jnp.max(attn_t, axis=0, keepdims=True)
        e = jnp.exp(attn_t)
        p_t = e * pl.reciprocal(jnp.sum(e, axis=0, keepdims=True), approx=True)
        prompt = jnp.dot(x_v, p_t, preferred_element_type=F32)            # (C, N)
        prompt = jnp.dot(wp_ref[...], prompt,
                         preferred_element_type=F32) + bp_ref[...] + x_v

        # LayerNorm over channels (sublane axis)
        mu = jnp.mean(prompt, axis=0, keepdims=True)
        d = prompt - mu
        var = jnp.mean(d * d, axis=0, keepdims=True)
        p_norm = d * jax.lax.rsqrt(var + EPS) * g_ref[...] + beta_ref[...]

        # bilinear 2x upsample (align_corners=True) as a single matmul over tokens
        up = jnp.dot(p_norm, um_ref[...], preferred_element_type=F32)     # (C, N2)
        up_out[...] = up

        # dsc, pre-BN: depthwise 3x3 -> GELU -> 1x1
        yd = _gelu(_dw_conv(up, wd_ref, bd_ref, shifts_d, md_ref))
        yd = jnp.dot(w1d_ref[...], yd, preferred_element_type=F32) + b1d_ref[...]
        yd_out[...] = yd
        dmu_out[...], dm2_out[...] = _channel_stats(yd)
    return kernel


def _stage3_kernel(yd_ref, up_ref, s_ref, t_ref, o_ref):
    # out = BatchNorm(dsc pre-BN) + upsampled residual, BN folded to scale/shift.
    o_ref[...] = yd_ref[...] * s_ref[...] + t_ref[...] + up_ref[...]


# -------------------------------------------------------------------------- forward
def hpb_forward(x_nchw, params):
    B, C, H0, W0 = x_nchw.shape
    h, w = H0 // 2, W0 // 2
    N, N2 = h * w, H0 * W0
    scale = C ** (-0.5)

    # plain-JAX glue: AvgPool2d(2,2) as a reshape-mean, already in kernel layout (B,C,N).
    x_c = x_nchw.reshape(B, C, h, 2, w, 2).mean(axis=(3, 5)).reshape(B, C, N)

    # static structural constants (small: O(N) masks + one interpolation matrix)
    um_t = jnp.asarray(upsample_bilinear2_matrix(h, w).T)                  # (N, N2)
    shifts_h = [(k - 2) * w for k in range(5)]                             # dw 5x1
    shifts_v = [k - 2 for k in range(5)]                                   # dw 1x5
    shifts_d = [(a - 1) * W0 + (b - 1) for a in range(3) for b in range(3)]
    mask_v = jnp.asarray(col_masks(h, w, [k - 2 for k in range(5)]))       # (5, 1, N)
    mask_d = jnp.asarray(col_masks(H0, W0,
                                   [b - 1 for _ in range(3) for b in range(3)]))

    col = lambda v: v.reshape(C, 1)
    pwm = lambda W: W[:, :, 0, 0]              # 1x1 conv -> (Cout, Cin) for W @ x

    # lpg weights (channel-major: W @ x + b_col)
    wq, bq = params['q_w'], col(params['q_b'])
    wk, bk = params['k_w'], col(params['k_b'])
    wl, bl = params['l_w'], col(params['l_b'])
    # hpg depthwise / pointwise weights (channel-major)
    wh = params['sch_dw_w'][:, 0, :, 0].T.reshape(5, C, 1)
    wv = params['scv_dw_w'][:, 0, 0, :].T.reshape(5, C, 1)
    bh, bv = col(params['sch_dw_b']), col(params['scv_dw_b'])
    w1h, b1h = pwm(params['sch_pw_w']), col(params['sch_pw_b'])
    w1v, b1v = pwm(params['scv_pw_w']), col(params['scv_pw_b'])
    # pgc / dsc weights
    wch, bch = pwm(params['conv_h_w']), col(params['conv_h_b'])
    wo, bo = params['linear_o_w'], col(params['linear_o_b'])
    wp, bp = params['linear_p_w'], col(params['linear_p_b'])
    g_ln, b_ln = col(params['ln_g']), col(params['ln_b'])
    wd = params['dsc_dw_w'][:, 0].reshape(C, 9).T.reshape(9, C, 1)
    bd = col(params['dsc_dw_b'])
    w1d, b1d = pwm(params['dsc_pw_w']), col(params['dsc_pw_b'])

    # BlockSpecs: one batch tile per grid step; constants resident via constant index map.
    act_n_c = pl.BlockSpec((None, C, N), lambda b: (b, 0, 0))
    act_n2_c = pl.BlockSpec((None, C, N2), lambda b: (b, 0, 0))
    stat_c = pl.BlockSpec((None, C, 1), lambda b: (b, 0, 0))

    def const_spec(a):
        z = (0,) * a.ndim
        return pl.BlockSpec(a.shape, lambda b, _z=z: _z)

    cparams = pltpu.CompilerParams(
        dimension_semantics=("parallel",),
        vmem_limit_bytes=32 * 1024 * 1024,
    )

    # ---- stage 1: lpg + sc_h / sc_v pre-BN (+ per-batch channel stats) ----
    consts1 = (wq, bq, wk, bk, wl, bl, wh, bh, w1h, b1h, wv, bv, mask_v, w1v, b1v)
    prompt_lc, yh, yv, h_mu, h_m2, v_mu, v_m2 = pl.pallas_call(
        _make_stage1(shifts_h, shifts_v),
        grid=(B,),
        in_specs=[act_n_c] + [const_spec(a) for a in consts1],
        out_specs=[act_n_c, act_n_c, act_n_c, stat_c, stat_c, stat_c, stat_c],
        out_shape=[jax.ShapeDtypeStruct((B, C, N), F32)] * 3
                  + [jax.ShapeDtypeStruct((B, C, 1), F32)] * 4,
        compiler_params=cparams,
    )(x_c, *consts1)

    # training-mode BatchNorm2d statistics (global over B,H,W) folded to scale/shift,
    # combined from per-batch (mean, M2) via the parallel (Chan et al.) formula --
    # centered and numerically stable, no full-activation re-read from HBM.
    def fold_bn(mu_b, m2_b, gamma, beta, n_tok):
        mu_b, m2_b = mu_b[..., 0], m2_b[..., 0]                 # (B, C)
        mean = jnp.mean(mu_b, axis=0)                           # equal-sized groups
        m2 = jnp.sum(m2_b, axis=0) + n_tok * jnp.sum(jnp.square(mu_b - mean), axis=0)
        var = m2 / (mu_b.shape[0] * n_tok)                      # biased (training BN)
        s = gamma * jax.lax.rsqrt(var + EPS)
        return s.reshape(C, 1), (beta - mean * s).reshape(C, 1)

    bnh_s, bnh_t = fold_bn(h_mu, h_m2, params['sch_bn_g'], params['sch_bn_b'], N)
    bnv_s, bnv_t = fold_bn(v_mu, v_m2, params['scv_bn_g'], params['scv_bn_b'], N)

    # ---- stage 2: conv_h + attention + LayerNorm + upsample + dsc pre-BN ----
    consts2 = (bnh_s, bnh_t, bnv_s, bnv_t, wch, bch, wo, bo, wp, bp, g_ln, b_ln,
               um_t, wd, bd, mask_d, w1d, b1d)
    up, yd, d_mu, d_m2 = pl.pallas_call(
        _make_stage2(scale, shifts_d),
        grid=(B,),
        in_specs=[act_n_c, act_n_c, act_n_c, act_n_c] + [const_spec(a) for a in consts2],
        out_specs=[act_n2_c, act_n2_c, stat_c, stat_c],
        out_shape=[jax.ShapeDtypeStruct((B, C, N2), F32)] * 2
                  + [jax.ShapeDtypeStruct((B, C, 1), F32)] * 2,
        compiler_params=cparams,
    )(x_c, prompt_lc, yh, yv, *consts2)

    bnd_s, bnd_t = fold_bn(d_mu, d_m2, params['dsc_bn_g'], params['dsc_bn_b'], N2)

    # ---- stage 3: folded dsc BatchNorm + residual ----
    out = pl.pallas_call(
        _stage3_kernel,
        grid=(B,),
        in_specs=[act_n2_c, act_n2_c, const_spec(bnd_s), const_spec(bnd_t)],
        out_specs=act_n2_c,
        out_shape=jax.ShapeDtypeStruct((B, C, N2), F32),
        compiler_params=cparams,
    )(yd, up, bnd_s, bnd_t)

    return out.reshape(B, C, H0, W0)


# ---------------------------------------------------------------------------- params
def init_params(key, C):
    ks = jax.random.split(key, 32)
    wgen = lambda i, shape, s=0.2: s * jax.random.normal(ks[i], shape, F32)
    p = {}
    p['linear_o_w'] = wgen(0, (C, C)); p['linear_o_b'] = wgen(1, (C,), 0.05)
    p['linear_p_w'] = wgen(2, (C, C)); p['linear_p_b'] = wgen(3, (C,), 0.05)
    p['ln_g'] = 1.0 + wgen(4, (C,), 0.05); p['ln_b'] = wgen(5, (C,), 0.05)
    p['q_w'] = wgen(6, (C, C)); p['q_b'] = wgen(7, (C,), 0.05)
    p['k_w'] = wgen(8, (C, C)); p['k_b'] = wgen(9, (C,), 0.05)
    p['l_w'] = wgen(10, (C, C)); p['l_b'] = wgen(11, (C,), 0.05)
    p['sch_dw_w'] = wgen(12, (C, 1, 5, 1)); p['sch_dw_b'] = wgen(13, (C,), 0.05)
    p['sch_pw_w'] = wgen(14, (C, C, 1, 1)); p['sch_pw_b'] = wgen(15, (C,), 0.05)
    p['sch_bn_g'] = 1.0 + wgen(16, (C,), 0.05); p['sch_bn_b'] = wgen(17, (C,), 0.05)
    p['scv_dw_w'] = wgen(18, (C, 1, 1, 5)); p['scv_dw_b'] = wgen(19, (C,), 0.05)
    p['scv_pw_w'] = wgen(20, (C, C, 1, 1)); p['scv_pw_b'] = wgen(21, (C,), 0.05)
    p['scv_bn_g'] = 1.0 + wgen(22, (C,), 0.05); p['scv_bn_b'] = wgen(23, (C,), 0.05)
    p['conv_h_w'] = wgen(24, (C, C, 1, 1)); p['conv_h_b'] = wgen(25, (C,), 0.05)
    p['dsc_dw_w'] = wgen(26, (C, 1, 3, 3)); p['dsc_dw_b'] = wgen(27, (C,), 0.05)
    p['dsc_pw_w'] = wgen(28, (C, C, 1, 1)); p['dsc_pw_b'] = wgen(29, (C,), 0.05)
    p['dsc_bn_g'] = 1.0 + wgen(30, (C,), 0.05); p['dsc_bn_b'] = wgen(31, (C,), 0.05)
    return p


if __name__ == "__main__":
    B, C, H0, W0 = 2, 4, 16, 16
    key = jax.random.PRNGKey(0)
    k_x, k_p = jax.random.split(key)
    x = jax.random.normal(k_x, (B, C, H0, W0), F32)
    params = init_params(k_p, C)

    fwd = jax.jit(hpb_forward)
    out = jax.block_until_ready(fwd(x, params))

    assert out.shape == (B, C, H0, W0), out.shape
    assert bool(jnp.all(jnp.isfinite(out)))
    print("KERNEL_OK")
</pallas_src>

<mosaic_0001>
module attributes {stable_mosaic.version = 11 : i64} {
  func.func @kernel(%arg0: i32, %arg1: memref<1x4x64xf32, #tpu.memory_space<vmem>>, %arg2: memref<4x4xf32, #tpu.memory_space<vmem>>, %arg3: memref<4x1xf32, #tpu.memory_space<vmem>>, %arg4: memref<4x4xf32, #tpu.memory_space<vmem>>, %arg5: memref<4x1xf32, #tpu.memory_space<vmem>>, %arg6: memref<4x4xf32, #tpu.memory_space<vmem>>, %arg7: memref<4x1xf32, #tpu.memory_space<vmem>>, %arg8: memref<5x4x1xf32, #tpu.memory_space<vmem>>, %arg9: memref<4x1xf32, #tpu.memory_space<vmem>>, %arg10: memref<4x4xf32, #tpu.memory_space<vmem>>, %arg11: memref<4x1xf32, #tpu.memory_space<vmem>>, %arg12: memref<5x4x1xf32, #tpu.memory_space<vmem>>, %arg13: memref<4x1xf32, #tpu.memory_space<vmem>>, %arg14: memref<5x1x64xf32, #tpu.memory_space<vmem>>, %arg15: memref<4x4xf32, #tpu.memory_space<vmem>>, %arg16: memref<4x1xf32, #tpu.memory_space<vmem>>, %arg17: memref<1x4x64xf32, #tpu.memory_space<vmem>>, %arg18: memref<1x4x64xf32, #tpu.memory_space<vmem>>, %arg19: memref<1x4x64xf32, #tpu.memory_space<vmem>>, %arg20: memref<1x4x1xf32, #tpu.memory_space<vmem>>, %arg21: memref<1x4x1xf32, #tpu.memory_space<vmem>>, %arg22: memref<1x4x1xf32, #tpu.memory_space<vmem>>, %arg23: memref<1x4x1xf32, #tpu.memory_space<vmem>>) attributes {dimension_semantics = [#tpu.dimension_semantics<parallel>], iteration_bounds = array<i64: 2>, scalar_prefetch = 0 : i64, scratch_operands = 0 : i64, tpu.core_type = #tpu.core_type<tc>, window_params = [{transform_indices = @transform_0, window_bounds = array<i64: 1, 4, 64>}, {pipeline_mode = #tpu.pipeline_mode<synchronous>, transform_indices = @transform_1, window_bounds = array<i64: 4, 4>}, {pipeline_mode = #tpu.pipeline_mode<synchronous>, transform_indices = @transform_2, window_bounds = array<i64: 4, 1>}, {pipeline_mode = #tpu.pipeline_mode<synchronous>, transform_indices = @transform_3, window_bounds = array<i64: 4, 4>}, {pipeline_mode = #tpu.pipeline_mode<synchronous>, transform_indices = @transform_4, window_bounds = array<i64: 4, 1>}, {pipeline_mode = #tpu.pipeline_mode<synchronous>, transform_indices = @transform_5, window_bounds = array<i64: 4, 4>}, {pipeline_mode = #tpu.pipeline_mode<synchronous>, transform_indices = @transform_6, window_bounds = array<i64: 4, 1>}, {pipeline_mode = #tpu.pipeline_mode<synchronous>, transform_indices = @transform_7, window_bounds = array<i64: 5, 4, 1>}, {pipeline_mode = #tpu.pipeline_mode<synchronous>, transform_indices = @transform_8, window_bounds = array<i64: 4, 1>}, {pipeline_mode = #tpu.pipeline_mode<synchronous>, transform_indices = @transform_9, window_bounds = array<i64: 4, 4>}, {pipeline_mode = #tpu.pipeline_mode<synchronous>, transform_indices = @transform_10, window_bounds = array<i64: 4, 1>}, {pipeline_mode = #tpu.pipeline_mode<synchronous>, transform_indices = @transform_11, window_bounds = array<i64: 5, 4, 1>}, {pipeline_mode = #tpu.pipeline_mode<synchronous>, transform_indices = @transform_12, window_bounds = array<i64: 4, 1>}, {pipeline_mode = #tpu.pipeline_mode<synchronous>, transform_indices = @transform_13, window_bounds = array<i64: 5, 1, 64>}, {pipeline_mode = #tpu.pipeline_mode<synchronous>, transform_indices = @transform_14, window_bounds = array<i64: 4, 4>}, {pipeline_mode = #tpu.pipeline_mode<synchronous>, transform_indices = @transform_15, window_bounds = array<i64: 4, 1>}, {transform_indices = @transform_16, window_bounds = array<i64: 1, 4, 64>}, {transform_indices = @transform_17, window_bounds = array<i64: 1, 4, 64>}, {transform_indices = @transform_18, window_bounds = array<i64: 1, 4, 64>}, {transform_indices = @transform_19, window_bounds = array<i64: 1, 4, 1>}, {transform_indices = @transform_20, window_bounds = array<i64: 1, 4, 1>}, {transform_indices = @transform_21, window_bounds = array<i64: 1, 4, 1>}, {transform_indices = @transform_22, window_bounds = array<i64: 1, 4, 1>}]} {
    %c0 = arith.constant 0 : index
    %c0_0 = arith.constant 0 : index
    %c0_1 = arith.constant 0 : index
    %0 = vector.load %arg1[%c0, %c0_0, %c0_1] : memref<1x4x64xf32, #tpu.memory_space<vmem>>, vector<1x4x64xf32>
    %1 = vector.shape_cast %0 : vector<1x4x64xf32> to vector<4x64xf32>
    %cst = arith.constant dense<0.000000e+00> : vector<4xf32>
    %2 = vector.multi_reduction <add>, %1, %cst [1] : vector<4x64xf32> to vector<4xf32>
    %3 = vector.shape_cast %2 : vector<4xf32> to vector<4x1xf32>
    %cst_2 = arith.constant 6.400000e+01 : f32
    %4 = vector.broadcast %cst_2 : f32 to vector<4x1xf32>
    %5 = arith.divf %3, %4 : vector<4x1xf32>
    %6 = vector.broadcast %5 : vector<4x1xf32> to vector<4x64xf32>
    %7 = arith.mulf %6, %1 : vector<4x64xf32>
    %c0_3 = arith.constant 0 : index
    %c0_4 = arith.constant 0 : index
    %8 = vector.load %arg2[%c0_3, %c0_4] : memref<4x4xf32, #tpu.memory_space<vmem>>, vector<4x4xf32>
    %cst_5 = arith.constant dense<0.000000e+00> : vector<4x64xf32>
    %9 = tpu.matmul %8, %7, %cst_5 {dimension_numbers = #tpu.dot_dimension_numbers<[1], [0], [0], [1], [0, 0, 1, 1], [], []>} : vector<4x4xf32>, vector<4x64xf32>, vector<4x64xf32> -> vector<4x64xf32>
    %c0_6 = arith.constant 0 : index
    %c0_7 = arith.constant 0 : index
    %10 = vector.load %arg3[%c0_6, %c0_7] : memref<4x1xf32, #tpu.memory_space<vmem>>, vector<4x1xf32>
    %11 = vector.broadcast %10 : vector<4x1xf32> to vector<4x64xf32>
    %12 = arith.addf %9, %11 : vector<4x64xf32>
    %c0_8 = arith.constant 0 : index
    %c0_9 = arith.constant 0 : index
    %13 = vector.load %arg4[%c0_8, %c0_9] : memref<4x4xf32, #tpu.memory_space<vmem>>, vector<4x4xf32>
    %cst_10 = arith.constant dense<0.000000e+00> : vector<4x64xf32>
    %14 = tpu.matmul %13, %7, %cst_10 {dimension_numbers = #tpu.dot_dimension_numbers<[1], [0], [0], [1], [0, 0, 1, 1], [], []>} : vector<4x4xf32>, vector<4x64xf32>, vector<4x64xf32> -> vector<4x64xf32>
    %c0_11 = arith.constant 0 : index
    %c0_12 = arith.constant 0 : index
    %15 = vector.load %arg5[%c0_11, %c0_12] : memref<4x1xf32, #tpu.memory_space<vmem>>, vector<4x1xf32>
    %16 = vector.broadcast %15 : vector<4x1xf32> to vector<4x64xf32>
    %17 = arith.addf %14, %16 : vector<4x64xf32>
    %18 = arith.negf %12 : vector<4x64xf32>
    %19 = math.exp %18 : vector<4x64xf32>
    %cst_13 = arith.constant 1.000000e+00 : f32
    %20 = vector.broadcast %cst_13 : f32 to vector<4x64xf32>
    %21 = arith.addf %20, %19 : vector<4x64xf32>
    %22 = arith.divf %20, %21 : vector<4x64xf32>
    %23 = arith.mulf %22, %17 : vector<4x64xf32>
    %24 = arith.addf %23, %7 : vector<4x64xf32>
    %c0_14 = arith.constant 0 : index
    %c0_15 = arith.constant 0 : index
    %25 = vector.load %arg6[%c0_14, %c0_15] : memref<4x4xf32, #tpu.memory_space<vmem>>, vector<4x4xf32>
    %cst_16 = arith.constant dense<0.000000e+00> : vector<4x64xf32>
    %26 = tpu.matmul %25, %24, %cst_16 {dimension_numbers = #tpu.dot_dimension_numbers<[1], [0], [0], [1], [0, 0, 1, 1], [], []>} : vector<4x4xf32>, vector<4x64xf32>, vector<4x64xf32> -> vector<4x64xf32>
    %c0_17 = arith.constant 0 : index
    %c0_18 = arith.constant 0 : index
    %27 = vector.load %arg7[%c0_17, %c0_18] : memref<4x1xf32, #tpu.memory_space<vmem>>, vector<4x1xf32>
    %28 = vector.broadcast %27 : vector<4x1xf32> to vector<4x64xf32>
    %29 = arith.addf %26, %28 : vector<4x64xf32>
    %c0_19 = arith.constant 0 : index
    %c0_20 = arith.constant 0 : index
    %c0_21 = arith.constant 0 : index
    %30 = vector.load %arg17[%c0_19, %c0_20, %c0_21] : memref<1x4x64xf32, #tpu.memory_space<vmem>>, vector<1x4x64xf32>
    %31 = vector.shape_cast %30 : vector<1x4x64xf32> to vector<4x64xf32>
    %32 = vector.shape_cast %29 : vector<4x64xf32> to vector<1x4x64xf32>
    tpu.vector_store %arg17[%c0_19, %c0_20, %c0_21], %32 {strides = array<i32>} : memref<1x4x64xf32, #tpu.memory_space<vmem>>, vector<1x4x64xf32>,
    %cst_22 = arith.constant 0.000000e+00 : f32
    %33 = vector.broadcast %cst_22 : f32 to vector<4x16xf32>
    %34 = vector.extract_strided_slice %1 {offsets = [0, 0], sizes = [4, 48], strides = [1, 1]} : vector<4x64xf32> to vector<4x48xf32>
    %35 = tpu.concatenate %33, %34 in 1 : vector<4x16xf32>, vector<4x48xf32> -> vector<4x64xf32>
    %c0_23 = arith.constant 0 : index
    %c0_24 = arith.constant 0 : index
    %c0_25 = arith.constant 0 : index
    %36 = vector.load %arg8[%c0_23, %c0_24, %c0_25] : memref<5x4x1xf32, #tpu.memory_space<vmem>>, vector<1x4x1xf32>
    %37 = vector.shape_cast %36 : vector<1x4x1xf32> to vector<4x1xf32>
    %38 = vector.broadcast %37 : vector<4x1xf32> to vector<4x64xf32>
    %39 = arith.mulf %35, %38 : vector<4x64xf32>
    %cst_26 = arith.constant 0.000000e+00 : f32
    %40 = vector.broadcast %cst_26 : f32 to vector<4x8xf32>
    %41 = vector.extract_strided_slice %1 {offsets = [0, 0], sizes = [4, 56], strides = [1, 1]} : vector<4x64xf32> to vector<4x56xf32>
    %42 = tpu.concatenate %40, %41 in 1 : vector<4x8xf32>, vector<4x56xf32> -> vector<4x64xf32>
    %c1 = arith.constant 1 : index
    %c0_27 = arith.constant 0 : index
    %c0_28 = arith.constant 0 : index
    %43 = vector.load %arg8[%c1, %c0_27, %c0_28] : memref<5x4x1xf32, #tpu.memory_space<vmem>>, vector<1x4x1xf32>
    %44 = vector.shape_cast %43 : vector<1x4x1xf32> to vector<4x1xf32>
    %45 = vector.broadcast %44 : vector<4x1xf32> to vector<4x64xf32>
    %46 = arith.mulf %42, %45 : vector<4x64xf32>
    %47 = arith.addf %39, %46 : vector<4x64xf32>
    %c2 = arith.constant 2 : index
    %c0_29 = arith.constant 0 : index
    %c0_30 = arith.constant 0 : index
    %48 = vector.load %arg8[%c2, %c0_29, %c0_30] : memref<5x4x1xf32, #tpu.memory_space<vmem>>, vector<1x4x1xf32>
    %49 = vector.shape_cast %48 : vector<1x4x1xf32> to vector<4x1xf32>
    %50 = vector.broadcast %49 : vector<4x1xf32> to vector<4x64xf32>
    %51 = arith.mulf %1, %50 : vector<4x64xf32>
    %52 = arith.addf %47, %51 : vector<4x64xf32>
    %cst_31 = arith.constant 0.000000e+00 : f32
    %53 = vector.broadcast %cst_31 : f32 to vector<4x8xf32>
    %54 = vector.extract_strided_slice %1 {offsets = [0, 8], sizes = [4, 56], strides = [1, 1]} : vector<4x64xf32> to vector<4x56xf32>
    %55 = tpu.concatenate %54, %53 in 1 : vector<4x56xf32>, vector<4x8xf32> -> vector<4x64xf32>
    %c3 = arith.constant 3 : index
    %c0_32 = arith.constant 0 : index
    %c0_33 = arith.constant 0 : index
    %56 = vector.load %arg8[%c3, %c0_32, %c0_33] : memref<5x4x1xf32, #tpu.memory_space<vmem>>, vector<1x4x1xf32>
    %57 = vector.shape_cast %56 : vector<1x4x1xf32> to vector<4x1xf32>
    %58 = vector.broadcast %57 : vector<4x1xf32> to vector<4x64xf32>
    %59 = arith.mulf %55, %58 : vector<4x64xf32>
    %60 = arith.addf %52, %59 : vector<4x64xf32>
    %cst_34 = arith.constant 0.000000e+00 : f32
    %61 = vector.broadcast %cst_34 : f32 to vector<4x16xf32>
    %62 = vector.extract_strided_slice %1 {offsets = [0, 16], sizes = [4, 48], strides = [1, 1]} : vector<4x64xf32> to vector<4x48xf32>
    %63 = tpu.concatenate %62, %61 in 1 : vector<4x48xf32>, vector<4x16xf32> -> vector<4x64xf32>
    %c4 = arith.constant 4 : index
    %c0_35 = arith.constant 0 : index
    %c0_36 = arith.constant 0 : index
    %64 = vector.load %arg8[%c4, %c0_35, %c0_36] : memref<5x4x1xf32, #tpu.memory_space<vmem>>, vector<1x4x1xf32>
    %65 = vector.shape_cast %64 : vector<1x4x1xf32> to vector<4x1xf32>
    %66 = vector.broadcast %65 : vector<4x1xf32> to vector<4x64xf32>
    %67 = arith.mulf %63, %66 : vector<4x64xf32>
    %68 = arith.addf %60, %67 : vector<4x64xf32>
    %c0_37 = arith.constant 0 : index
    %c0_38 = arith.constant 0 : index
    %69 = vector.load %arg9[%c0_37, %c0_38] : memref<4x1xf32, #tpu.memory_space<vmem>>, vector<4x1xf32>
    %70 = vector.broadcast %69 : vector<4x1xf32> to vector<4x64xf32>
    %71 = arith.addf %68, %70 : vector<4x64xf32>
    %cst_39 = arith.constant 5.000000e-01 : f32
    %72 = vector.broadcast %cst_39 : f32 to vector<4x64xf32>
    %73 = arith.mulf %72, %71 : vector<4x64xf32>
    %cst_40 = arith.constant 0.707106769 : f32
    %74 = vector.broadcast %cst_40 : f32 to vector<4x64xf32>
    %75 = arith.mulf %71, %74 : vector<4x64xf32>
    %76 = math.absf %75 : vector<4x64xf32>
    %cst_41 = arith.constant 0.327591091 : f32
    %77 = vector.broadcast %cst_41 : f32 to vector<4x64xf32>
    %78 = arith.mulf %77, %76 : vector<4x64xf32>
    %cst_42 = arith.constant 1.000000e+00 : f32
    %79 = vector.broadcast %cst_42 : f32 to vector<4x64xf32>
    %80 = arith.addf %79, %78 : vector<4x64xf32>
    %cst_43 = arith.constant 1.000000e+00 : f32
    %81 = vector.broadcast %cst_43 : f32 to vector<4x64xf32>
    %82 = arith.divf %81, %80 : vector<4x64xf32>
    %cst_44 = arith.constant 1.06140542 : f32
    %83 = vector.broadcast %cst_44 : f32 to vector<4x64xf32>
    %84 = arith.mulf %83, %82 : vector<4x64xf32>
    %cst_45 = arith.constant -1.45315206 : f32
    %85 = vector.broadcast %cst_45 : f32 to vector<4x64xf32>
    %86 = arith.addf %84, %85 : vector<4x64xf32>
    %87 = arith.mulf %86, %82 : vector<4x64xf32>
    %cst_46 = arith.constant 1.42141378 : f32
    %88 = vector.broadcast %cst_46 : f32 to vector<4x64xf32>
    %89 = arith.addf %87, %88 : vector<4x64xf32>
    %90 = arith.mulf %89, %82 : vector<4x64xf32>
    %cst_47 = arith.constant -0.284496725 : f32
    %91 = vector.broadcast %cst_47 : f32 to vector<4x64xf32>
    %92 = arith.addf %90, %91 : vector<4x64xf32>
    %93 = arith.mulf %92, %82 : vector<4x64xf32>
    %cst_48 = arith.constant 0.254829586 : f32
    %94 = vector.broadcast %cst_48 : f32 to vector<4x64xf32>
    %95 = arith.addf %93, %94 : vector<4x64xf32>
    %96 = arith.mulf %95, %82 : vector<4x64xf32>
    %cst_49 = arith.constant 0.000000e+00 : f32
    %97 = vector.broadcast %cst_49 : f32 to vector<4x64xf32>
    %98 = arith.subf %97, %76 : vector<4x64xf32>
    %99 = arith.mulf %98, %76 : vector<4x64xf32>
    %100 = math.exp %99 : vector<4x64xf32>
    %101 = arith.mulf %96, %100 : vector<4x64xf32>
    %cst_50 = arith.constant 1.000000e+00 : f32
    %102 = vector.broadcast %cst_50 : f32 to vector<4x64xf32>
    %103 = arith.subf %102, %101 : vector<4x64xf32>
    %cst_51 = arith.constant 0.000000e+00 : f32
    %104 = vector.broadcast %cst_51 : f32 to vector<4x64xf32>
    %105 = arith.cmpf oge, %75, %104 : vector<4x64xf32>
    %cst_52 = arith.constant 0.000000e+00 : f32
    %106 = vector.broadcast %cst_52 : f32 to vector<4x64xf32>
    %107 = arith.subf %106, %103 : vector<4x64xf32>
    %108 = arith.select %105, %103, %107 : vector<4x64xi1>, vector<4x64xf32>
    %cst_53 = arith.constant 1.000000e+00 : f32
    %109 = vector.broadcast %cst_53 : f32 to vector<4x64xf32>
    %110 = arith.addf %109, %108 : vector<4x64xf32>
    %111 = arith.mulf %73, %110 : vector<4x64xf32>
    %c0_54 = arith.constant 0 : index
    %c0_55 = arith.constant 0 : index
    %112 = vector.load %arg10[%c0_54, %c0_55] : memref<4x4xf32, #tpu.memory_space<vmem>>, vector<4x4xf32>
    %cst_56 = arith.constant dense<0.000000e+00> : vector<4x64xf32>
    %113 = tpu.matmul %112, %111, %cst_56 {dimension_numbers = #tpu.dot_dimension_numbers<[1], [0], [0], [1], [0, 0, 1, 1], [], []>} : vector<4x4xf32>, vector<4x64xf32>, vector<4x64xf32> -> vector<4x64xf32>
    %c0_57 = arith.constant 0 : index
    %c0_58 = arith.constant 0 : index
    %114 = vector.load %arg11[%c0_57, %c0_58] : memref<4x1xf32, #tpu.memory_space<vmem>>, vector<4x1xf32>
    %115 = vector.broadcast %114 : vector<4x1xf32> to vector<4x64xf32>
    %116 = arith.addf %113, %115 : vector<4x64xf32>
    %c0_59 = arith.constant 0 : index
    %c0_60 = arith.constant 0 : index
    %c0_61 = arith.constant 0 : index
    %117 = vector.load %arg18[%c0_59, %c0_60, %c0_61] : memref<1x4x64xf32, #tpu.memory_space<vmem>>, vector<1x4x64xf32>
    %118 = vector.shape_cast %117 : vector<1x4x64xf32> to vector<4x64xf32>
    %119 = vector.shape_cast %116 : vector<4x64xf32> to vector<1x4x64xf32>
    tpu.vector_store %arg18[%c0_59, %c0_60, %c0_61], %119 {strides = array<i32>} : memref<1x4x64xf32, #tpu.memory_space<vmem>>, vector<1x4x64xf32>,
    %cst_62 = arith.constant dense<0.000000e+00> : vector<4xf32>
    %120 = vector.multi_reduction <add>, %116, %cst_62 [1] : vector<4x64xf32> to vector<4xf32>
    %121 = vector.shape_cast %120 : vector<4xf32> to vector<4x1xf32>
    %cst_63 = arith.constant 6.400000e+01 : f32
    %122 = vector.broadcast %cst_63 : f32 to vector<4x1xf32>
    %123 = arith.divf %121, %122 : vector<4x1xf32>
    %124 = vector.broadcast %123 : vector<4x1xf32> to vector<4x64xf32>
    %125 = arith.subf %116, %124 : vector<4x64xf32>
    %126 = arith.mulf %125, %125 : vector<4x64xf32>
    %cst_64 = arith.constant dense<0.000000e+00> : vector<4xf32>
    %127 = vector.multi_reduction <add>, %126, %cst_64 [1] : vector<4x64xf32> to vector<4xf32>
    %128 = vector.shape_cast %127 : vector<4xf32> to vector<4x1xf32>
    %c0_65 = arith.constant 0 : index
    %c0_66 = arith.constant 0 : index
    %c0_67 = arith.constant 0 : index
    %129 = vector.load %arg20[%c0_65, %c0_66, %c0_67] : memref<1x4x1xf32, #tpu.memory_space<vmem>>, vector<1x4x1xf32>
    %130 = vector.shape_cast %129 : vector<1x4x1xf32> to vector<4x1xf32>
    %131 = vector.shape_cast %123 : vector<4x1xf32> to vector<1x4x1xf32>
    tpu.vector_store %arg20[%c0_65, %c0_66, %c0_67], %131 {strides = array<i32>} : memref<1x4x1xf32, #tpu.memory_space<vmem>>, vector<1x4x1xf32>,
    %c0_68 = arith.constant 0 : index
    %c0_69 = arith.constant 0 : index
    %c0_70 = arith.constant 0 : index
    %132 = vector.load %arg21[%c0_68, %c0_69, %c0_70] : memref<1x4x1xf32, #tpu.memory_space<vmem>>, vector<1x4x1xf32>
    %133 = vector.shape_cast %132 : vector<1x4x1xf32> to vector<4x1xf32>
    %134 = vector.shape_cast %128 : vector<4x1xf32> to vector<1x4x1xf32>
    tpu.vector_store %arg21[%c0_68, %c0_69, %c0_70], %134 {strides = array<i32>} : memref<1x4x1xf32, #tpu.memory_space<vmem>>, vector<1x4x1xf32>,
    %cst_71 = arith.constant 0.000000e+00 : f32
    %135 = vector.broadcast %cst_71 : f32 to vector<4x2xf32>
    %136 = vector.extract_strided_slice %1 {offsets = [0, 0], sizes = [4, 62], strides = [1, 1]} : vector<4x64xf32> to vector<4x62xf32>
    %137 = tpu.concatenate %135, %136 in 1 : vector<4x2xf32>, vector<4x62xf32> -> vector<4x64xf32>
    %c0_72 = arith.constant 0 : index
    %c0_73 = arith.constant 0 : index
    %c0_74 = arith.constant 0 : index
    %138 = vector.load %arg14[%c0_72, %c0_73, %c0_74] : memref<5x1x64xf32, #tpu.memory_space<vmem>>, vector<1x1x64xf32>
    %139 = vector.shape_cast %138 : vector<1x1x64xf32> to vector<1x64xf32>
    %140 = vector.broadcast %139 : vector<1x64xf32> to vector<4x64xf32>
    %141 = arith.mulf %137, %140 : vector<4x64xf32>
    %c0_75 = arith.constant 0 : index
    %c0_76 = arith.constant 0 : index
    %c0_77 = arith.constant 0 : index
    %142 = vector.load %arg12[%c0_75, %c0_76, %c0_77] : memref<5x4x1xf32, #tpu.memory_space<vmem>>, vector<1x4x1xf32>
    %143 = vector.shape_cast %142 : vector<1x4x1xf32> to vector<4x1xf32>
    %144 = vector.broadcast %143 : vector<4x1xf32> to vector<4x64xf32>
    %145 = arith.mulf %141, %144 : vector<4x64xf32>
    %cst_78 = arith.constant 0.000000e+00 : f32
    %146 = vector.broadcast %cst_78 : f32 to vector<4x1xf32>
    %147 = vector.extract_strided_slice %1 {offsets = [0, 0], sizes = [4, 63], strides = [1, 1]} : vector<4x64xf32> to vector<4x63xf32>
    %148 = tpu.concatenate %146, %147 in 1 : vector<4x1xf32>, vector<4x63xf32> -> vector<4x64xf32>
    %c1_79 = arith.constant 1 : index
    %c0_80 = arith.constant 0 : index
    %c0_81 = arith.constant 0 : index
    %149 = vector.load %arg14[%c1_79, %c0_80, %c0_81] : memref<5x1x64xf32, #tpu.memory_space<vmem>>, vector<1x1x64xf32>
    %150 = vector.shape_cast %149 : vector<1x1x64xf32> to vector<1x64xf32>
    %151 = vector.broadcast %150 : vector<1x64xf32> to vector<4x64xf32>
    %152 = arith.mulf %148, %151 : vector<4x64xf32>
    %c1_82 = arith.constant 1 : index
    %c0_83 = arith.constant 0 : index
    %c0_84 = arith.constant 0 : index
    %153 = vector.load %arg12[%c1_82, %c0_83, %c0_84] : memref<5x4x1xf32, #tpu.memory_space<vmem>>, vector<1x4x1xf32>
    %154 = vector.shape_cast %153 : vector<1x4x1xf32> to vector<4x1xf32>
    %155 = vector.broadcast %154 : vector<4x1xf32> to vector<4x64xf32>
    %156 = arith.mulf %152, %155 : vector<4x64xf32>
    %157 = arith.addf %145, %156 : vector<4x64xf32>
    %c2_85 = arith.constant 2 : index
    %c0_86 = arith.constant 0 : index
    %c0_87 = arith.constant 0 : index
    %158 = vector.load %arg14[%c2_85, %c0_86, %c0_87] : memref<5x1x64xf32, #tpu.memory_space<vmem>>, vector<1x1x64xf32>
    %159 = vector.shape_cast %158 : vector<1x1x64xf32> to vector<1x64xf32>
    %160 = vector.broadcast %159 : vector<1x64xf32> to vector<4x64xf32>
    %161 = arith.mulf %1, %160 : vector<4x64xf32>
    %c2_88 = arith.constant 2 : index
    %c0_89 = arith.constant 0 : index
    %c0_90 = arith.constant 0 : index
    %162 = vector.load %arg12[%c2_88, %c0_89, %c0_90] : memref<5x4x1xf32, #tpu.memory_space<vmem>>, vector<1x4x1xf32>
    %163 = vector.shape_cast %162 : vector<1x4x1xf32> to vector<4x1xf32>
    %164 = vector.broadcast %163 : vector<4x1xf32> to vector<4x64xf32>
    %165 = arith.mulf %161, %164 : vector<4x64xf32>
    %166 = arith.addf %157, %165 : vector<4x64xf32>
    %cst_91 = arith.constant 0.000000e+00 : f32
    %167 = vector.broadcast %cst_91 : f32 to vector<4x1xf32>
    %168 = vector.extract_strided_slice %1 {offsets = [0, 1], sizes = [4, 63], strides = [1, 1]} : vector<4x64xf32> to vector<4x63xf32>
    %169 = tpu.concatenate %168, %167 in 1 : vector<4x63xf32>, vector<4x1xf32> -> vector<4x64xf32>
    %c3_92 = arith.constant 3 : index
    %c0_93 = arith.constant 0 : index
    %c0_94 = arith.constant 0 : index
    %170 = vector.load %arg14[%c3_92, %c0_93, %c0_94] : memref<5x1x64xf32, #tpu.memory_space<vmem>>, vector<1x1x64xf32>
    %171 = vector.shape_cast %170 : vector<1x1x64xf32> to vector<1x64xf32>
    %172 = vector.broadcast %171 : vector<1x64xf32> to vector<4x64xf32>
    %173 = arith.mulf %169, %172 : vector<4x64xf32>
    %c3_95 = arith.constant 3 : index
    %c0_96 = arith.constant 0 : index
    %c0_97 = arith.constant 0 : index
    %174 = vector.load %arg12[%c3_95, %c0_96, %c0_97] : memref<5x4x1xf32, #tpu.memory_space<vmem>>, vector<1x4x1xf32>
    %175 = vector.shape_cast %174 : vector<1x4x1xf32> to vector<4x1xf32>
    %176 = vector.broadcast %175 : vector<4x1xf32> to vector<4x64xf32>
    %177 = arith.mulf %173, %176 : vector<4x64xf32>
    %178 = arith.addf %166, %177 : vector<4x64xf32>
    %cst_98 = arith.constant 0.000000e+00 : f32
    %179 = vector.broadcast %cst_98 : f32 to vector<4x2xf32>
    %180 = vector.extract_strided_slice %1 {offsets = [0, 2], sizes = [4, 62], strides = [1, 1]} : vector<4x64xf32> to vector<4x62xf32>
    %181 = tpu.concatenate %180, %179 in 1 : vector<4x62xf32>, vector<4x2xf32> -> vector<4x64xf32>
    %c4_99 = arith.constant 4 : index
    %c0_100 = arith.constant 0 : index
    %c0_101 = arith.constant 0 : index
    %182 = vector.load %arg14[%c4_99, %c0_100, %c0_101] : memref<5x1x64xf32, #tpu.memory_space<vmem>>, vector<1x1x64xf32>
    %183 = vector.shape_cast %182 : vector<1x1x64xf32> to vector<1x64xf32>
    %184 = vector.broadcast %183 : vector<1x64xf32> to vector<4x64xf32>
    %185 = arith.mulf %181, %184 : vector<4x64xf32>
    %c4_102 = arith.constant 4 : index
    %c0_103 = arith.constant 0 : index
    %c0_104 = arith.constant 0 : index
    %186 = vector.load %arg12[%c4_102, %c0_103, %c0_104] : memref<5x4x1xf32, #tpu.memory_space<vmem>>, vector<1x4x1xf32>
    %187 = vector.shape_cast %186 : vector<1x4x1xf32> to vector<4x1xf32>
    %188 = vector.broadcast %187 : vector<4x1xf32> to vector<4x64xf32>
    %189 = arith.mulf %185, %188 : vector<4x64xf32>
    %190 = arith.addf %178, %189 : vector<4x64xf32>
    %c0_105 = arith.constant 0 : index
    %c0_106 = arith.constant 0 : index
    %191 = vector.load %arg13[%c0_105, %c0_106] : memref<4x1xf32, #tpu.memory_space<vmem>>, vector<4x1xf32>
    %192 = vector.broadcast %191 : vector<4x1xf32> to vector<4x64xf32>
    %193 = arith.addf %190, %192 : vector<4x64xf32>
    %cst_107 = arith.constant 5.000000e-01 : f32
    %194 = vector.broadcast %cst_107 : f32 to vector<4x64xf32>
    %195 = arith.mulf %194, %193 : vector<4x64xf32>
    %cst_108 = arith.constant 0.707106769 : f32
    %196 = vector.broadcast %cst_108 : f32 to vector<4x64xf32>
    %197 = arith.mulf %193, %196 : vector<4x64xf32>
    %198 = math.absf %197 : vector<4x64xf32>
    %cst_109 = arith.constant 0.327591091 : f32
    %199 = vector.broadcast %cst_109 : f32 to vector<4x64xf32>
    %200 = arith.mulf %199, %198 : vector<4x64xf32>
    %cst_110 = arith.constant 1.000000e+00 : f32
    %201 = vector.broadcast %cst_110 : f32 to vector<4x64xf32>
    %202 = arith.addf %201, %200 : vector<4x64xf32>
    %cst_111 = arith.constant 1.000000e+00 : f32
    %203 = vector.broadcast %cst_111 : f32 to vector<4x64xf32>
    %204 = arith.divf %203, %202 : vector<4x64xf32>
    %cst_112 = arith.constant 1.06140542 : f32
    %205 = vector.broadcast %cst_112 : f32 to vector<4x64xf32>
    %206 = arith.mulf %205, %204 : vector<4x64xf32>
    %cst_113 = arith.constant -1.45315206 : f32
    %207 = vector.broadcast %cst_113 : f32 to vector<4x64xf32>
    %208 = arith.addf %206, %207 : vector<4x64xf32>
    %209 = arith.mulf %208, %204 : vector<4x64xf32>
    %cst_114 = arith.constant 1.42141378 : f32
    %210 = vector.broadcast %cst_114 : f32 to vector<4x64xf32>
    %211 = arith.addf %209, %210 : vector<4x64xf32>
    %212 = arith.mulf %211, %204 : vector<4x64xf32>
    %cst_115 = arith.constant -0.284496725 : f32
    %213 = vector.broadcast %cst_115 : f32 to vector<4x64xf32>
    %214 = arith.addf %212, %213 : vector<4x64xf32>
    %215 = arith.mulf %214, %204 : vector<4x64xf32>
    %cst_116 = arith.constant 0.254829586 : f32
    %216 = vector.broadcast %cst_116 : f32 to vector<4x64xf32>
    %217 = arith.addf %215, %216 : vector<4x64xf32>
    %218 = arith.mulf %217, %204 : vector<4x64xf32>
    %cst_117 = arith.constant 0.000000e+00 : f32
    %219 = vector.broadcast %cst_117 : f32 to vector<4x64xf32>
    %220 = arith.subf %219, %198 : vector<4x64xf32>
    %221 = arith.mulf %220, %198 : vector<4x64xf32>
    %222 = math.exp %221 : vector<4x64xf32>
    %223 = arith.mulf %218, %222 : vector<4x64xf32>
    %cst_118 = arith.constant 1.000000e+00 : f32
    %224 = vector.broadcast %cst_118 : f32 to vector<4x64xf32>
    %225 = arith.subf %224, %223 : vector<4x64xf32>
    %cst_119 = arith.constant 0.000000e+00 : f32
    %226 = vector.broadcast %cst_119 : f32 to vector<4x64xf32>
    %227 = arith.cmpf oge, %197, %226 : vector<4x64xf32>
    %cst_120 = arith.constant 0.000000e+00 : f32
    %228 = vector.broadcast %cst_120 : f32 to vector<4x64xf32>
    %229 = arith.subf %228, %225 : vector<4x64xf32>
    %230 = arith.select %227, %225, %229 : vector<4x64xi1>, vector<4x64xf32>
    %cst_121 = arith.constant 1.000000e+00 : f32
    %231 = vector.broadcast %cst_121 : f32 to vector<4x64xf32>
    %232 = arith.addf %231, %230 : vector<4x64xf32>
    %233 = arith.mulf %195, %232 : vector<4x64xf32>
    %c0_122 = arith.constant 0 : index
    %c0_123 = arith.constant 0 : index
    %234 = vector.load %arg15[%c0_122, %c0_123] : memref<4x4xf32, #tpu.memory_space<vmem>>, vector<4x4xf32>
    %cst_124 = arith.constant dense<0.000000e+00> : vector<4x64xf32>
    %235 = tpu.matmul %234, %233, %cst_124 {dimension_numbers = #tpu.dot_dimension_numbers<[1], [0], [0], [1], [0, 0, 1, 1], [], []>} : vector<4x4xf32>, vector<4x64xf32>, vector<4x64xf32> -> vector<4x64xf32>
    %c0_125 = arith.constant 0 : index
    %c0_126 = arith.constant 0 : index
    %236 = vector.load %arg16[%c0_125, %c0_126] : memref<4x1xf32, #tpu.memory_space<vmem>>, vector<4x1xf32>
    %237 = vector.broadcast %236 : vector<4x1xf32> to vector<4x64xf32>
    %238 = arith.addf %235, %237 : vector<4x64xf32>
    %c0_127 = arith.constant 0 : index
    %c0_128 = arith.constant 0 : index
    %c0_129 = arith.constant 0 : index
    %239 = vector.load %arg19[%c0_127, %c0_128, %c0_129] : memref<1x4x64xf32, #tpu.memory_space<vmem>>, vector<1x4x64xf32>
    %240 = vector.shape_cast %239 : vector<1x4x64xf32> to vector<4x64xf32>
    %241 = vector.shape_cast %238 : vector<4x64xf32> to vector<1x4x64xf32>
    tpu.vector_store %arg19[%c0_127, %c0_128, %c0_129], %241 {strides = array<i32>} : memref<1x4x64xf32, #tpu.memory_space<vmem>>, vector<1x4x64xf32>,
    %cst_130 = arith.constant dense<0.000000e+00> : vector<4xf32>
    %242 = vector.multi_reduction <add>, %238, %cst_130 [1] : vector<4x64xf32> to vector<4xf32>
    %243 = vector.shape_cast %242 : vector<4xf32> to vector<4x1xf32>
    %cst_131 = arith.constant 6.400000e+01 : f32
    %244 = vector.broadcast %cst_131 : f32 to vector<4x1xf32>
    %245 = arith.divf %243, %244 : vector<4x1xf32>
    %246 = vector.broadcast %245 : vector<4x1xf32> to vector<4x64xf32>
    %247 = arith.subf %238, %246 : vector<4x64xf32>
    %248 = arith.mulf %247, %247 : vector<4x64xf32>
    %cst_132 = arith.constant dense<0.000000e+00> : vector<4xf32>
    %249 = vector.multi_reduction <add>, %248, %cst_132 [1] : vector<4x64xf32> to vector<4xf32>
    %250 = vector.shape_cast %249 : vector<4xf32> to vector<4x1xf32>
    %c0_133 = arith.constant 0 : index
    %c0_134 = arith.constant 0 : index
    %c0_135 = arith.constant 0 : index
    %251 = vector.load %arg22[%c0_133, %c0_134, %c0_135] : memref<1x4x1xf32, #tpu.memory_space<vmem>>, vector<1x4x1xf32>
    %252 = vector.shape_cast %251 : vector<1x4x1xf32> to vector<4x1xf32>
    %253 = vector.shape_cast %245 : vector<4x1xf32> to vector<1x4x1xf32>
    tpu.vector_store %arg22[%c0_133, %c0_134, %c0_135], %253 {strides = array<i32>} : memref<1x4x1xf32, #tpu.memory_space<vmem>>, vector<1x4x1xf32>,
    %c0_136 = arith.constant 0 : index
    %c0_137 = arith.constant 0 : index
    %c0_138 = arith.constant 0 : index
    %254 = vector.load %arg23[%c0_136, %c0_137, %c0_138] : memref<1x4x1xf32, #tpu.memory_space<vmem>>, vector<1x4x1xf32>
    %255 = vector.shape_cast %254 : vector<1x4x1xf32> to vector<4x1xf32>
    %256 = vector.shape_cast %250 : vector<4x1xf32> to vector<1x4x1xf32>
    tpu.vector_store %arg23[%c0_136, %c0_137, %c0_138], %256 {strides = array<i32>} : memref<1x4x1xf32, #tpu.memory_space<vmem>>, vector<1x4x1xf32>,
    return
  }
  func.func @transform_0(%arg0: i32) -> (i32, i32, i32) {
    %c0_i32 = arith.constant 0 : i32
    %c0_i32_0 = arith.constant 0 : i32
    %c0_i32_1 = arith.constant 0 : i32
    return %arg0, %c0_i32, %c0_i32_0 : i32, i32, i32
  }
  func.func @transform_1(%arg0: i32) -> (i32, i32) {
    %c0_i32 = arith.constant 0 : i32
    %c0_i32_0 = arith.constant 0 : i32
    %c0_i32_1 = arith.constant 0 : i32
    return %c0_i32, %c0_i32_0 : i32, i32
  }
  func.func @transform_2(%arg0: i32) -> (i32, i32) {
    %c0_i32 = arith.constant 0 : i32
    %c0_i32_0 = arith.constant 0 : i32
    %c0_i32_1 = arith.constant 0 : i32
    return %c0_i32, %c0_i32_0 : i32, i32
  }
  func.func @transform_3(%arg0: i32) -> (i32, i32) {
    %c0_i32 = arith.constant 0 : i32
    %c0_i32_0 = arith.constant 0 : i32
    %c0_i32_1 = arith.constant 0 : i32
    return %c0_i32, %c0_i32_0 : i32, i32
  }
  func.func @transform_4(%arg0: i32) -> (i32, i32) {
    %c0_i32 = arith.constant 0 : i32
    %c0_i32_0 = arith.constant 0 : i32
    %c0_i32_1 = arith.constant 0 : i32
    return %c0_i32, %c0_i32_0 : i32, i32
  }
  func.func @transform_5(%arg0: i32) -> (i32, i32) {
    %c0_i32 = arith.constant 0 : i32
    %c0_i32_0 = arith.constant 0 : i32
    %c0_i32_1 = arith.constant 0 : i32
    return %c0_i32, %c0_i32_0 : i32, i32
  }
  func.func @transform_6(%arg0: i32) -> (i32, i32) {
    %c0_i32 = arith.constant 0 : i32
    %c0_i32_0 = arith.constant 0 : i32
    %c0_i32_1 = arith.constant 0 : i32
    return %c0_i32, %c0_i32_0 : i32, i32
  }
  func.func @transform_7(%arg0: i32) -> (i32, i32, i32) {
    %c0_i32 = arith.constant 0 : i32
    %c0_i32_0 = arith.constant 0 : i32
    %c0_i32_1 = arith.constant 0 : i32
    %c0_i32_2 = arith.constant 0 : i32
    return %c0_i32, %c0_i32_0, %c0_i32_1 : i32, i32, i32
  }
  func.func @transform_8(%arg0: i32) -> (i32, i32) {
    %c0_i32 = arith.constant 0 : i32
    %c0_i32_0 = arith.constant 0 : i32
    %c0_i32_1 = arith.constant 0 : i32
    return %c0_i32, %c0_i32_0 : i32, i32
  }
  func.func @transform_9(%arg0: i32) -> (i32, i32) {
    %c0_i32 = arith.constant 0 : i32
    %c0_i32_0 = arith.constant 0 : i32
    %c0_i32_1 = arith.constant 0 : i32
    return %c0_i32, %c0_i32_0 : i32, i32
  }
  func.func @transform_10(%arg0: i32) -> (i32, i32) {
    %c0_i32 = arith.constant 0 : i32
    %c0_i32_0 = arith.constant 0 : i32
    %c0_i32_1 = arith.constant 0 : i32
    return %c0_i32, %c0_i32_0 : i32, i32
  }
  func.func @transform_11(%arg0: i32) -> (i32, i32, i32) {
    %c0_i32 = arith.constant 0 : i32
    %c0_i32_0 = arith.constant 0 : i32
    %c0_i32_1 = arith.constant 0 : i32
    %c0_i32_2 = arith.constant 0 : i32
    return %c0_i32, %c0_i32_0, %c0_i32_1 : i32, i32, i32
  }
  func.func @transform_12(%arg0: i32) -> (i32, i32) {
    %c0_i32 = arith.constant 0 : i32
    %c0_i32_0 = arith.constant 0 : i32
    %c0_i32_1 = arith.constant 0 : i32
    return %c0_i32, %c0_i32_0 : i32, i32
  }
  func.func @transform_13(%arg0: i32) -> (i32, i32, i32) {
    %c0_i32 = arith.constant 0 : i32
    %c0_i32_0 = arith.constant 0 : i32
    %c0_i32_1 = arith.constant 0 : i32
    %c0_i32_2 = arith.constant 0 : i32
    return %c0_i32, %c0_i32_0, %c0_i32_1 : i32, i32, i32
  }
  func.func @transform_14(%arg0: i32) -> (i32, i32) {
    %c0_i32 = arith.constant 0 : i32
    %c0_i32_0 = arith.constant 0 : i32
    %c0_i32_1 = arith.constant 0 : i32
    return %c0_i32, %c0_i32_0 : i32, i32
  }
  func.func @transform_15(%arg0: i32) -> (i32, i32) {
    %c0_i32 = arith.constant 0 : i32
    %c0_i32_0 = arith.constant 0 : i32
    %c0_i32_1 = arith.constant 0 : i32
    return %c0_i32, %c0_i32_0 : i32, i32
  }
  func.func @transform_16(%arg0: i32) -> (i32, i32, i32) {
    %c0_i32 = arith.constant 0 : i32
    %c0_i32_0 = arith.constant 0 : i32
    %c0_i32_1 = arith.constant 0 : i32
    return %arg0, %c0_i32, %c0_i32_0 : i32, i32, i32
  }
  func.func @transform_17(%arg0: i32) -> (i32, i32, i32) {
    %c0_i32 = arith.constant 0 : i32
    %c0_i32_0 = arith.constant 0 : i32
    %c0_i32_1 = arith.constant 0 : i32
    return %arg0, %c0_i32, %c0_i32_0 : i32, i32, i32
  }
  func.func @transform_18(%arg0: i32) -> (i32, i32, i32) {
    %c0_i32 = arith.constant 0 : i32
    %c0_i32_0 = arith.constant 0 : i32
    %c0_i32_1 = arith.constant 0 : i32
    return %arg0, %c0_i32, %c0_i32_0 : i32, i32, i32
  }
  func.func @transform_19(%arg0: i32) -> (i32, i32, i32) {
    %c0_i32 = arith.constant 0 : i32
    %c0_i32_0 = arith.constant 0 : i32
    %c0_i32_1 = arith.constant 0 : i32
    return %arg0, %c0_i32, %c0_i32_0 : i32, i32, i32
  }
  func.func @transform_20(%arg0: i32) -> (i32, i32, i32) {
    %c0_i32 = arith.constant 0 : i32
    %c0_i32_0 = arith.constant 0 : i32
    %c0_i32_1 = arith.constant 0 : i32
    return %arg0, %c0_i32, %c0_i32_0 : i32, i32, i32
  }
  func.func @transform_21(%arg0: i32) -> (i32, i32, i32) {
    %c0_i32 = arith.constant 0 : i32
    %c0_i32_0 = arith.constant 0 : i32
    %c0_i32_1 = arith.constant 0 : i32
    return %arg0, %c0_i32, %c0_i32_0 : i32, i32, i32
  }
  func.func @transform_22(%arg0: i32) -> (i32, i32, i32) {
    %c0_i32 = arith.constant 0 : i32
    %c0_i32_0 = arith.constant 0 : i32
    %c0_i32_1 = arith.constant 0 : i32
    return %arg0, %c0_i32, %c0_i32_0 : i32, i32, i32
  }
}

module attributes {stable_mosaic.version = 11 : i64} {
  func.func @kernel(%arg0: i32, %arg1: memref<1x4x64xf32, #tpu.memory_space<vmem>>, %arg2: memref<1x4x64xf32, #tpu.memory_space<vmem>>, %arg3: memref<1x4x64xf32, #tpu.memory_space<vmem>>, %arg4: memref<1x4x64xf32, #tpu.memory_space<vmem>>, %arg5: memref<4x1xf32, #tpu.memory_space<vmem>>, %arg6: memref<4x1xf32, #tpu.memory_space<vmem>>, %arg7: memref<4x1xf32, #tpu.memory_space<vmem>>, %arg8: memref<4x1xf32, #tpu.memory_space<vmem>>, %arg9: memref<4x4xf32, #tpu.memory_space<vmem>>, %arg10: memref<4x1xf32, #tpu.memory_space<vmem>>, %arg11: memref<4x4xf32, #tpu.memory_space<vmem>>, %arg12: memref<4x1xf32, #tpu.memory_space<vmem>>, %arg13: memref<4x4xf32, #tpu.memory_space<vmem>>, %arg14: memref<4x1xf32, #tpu.memory_space<vmem>>, %arg15: memref<4x1xf32, #tpu.memory_space<vmem>>, %arg16: memref<4x1xf32, #tpu.memory_space<vmem>>, %arg17: memref<64x256xf32, #tpu.memory_space<vmem>>, %arg18: memref<9x4x1xf32, #tpu.memory_space<vmem>>, %arg19: memref<4x1xf32, #tpu.memory_space<vmem>>, %arg20: memref<9x1x256xf32, #tpu.memory_space<vmem>>, %arg21: memref<4x4xf32, #tpu.memory_space<vmem>>, %arg22: memref<4x1xf32, #tpu.memory_space<vmem>>, %arg23: memref<1x4x256xf32, #tpu.memory_space<vmem>>, %arg24: memref<1x4x256xf32, #tpu.memory_space<vmem>>, %arg25: memref<1x4x1xf32, #tpu.memory_space<vmem>>, %arg26: memref<1x4x1xf32, #tpu.memory_space<vmem>>) attributes {dimension_semantics = [#tpu.dimension_semantics<parallel>], iteration_bounds = array<i64: 2>, scalar_prefetch = 0 : i64, scratch_operands = 0 : i64, tpu.core_type = #tpu.core_type<tc>, window_params = [{transform_indices = @transform_0, window_bounds = array<i64: 1, 4, 64>}, {transform_indices = @transform_1, window_bounds = array<i64: 1, 4, 64>}, {transform_indices = @transform_2, window_bounds = array<i64: 1, 4, 64>}, {transform_indices = @transform_3, window_bounds = array<i64: 1, 4, 64>}, {pipeline_mode = #tpu.pipeline_mode<synchronous>, transform_indices = @transform_4, window_bounds = array<i64: 4, 1>}, {pipeline_mode = #tpu.pipeline_mode<synchronous>, transform_indices = @transform_5, window_bounds = array<i64: 4, 1>}, {pipeline_mode = #tpu.pipeline_mode<synchronous>, transform_indices = @transform_6, window_bounds = array<i64: 4, 1>}, {pipeline_mode = #tpu.pipeline_mode<synchronous>, transform_indices = @transform_7, window_bounds = array<i64: 4, 1>}, {pipeline_mode = #tpu.pipeline_mode<synchronous>, transform_indices = @transform_8, window_bounds = array<i64: 4, 4>}, {pipeline_mode = #tpu.pipeline_mode<synchronous>, transform_indices = @transform_9, window_bounds = array<i64: 4, 1>}, {pipeline_mode = #tpu.pipeline_mode<synchronous>, transform_indices = @transform_10, window_bounds = array<i64: 4, 4>}, {pipeline_mode = #tpu.pipeline_mode<synchronous>, transform_indices = @transform_11, window_bounds = array<i64: 4, 1>}, {pipeline_mode = #tpu.pipeline_mode<synchronous>, transform_indices = @transform_12, window_bounds = array<i64: 4, 4>}, {pipeline_mode = #tpu.pipeline_mode<synchronous>, transform_indices = @transform_13, window_bounds = array<i64: 4, 1>}, {pipeline_mode = #tpu.pipeline_mode<synchronous>, transform_indices = @transform_14, window_bounds = array<i64: 4, 1>}, {pipeline_mode = #tpu.pipeline_mode<synchronous>, transform_indices = @transform_15, window_bounds = array<i64: 4, 1>}, {pipeline_mode = #tpu.pipeline_mode<synchronous>, transform_indices = @transform_16, window_bounds = array<i64: 64, 256>}, {pipeline_mode = #tpu.pipeline_mode<synchronous>, transform_indices = @transform_17, window_bounds = array<i64: 9, 4, 1>}, {pipeline_mode = #tpu.pipeline_mode<synchronous>, transform_indices = @transform_18, window_bounds = array<i64: 4, 1>}, {pipeline_mode = #tpu.pipeline_mode<synchronous>, transform_indices = @transform_19, window_bounds = array<i64: 9, 1, 256>}, {pipeline_mode = #tpu.pipeline_mode<synchronous>, transform_indices = @transform_20, window_bounds = array<i64: 4, 4>}, {pipeline_mode = #tpu.pipeline_mode<synchronous>, transform_indices = @transform_21, window_bounds = array<i64: 4, 1>}, {transform_indices = @transform_22, window_bounds = array<i64: 1, 4, 256>}, {transform_indices = @transform_23, window_bounds = array<i64: 1, 4, 256>}, {transform_indices = @transform_24, window_bounds = array<i64: 1, 4, 1>}, {transform_indices = @transform_25, window_bounds = array<i64: 1, 4, 1>}]} {
    %c0 = arith.constant 0 : index
    %c0_0 = arith.constant 0 : index
    %c0_1 = arith.constant 0 : index
    %0 = vector.load %arg1[%c0, %c0_0, %c0_1] : memref<1x4x64xf32, #tpu.memory_space<vmem>>, vector<1x4x64xf32>
    %1 = vector.shape_cast %0 : vector<1x4x64xf32> to vector<4x64xf32>
    %c0_2 = arith.constant 0 : index
    %c0_3 = arith.constant 0 : index
    %2 = vector.load %arg11[%c0_2, %c0_3] : memref<4x4xf32, #tpu.memory_space<vmem>>, vector<4x4xf32>
    %cst = arith.constant dense<0.000000e+00> : vector<4x64xf32>
    %3 = tpu.matmul %2, %1, %cst {dimension_numbers = #tpu.dot_dimension_numbers<[1], [0], [0], [1], [0, 0, 1, 1], [], []>} : vector<4x4xf32>, vector<4x64xf32>, vector<4x64xf32> -> vector<4x64xf32>
    %c0_4 = arith.constant 0 : index
    %c0_5 = arith.constant 0 : index
    %4 = vector.load %arg12[%c0_4, %c0_5] : memref<4x1xf32, #tpu.memory_space<vmem>>, vector<4x1xf32>
    %5 = vector.broadcast %4 : vector<4x1xf32> to vector<4x64xf32>
    %6 = arith.addf %3, %5 : vector<4x64xf32>
    %c0_6 = arith.constant 0 : index
    %c0_7 = arith.constant 0 : index
    %c0_8 = arith.constant 0 : index
    %7 = vector.load %arg3[%c0_6, %c0_7, %c0_8] : memref<1x4x64xf32, #tpu.memory_space<vmem>>, vector<1x4x64xf32>
    %8 = vector.shape_cast %7 : vector<1x4x64xf32> to vector<4x64xf32>
    %c0_9 = arith.constant 0 : index
    %c0_10 = arith.constant 0 : index
    %9 = vector.load %arg5[%c0_9, %c0_10] : memref<4x1xf32, #tpu.memory_space<vmem>>, vector<4x1xf32>
    %10 = vector.broadcast %9 : vector<4x1xf32> to vector<4x64xf32>
    %11 = arith.mulf %8, %10 : vector<4x64xf32>
    %c0_11 = arith.constant 0 : index
    %c0_12 = arith.constant 0 : index
    %12 = vector.load %arg6[%c0_11, %c0_12] : memref<4x1xf32, #tpu.memory_space<vmem>>, vector<4x1xf32>
    %13 = vector.broadcast %12 : vector<4x1xf32> to vector<4x64xf32>
    %14 = arith.addf %11, %13 : vector<4x64xf32>
    %c0_13 = arith.constant 0 : index
    %c0_14 = arith.constant 0 : index
    %c0_15 = arith.constant 0 : index
    %15 = vector.load %arg4[%c0_13, %c0_14, %c0_15] : memref<1x4x64xf32, #tpu.memory_space<vmem>>, vector<1x4x64xf32>
    %16 = vector.shape_cast %15 : vector<1x4x64xf32> to vector<4x64xf32>
    %c0_16 = arith.constant 0 : index
    %c0_17 = arith.constant 0 : index
    %17 = vector.load %arg7[%c0_16, %c0_17] : memref<4x1xf32, #tpu.memory_space<vmem>>, vector<4x1xf32>
    %18 = vector.broadcast %17 : vector<4x1xf32> to vector<4x64xf32>
    %19 = arith.mulf %16, %18 : vector<4x64xf32>
    %c0_18 = arith.constant 0 : index
    %c0_19 = arith.constant 0 : index
    %20 = vector.load %arg8[%c0_18, %c0_19] : memref<4x1xf32, #tpu.memory_space<vmem>>, vector<4x1xf32>
    %21 = vector.broadcast %20 : vector<4x1xf32> to vector<4x64xf32>
    %22 = arith.addf %19, %21 : vector<4x64xf32>
    %c0_20 = arith.constant 0 : index
    %c0_21 = arith.constant 0 : index
    %23 = vector.load %arg9[%c0_20, %c0_21] : memref<4x4xf32, #tpu.memory_space<vmem>>, vector<4x4xf32>
    %24 = arith.addf %14, %22 : vector<4x64xf32>
    %cst_22 = arith.constant dense<0.000000e+00> : vector<4x64xf32>
    %25 = tpu.matmul %23, %24, %cst_22 {dimension_numbers = #tpu.dot_dimension_numbers<[1], [0], [0], [1], [0, 0, 1, 1], [], []>} : vector<4x4xf32>, vector<4x64xf32>, vector<4x64xf32> -> vector<4x64xf32>
    %c0_23 = arith.constant 0 : index
    %c0_24 = arith.constant 0 : index
    %26 = vector.load %arg10[%c0_23, %c0_24] : memref<4x1xf32, #tpu.memory_space<vmem>>, vector<4x1xf32>
    %27 = vector.broadcast %26 : vector<4x1xf32> to vector<4x64xf32>
    %28 = arith.addf %25, %27 : vector<4x64xf32>
    %c0_25 = arith.constant 0 : index
    %c0_26 = arith.constant 0 : index
    %c0_27 = arith.constant 0 : index
    %29 = vector.load %arg2[%c0_25, %c0_26, %c0_27] : memref<1x4x64xf32, #tpu.memory_space<vmem>>, vector<1x4x64xf32>
    %30 = vector.shape_cast %29 : vector<1x4x64xf32> to vector<4x64xf32>
    %cst_28 = arith.constant dense<0.000000e+00> : vector<64x64xf32>
    %31 = tpu.matmul %30, %28, %cst_28 {dimension_numbers = #tpu.dot_dimension_numbers<[0], [0], [1], [1], [0, 1, 1, 1], [], []>} : vector<4x64xf32>, vector<4x64xf32>, vector<64x64xf32> -> vector<64x64xf32>
    %cst_29 = arith.constant 5.000000e-01 : f32
    %32 = vector.broadcast %cst_29 : f32 to vector<64x64xf32>
    %33 = arith.mulf %31, %32 : vector<64x64xf32>
    %cst_30 = arith.constant dense<0xFF800000> : vector<64xf32>
    %34 = vector.multi_reduction <maximumf>, %33, %cst_30 [0] : vector<64x64xf32> to vector<64xf32>
    %35 = vector.shape_cast %34 : vector<64xf32> to vector<1x64xf32>
    %36 = vector.broadcast %35 : vector<1x64xf32> to vector<64x64xf32>
    %37 = arith.subf %33, %36 : vector<64x64xf32>
    %38 = math.exp %37 : vector<64x64xf32>
    %cst_31 = arith.constant dense<0.000000e+00> : vector<64xf32>
    %39 = vector.multi_reduction <add>, %38, %cst_31 [0] : vector<64x64xf32> to vector<64xf32>
    %40 = vector.shape_cast %39 : vector<64xf32> to vector<1x64xf32>
    %41 = tpu.reciprocal %40 {approx = true} : vector<1x64xf32> -> vector<1x64xf32>
    %42 = vector.broadcast %41 : vector<1x64xf32> to vector<64x64xf32>
    %43 = arith.mulf %38, %42 : vector<64x64xf32>
    %cst_32 = arith.constant dense<0.000000e+00> : vector<4x64xf32>
    %44 = tpu.matmul %6, %43, %cst_32 {dimension_numbers = #tpu.dot_dimension_numbers<[1], [0], [0], [1], [0, 0, 1, 1], [], []>} : vector<4x64xf32>, vector<64x64xf32>, vector<4x64xf32> -> vector<4x64xf32>
    %c0_33 = arith.constant 0 : index
    %c0_34 = arith.constant 0 : index
    %45 = vector.load %arg13[%c0_33, %c0_34] : memref<4x4xf32, #tpu.memory_space<vmem>>, vector<4x4xf32>
    %cst_35 = arith.constant dense<0.000000e+00> : vector<4x64xf32>
    %46 = tpu.matmul %45, %44, %cst_35 {dimension_numbers = #tpu.dot_dimension_numbers<[1], [0], [0], [1], [0, 0, 1, 1], [], []>} : vector<4x4xf32>, vector<4x64xf32>, vector<4x64xf32> -> vector<4x64xf32>
    %c0_36 = arith.constant 0 : index
    %c0_37 = arith.constant 0 : index
    %47 = vector.load %arg14[%c0_36, %c0_37] : memref<4x1xf32, #tpu.memory_space<vmem>>, vector<4x1xf32>
    %48 = vector.broadcast %47 : vector<4x1xf32> to vector<4x64xf32>
    %49 = arith.addf %46, %48 : vector<4x64xf32>
    %50 = arith.addf %49, %6 : vector<4x64xf32>
    %cst_38 = arith.constant dense<0.000000e+00> : vector<64xf32>
    %51 = vector.multi_reduction <add>, %50, %cst_38 [0] : vector<4x64xf32> to vector<64xf32>
    %52 = vector.shape_cast %51 : vector<64xf32> to vector<1x64xf32>
    %cst_39 = arith.constant 4.000000e+00 : f32
    %53 = vector.broadcast %cst_39 : f32 to vector<1x64xf32>
    %54 = arith.divf %52, %53 : vector<1x64xf32>
    %55 = vector.broadcast %54 : vector<1x64xf32> to vector<4x64xf32>
    %56 = arith.subf %50, %55 : vector<4x64xf32>
    %57 = arith.mulf %56, %56 : vector<4x64xf32>
    %cst_40 = arith.constant dense<0.000000e+00> : vector<64xf32>
    %58 = vector.multi_reduction <add>, %57, %cst_40 [0] : vector<4x64xf32> to vector<64xf32>
    %59 = vector.shape_cast %58 : vector<64xf32> to vector<1x64xf32>
    %cst_41 = arith.constant 4.000000e+00 : f32
    %60 = vector.broadcast %cst_41 : f32 to vector<1x64xf32>
    %61 = arith.divf %59, %60 : vector<1x64xf32>
    %cst_42 = arith.constant 9.99999974E-6 : f32
    %62 = vector.broadcast %cst_42 : f32 to vector<1x64xf32>
    %63 = arith.addf %61, %62 : vector<1x64xf32>
    %64 = math.rsqrt %63 : vector<1x64xf32>
    %65 = vector.broadcast %64 : vector<1x64xf32> to vector<4x64xf32>
    %66 = arith.mulf %56, %65 : vector<4x64xf32>
    %c0_43 = arith.constant 0 : index
    %c0_44 = arith.constant 0 : index
    %67 = vector.load %arg15[%c0_43, %c0_44] : memref<4x1xf32, #tpu.memory_space<vmem>>, vector<4x1xf32>
    %68 = vector.broadcast %67 : vector<4x1xf32> to vector<4x64xf32>
    %69 = arith.mulf %66, %68 : vector<4x64xf32>
    %c0_45 = arith.constant 0 : index
    %c0_46 = arith.constant 0 : index
    %70 = vector.load %arg16[%c0_45, %c0_46] : memref<4x1xf32, #tpu.memory_space<vmem>>, vector<4x1xf32>
    %71 = vector.broadcast %70 : vector<4x1xf32> to vector<4x64xf32>
    %72 = arith.addf %69, %71 : vector<4x64xf32>
    %c0_47 = arith.constant 0 : index
    %c0_48 = arith.constant 0 : index
    %73 = vector.load %arg17[%c0_47, %c0_48] : memref<64x256xf32, #tpu.memory_space<vmem>>, vector<64x256xf32>
    %cst_49 = arith.constant dense<0.000000e+00> : vector<4x256xf32>
    %74 = tpu.matmul %72, %73, %cst_49 {dimension_numbers = #tpu.dot_dimension_numbers<[1], [0], [0], [1], [0, 0, 1, 1], [], []>} : vector<4x64xf32>, vector<64x256xf32>, vector<4x256xf32> -> vector<4x256xf32>
    %c0_50 = arith.constant 0 : index
    %c0_51 = arith.constant 0 : index
    %c0_52 = arith.constant 0 : index
    %75 = vector.load %arg23[%c0_50, %c0_51, %c0_52] : memref<1x4x256xf32, #tpu.memory_space<vmem>>, vector<1x4x256xf32>
    %76 = vector.shape_cast %75 : vector<1x4x256xf32> to vector<4x256xf32>
    %77 = vector.shape_cast %74 : vector<4x256xf32> to vector<1x4x256xf32>
    tpu.vector_store %arg23[%c0_50, %c0_51, %c0_52], %77 {strides = array<i32>} : memref<1x4x256xf32, #tpu.memory_space<vmem>>, vector<1x4x256xf32>,
    %cst_53 = arith.constant 0.000000e+00 : f32
    %78 = vector.broadcast %cst_53 : f32 to vector<4x17xf32>
    %79 = vector.extract_strided_slice %74 {offsets = [0, 0], sizes = [4, 239], strides = [1, 1]} : vector<4x256xf32> to vector<4x239xf32>
    %80 = tpu.concatenate %78, %79 in 1 : vector<4x17xf32>, vector<4x239xf32> -> vector<4x256xf32>
    %c0_54 = arith.constant 0 : index
    %c0_55 = arith.constant 0 : index
    %c0_56 = arith.constant 0 : index
    %81 = vector.load %arg20[%c0_54, %c0_55, %c0_56] : memref<9x1x256xf32, #tpu.memory_space<vmem>>, vector<1x1x256xf32>
    %82 = vector.shape_cast %81 : vector<1x1x256xf32> to vector<1x256xf32>
    %83 = vector.broadcast %82 : vector<1x256xf32> to vector<4x256xf32>
    %84 = arith.mulf %80, %83 : vector<4x256xf32>
    %c0_57 = arith.constant 0 : index
    %c0_58 = arith.constant 0 : index
    %c0_59 = arith.constant 0 : index
    %85 = vector.load %arg18[%c0_57, %c0_58, %c0_59] : memref<9x4x1xf32, #tpu.memory_space<vmem>>, vector<1x4x1xf32>
    %86 = vector.shape_cast %85 : vector<1x4x1xf32> to vector<4x1xf32>
    %87 = vector.broadcast %86 : vector<4x1xf32> to vector<4x256xf32>
    %88 = arith.mulf %84, %87 : vector<4x256xf32>
    %cst_60 = arith.constant 0.000000e+00 : f32
    %89 = vector.broadcast %cst_60 : f32 to vector<4x16xf32>
    %90 = vector.extract_strided_slice %74 {offsets = [0, 0], sizes = [4, 240], strides = [1, 1]} : vector<4x256xf32> to vector<4x240xf32>
    %91 = tpu.concatenate %89, %90 in 1 : vector<4x16xf32>, vector<4x240xf32> -> vector<4x256xf32>
    %c1 = arith.constant 1 : index
    %c0_61 = arith.constant 0 : index
    %c0_62 = arith.constant 0 : index
    %92 = vector.load %arg20[%c1, %c0_61, %c0_62] : memref<9x1x256xf32, #tpu.memory_space<vmem>>, vector<1x1x256xf32>
    %93 = vector.shape_cast %92 : vector<1x1x256xf32> to vector<1x256xf32>
    %94 = vector.broadcast %93 : vector<1x256xf32> to vector<4x256xf32>
    %95 = arith.mulf %91, %94 : vector<4x256xf32>
    %c1_63 = arith.constant 1 : index
    %c0_64 = arith.constant 0 : index
    %c0_65 = arith.constant 0 : index
    %96 = vector.load %arg18[%c1_63, %c0_64, %c0_65] : memref<9x4x1xf32, #tpu.memory_space<vmem>>, vector<1x4x1xf32>
    %97 = vector.shape_cast %96 : vector<1x4x1xf32> to vector<4x1xf32>
    %98 = vector.broadcast %97 : vector<4x1xf32> to vector<4x256xf32>
    %99 = arith.mulf %95, %98 : vector<4x256xf32>
    %100 = arith.addf %88, %99 : vector<4x256xf32>
    %cst_66 = arith.constant 0.000000e+00 : f32
    %101 = vector.broadcast %cst_66 : f32 to vector<4x15xf32>
    %102 = vector.extract_strided_slice %74 {offsets = [0, 0], sizes = [4, 241], strides = [1, 1]} : vector<4x256xf32> to vector<4x241xf32>
    %103 = tpu.concatenate %101, %102 in 1 : vector<4x15xf32>, vector<4x241xf32> -> vector<4x256xf32>
    %c2 = arith.constant 2 : index
    %c0_67 = arith.constant 0 : index
    %c0_68 = arith.constant 0 : index
    %104 = vector.load %arg20[%c2, %c0_67, %c0_68] : memref<9x1x256xf32, #tpu.memory_space<vmem>>, vector<1x1x256xf32>
    %105 = vector.shape_cast %104 : vector<1x1x256xf32> to vector<1x256xf32>
    %106 = vector.broadcast %105 : vector<1x256xf32> to vector<4x256xf32>
    %107 = arith.mulf %103, %106 : vector<4x256xf32>
    %c2_69 = arith.constant 2 : index
    %c0_70 = arith.constant 0 : index
    %c0_71 = arith.constant 0 : index
    %108 = vector.load %arg18[%c2_69, %c0_70, %c0_71] : memref<9x4x1xf32, #tpu.memory_space<vmem>>, vector<1x4x1xf32>
    %109 = vector.shape_cast %108 : vector<1x4x1xf32> to vector<4x1xf32>
    %110 = vector.broadcast %109 : vector<4x1xf32> to vector<4x256xf32>
    %111 = arith.mulf %107, %110 : vector<4x256xf32>
    %112 = arith.addf %100, %111 : vector<4x256xf32>
    %cst_72 = arith.constant 0.000000e+00 : f32
    %113 = vector.broadcast %cst_72 : f32 to vector<4x1xf32>
    %114 = vector.extract_strided_slice %74 {offsets = [0, 0], sizes = [4, 255], strides = [1, 1]} : vector<4x256xf32> to vector<4x255xf32>
    %115 = tpu.concatenate %113, %114 in 1 : vector<4x1xf32>, vector<4x255xf32> -> vector<4x256xf32>
    %c3 = arith.constant 3 : index
    %c0_73 = arith.constant 0 : index
    %c0_74 = arith.constant 0 : index
    %116 = vector.load %arg20[%c3, %c0_73, %c0_74] : memref<9x1x256xf32, #tpu.memory_space<vmem>>, vector<1x1x256xf32>
    %117 = vector.shape_cast %116 : vector<1x1x256xf32> to vector<1x256xf32>
    %118 = vector.broadcast %117 : vector<1x256xf32> to vector<4x256xf32>
    %119 = arith.mulf %115, %118 : vector<4x256xf32>
    %c3_75 = arith.constant 3 : index
    %c0_76 = arith.constant 0 : index
    %c0_77 = arith.constant 0 : index
    %120 = vector.load %arg18[%c3_75, %c0_76, %c0_77] : memref<9x4x1xf32, #tpu.memory_space<vmem>>, vector<1x4x1xf32>
    %121 = vector.shape_cast %120 : vector<1x4x1xf32> to vector<4x1xf32>
    %122 = vector.broadcast %121 : vector<4x1xf32> to vector<4x256xf32>
    %123 = arith.mulf %119, %122 : vector<4x256xf32>
    %124 = arith.addf %112, %123 : vector<4x256xf32>
    %c4 = arith.constant 4 : index
    %c0_78 = arith.constant 0 : index
    %c0_79 = arith.constant 0 : index
    %125 = vector.load %arg20[%c4, %c0_78, %c0_79] : memref<9x1x256xf32, #tpu.memory_space<vmem>>, vector<1x1x256xf32>
    %126 = vector.shape_cast %125 : vector<1x1x256xf32> to vector<1x256xf32>
    %127 = vector.broadcast %126 : vector<1x256xf32> to vector<4x256xf32>
    %128 = arith.mulf %74, %127 : vector<4x256xf32>
    %c4_80 = arith.constant 4 : index
    %c0_81 = arith.constant 0 : index
    %c0_82 = arith.constant 0 : index
    %129 = vector.load %arg18[%c4_80, %c0_81, %c0_82] : memref<9x4x1xf32, #tpu.memory_space<vmem>>, vector<1x4x1xf32>
    %130 = vector.shape_cast %129 : vector<1x4x1xf32> to vector<4x1xf32>
    %131 = vector.broadcast %130 : vector<4x1xf32> to vector<4x256xf32>
    %132 = arith.mulf %128, %131 : vector<4x256xf32>
    %133 = arith.addf %124, %132 : vector<4x256xf32>
    %cst_83 = arith.constant 0.000000e+00 : f32
    %134 = vector.broadcast %cst_83 : f32 to vector<4x1xf32>
    %135 = vector.extract_strided_slice %74 {offsets = [0, 1], sizes = [4, 255], strides = [1, 1]} : vector<4x256xf32> to vector<4x255xf32>
    %136 = tpu.concatenate %135, %134 in 1 : vector<4x255xf32>, vector<4x1xf32> -> vector<4x256xf32>
    %c5 = arith.constant 5 : index
    %c0_84 = arith.constant 0 : index
    %c0_85 = arith.constant 0 : index
    %137 = vector.load %arg20[%c5, %c0_84, %c0_85] : memref<9x1x256xf32, #tpu.memory_space<vmem>>, vector<1x1x256xf32>
    %138 = vector.shape_cast %137 : vector<1x1x256xf32> to vector<1x256xf32>
    %139 = vector.broadcast %138 : vector<1x256xf32> to vector<4x256xf32>
    %140 = arith.mulf %136, %139 : vector<4x256xf32>
    %c5_86 = arith.constant 5 : index
    %c0_87 = arith.constant 0 : index
    %c0_88 = arith.constant 0 : index
    %141 = vector.load %arg18[%c5_86, %c0_87, %c0_88] : memref<9x4x1xf32, #tpu.memory_space<vmem>>, vector<1x4x1xf32>
    %142 = vector.shape_cast %141 : vector<1x4x1xf32> to vector<4x1xf32>
    %143 = vector.broadcast %142 : vector<4x1xf32> to vector<4x256xf32>
    %144 = arith.mulf %140, %143 : vector<4x256xf32>
    %145 = arith.addf %133, %144 : vector<4x256xf32>
    %cst_89 = arith.constant 0.000000e+00 : f32
    %146 = vector.broadcast %cst_89 : f32 to vector<4x15xf32>
    %147 = vector.extract_strided_slice %74 {offsets = [0, 15], sizes = [4, 241], strides = [1, 1]} : vector<4x256xf32> to vector<4x241xf32>
    %148 = tpu.concatenate %147, %146 in 1 : vector<4x241xf32>, vector<4x15xf32> -> vector<4x256xf32>
    %c6 = arith.constant 6 : index
    %c0_90 = arith.constant 0 : index
    %c0_91 = arith.constant 0 : index
    %149 = vector.load %arg20[%c6, %c0_90, %c0_91] : memref<9x1x256xf32, #tpu.memory_space<vmem>>, vector<1x1x256xf32>
    %150 = vector.shape_cast %149 : vector<1x1x256xf32> to vector<1x256xf32>
    %151 = vector.broadcast %150 : vector<1x256xf32> to vector<4x256xf32>
    %152 = arith.mulf %148, %151 : vector<4x256xf32>
    %c6_92 = arith.constant 6 : index
    %c0_93 = arith.constant 0 : index
    %c0_94 = arith.constant 0 : index
    %153 = vector.load %arg18[%c6_92, %c0_93, %c0_94] : memref<9x4x1xf32, #tpu.memory_space<vmem>>, vector<1x4x1xf32>
    %154 = vector.shape_cast %153 : vector<1x4x1xf32> to vector<4x1xf32>
    %155 = vector.broadcast %154 : vector<4x1xf32> to vector<4x256xf32>
    %156 = arith.mulf %152, %155 : vector<4x256xf32>
    %157 = arith.addf %145, %156 : vector<4x256xf32>
    %cst_95 = arith.constant 0.000000e+00 : f32
    %158 = vector.broadcast %cst_95 : f32 to vector<4x16xf32>
    %159 = vector.extract_strided_slice %74 {offsets = [0, 16], sizes = [4, 240], strides = [1, 1]} : vector<4x256xf32> to vector<4x240xf32>
    %160 = tpu.concatenate %159, %158 in 1 : vector<4x240xf32>, vector<4x16xf32> -> vector<4x256xf32>
    %c7 = arith.constant 7 : index
    %c0_96 = arith.constant 0 : index
    %c0_97 = arith.constant 0 : index
    %161 = vector.load %arg20[%c7, %c0_96, %c0_97] : memref<9x1x256xf32, #tpu.memory_space<vmem>>, vector<1x1x256xf32>
    %162 = vector.shape_cast %161 : vector<1x1x256xf32> to vector<1x256xf32>
    %163 = vector.broadcast %162 : vector<1x256xf32> to vector<4x256xf32>
    %164 = arith.mulf %160, %163 : vector<4x256xf32>
    %c7_98 = arith.constant 7 : index
    %c0_99 = arith.constant 0 : index
    %c0_100 = arith.constant 0 : index
    %165 = vector.load %arg18[%c7_98, %c0_99, %c0_100] : memref<9x4x1xf32, #tpu.memory_space<vmem>>, vector<1x4x1xf32>
    %166 = vector.shape_cast %165 : vector<1x4x1xf32> to vector<4x1xf32>
    %167 = vector.broadcast %166 : vector<4x1xf32> to vector<4x256xf32>
    %168 = arith.mulf %164, %167 : vector<4x256xf32>
    %169 = arith.addf %157, %168 : vector<4x256xf32>
    %cst_101 = arith.constant 0.000000e+00 : f32
    %170 = vector.broadcast %cst_101 : f32 to vector<4x17xf32>
    %171 = vector.extract_strided_slice %74 {offsets = [0, 17], sizes = [4, 239], strides = [1, 1]} : vector<4x256xf32> to vector<4x239xf32>
    %172 = tpu.concatenate %171, %170 in 1 : vector<4x239xf32>, vector<4x17xf32> -> vector<4x256xf32>
    %c8 = arith.constant 8 : index
    %c0_102 = arith.constant 0 : index
    %c0_103 = arith.constant 0 : index
    %173 = vector.load %arg20[%c8, %c0_102, %c0_103] : memref<9x1x256xf32, #tpu.memory_space<vmem>>, vector<1x1x256xf32>
    %174 = vector.shape_cast %173 : vector<1x1x256xf32> to vector<1x256xf32>
    %175 = vector.broadcast %174 : vector<1x256xf32> to vector<4x256xf32>
    %176 = arith.mulf %172, %175 : vector<4x256xf32>
    %c8_104 = arith.constant 8 : index
    %c0_105 = arith.constant 0 : index
    %c0_106 = arith.constant 0 : index
    %177 = vector.load %arg18[%c8_104, %c0_105, %c0_106] : memref<9x4x1xf32, #tpu.memory_space<vmem>>, vector<1x4x1xf32>
    %178 = vector.shape_cast %177 : vector<1x4x1xf32> to vector<4x1xf32>
    %179 = vector.broadcast %178 : vector<4x1xf32> to vector<4x256xf32>
    %180 = arith.mulf %176, %179 : vector<4x256xf32>
    %181 = arith.addf %169, %180 : vector<4x256xf32>
    %c0_107 = arith.constant 0 : index
    %c0_108 = arith.constant 0 : index
    %182 = vector.load %arg19[%c0_107, %c0_108] : memref<4x1xf32, #tpu.memory_space<vmem>>, vector<4x1xf32>
    %183 = vector.broadcast %182 : vector<4x1xf32> to vector<4x256xf32>
    %184 = arith.addf %181, %183 : vector<4x256xf32>
    %cst_109 = arith.constant 5.000000e-01 : f32
    %185 = vector.broadcast %cst_109 : f32 to vector<4x256xf32>
    %186 = arith.mulf %185, %184 : vector<4x256xf32>
    %cst_110 = arith.constant 0.707106769 : f32
    %187 = vector.broadcast %cst_110 : f32 to vector<4x256xf32>
    %188 = arith.mulf %184, %187 : vector<4x256xf32>
    %189 = math.absf %188 : vector<4x256xf32>
    %cst_111 = arith.constant 0.327591091 : f32
    %190 = vector.broadcast %cst_111 : f32 to vector<4x256xf32>
    %191 = arith.mulf %190, %189 : vector<4x256xf32>
    %cst_112 = arith.constant 1.000000e+00 : f32
    %192 = vector.broadcast %cst_112 : f32 to vector<4x256xf32>
    %193 = arith.addf %192, %191 : vector<4x256xf32>
    %cst_113 = arith.constant 1.000000e+00 : f32
    %194 = vector.broadcast %cst_113 : f32 to vector<4x256xf32>
    %195 = arith.divf %194, %193 : vector<4x256xf32>
    %cst_114 = arith.constant 1.06140542 : f32
    %196 = vector.broadcast %cst_114 : f32 to vector<4x256xf32>
    %197 = arith.mulf %196, %195 : vector<4x256xf32>
    %cst_115 = arith.constant -1.45315206 : f32
    %198 = vector.broadcast %cst_115 : f32 to vector<4x256xf32>
    %199 = arith.addf %197, %198 : vector<4x256xf32>
    %200 = arith.mulf %199, %195 : vector<4x256xf32>
    %cst_116 = arith.constant 1.42141378 : f32
    %201 = vector.broadcast %cst_116 : f32 to vector<4x256xf32>
    %202 = arith.addf %200, %201 : vector<4x256xf32>
    %203 = arith.mulf %202, %195 : vector<4x256xf32>
    %cst_117 = arith.constant -0.284496725 : f32
    %204 = vector.broadcast %cst_117 : f32 to vector<4x256xf32>
    %205 = arith.addf %203, %204 : vector<4x256xf32>
    %206 = arith.mulf %205, %195 : vector<4x256xf32>
    %cst_118 = arith.constant 0.254829586 : f32
    %207 = vector.broadcast %cst_118 : f32 to vector<4x256xf32>
    %208 = arith.addf %206, %207 : vector<4x256xf32>
    %209 = arith.mulf %208, %195 : vector<4x256xf32>
    %cst_119 = arith.constant 0.000000e+00 : f32
    %210 = vector.broadcast %cst_119 : f32 to vector<4x256xf32>
    %211 = arith.subf %210, %189 : vector<4x256xf32>
    %212 = arith.mulf %211, %189 : vector<4x256xf32>
    %213 = math.exp %212 : vector<4x256xf32>
    %214 = arith.mulf %209, %213 : vector<4x256xf32>
    %cst_120 = arith.constant 1.000000e+00 : f32
    %215 = vector.broadcast %cst_120 : f32 to vector<4x256xf32>
    %216 = arith.subf %215, %214 : vector<4x256xf32>
    %cst_121 = arith.constant 0.000000e+00 : f32
    %217 = vector.broadcast %cst_121 : f32 to vector<4x256xf32>
    %218 = arith.cmpf oge, %188, %217 : vector<4x256xf32>
    %cst_122 = arith.constant 0.000000e+00 : f32
    %219 = vector.broadcast %cst_122 : f32 to vector<4x256xf32>
    %220 = arith.subf %219, %216 : vector<4x256xf32>
    %221 = arith.select %218, %216, %220 : vector<4x256xi1>, vector<4x256xf32>
    %cst_123 = arith.constant 1.000000e+00 : f32
    %222 = vector.broadcast %cst_123 : f32 to vector<4x256xf32>
    %223 = arith.addf %222, %221 : vector<4x256xf32>
    %224 = arith.mulf %186, %223 : vector<4x256xf32>
    %c0_124 = arith.constant 0 : index
    %c0_125 = arith.constant 0 : index
    %225 = vector.load %arg21[%c0_124, %c0_125] : memref<4x4xf32, #tpu.memory_space<vmem>>, vector<4x4xf32>
    %cst_126 = arith.constant dense<0.000000e+00> : vector<4x256xf32>
    %226 = tpu.matmul %225, %224, %cst_126 {dimension_numbers = #tpu.dot_dimension_numbers<[1], [0], [0], [1], [0, 0, 1, 1], [], []>} : vector<4x4xf32>, vector<4x256xf32>, vector<4x256xf32> -> vector<4x256xf32>
    %c0_127 = arith.constant 0 : index
    %c0_128 = arith.constant 0 : index
    %227 = vector.load %arg22[%c0_127, %c0_128] : memref<4x1xf32, #tpu.memory_space<vmem>>, vector<4x1xf32>
    %228 = vector.broadcast %227 : vector<4x1xf32> to vector<4x256xf32>
    %229 = arith.addf %226, %228 : vector<4x256xf32>
    %c0_129 = arith.constant 0 : index
    %c0_130 = arith.constant 0 : index
    %c0_131 = arith.constant 0 : index
    %230 = vector.load %arg24[%c0_129, %c0_130, %c0_131] : memref<1x4x256xf32, #tpu.memory_space<vmem>>, vector<1x4x256xf32>
    %231 = vector.shape_cast %230 : vector<1x4x256xf32> to vector<4x256xf32>
    %232 = vector.shape_cast %229 : vector<4x256xf32> to vector<1x4x256xf32>
    tpu.vector_store %arg24[%c0_129, %c0_130, %c0_131], %232 {strides = array<i32>} : memref<1x4x256xf32, #tpu.memory_space<vmem>>, vector<1x4x256xf32>,
    %cst_132 = arith.constant dense<0.000000e+00> : vector<4xf32>
    %233 = vector.multi_reduction <add>, %229, %cst_132 [1] : vector<4x256xf32> to vector<4xf32>
    %234 = vector.shape_cast %233 : vector<4xf32> to vector<4x1xf32>
    %cst_133 = arith.constant 2.560000e+02 : f32
    %235 = vector.broadcast %cst_133 : f32 to vector<4x1xf32>
    %236 = arith.divf %234, %235 : vector<4x1xf32>
    %237 = vector.broadcast %236 : vector<4x1xf32> to vector<4x256xf32>
    %238 = arith.subf %229, %237 : vector<4x256xf32>
    %239 = arith.mulf %238, %238 : vector<4x256xf32>
    %cst_134 = arith.constant dense<0.000000e+00> : vector<4xf32>
    %240 = vector.multi_reduction <add>, %239, %cst_134 [1] : vector<4x256xf32> to vector<4xf32>
    %241 = vector.shape_cast %240 : vector<4xf32> to vector<4x1xf32>
    %c0_135 = arith.constant 0 : index
    %c0_136 = arith.constant 0 : index
    %c0_137 = arith.constant 0 : index
    %242 = vector.load %arg25[%c0_135, %c0_136, %c0_137] : memref<1x4x1xf32, #tpu.memory_space<vmem>>, vector<1x4x1xf32>
    %243 = vector.shape_cast %242 : vector<1x4x1xf32> to vector<4x1xf32>
    %244 = vector.shape_cast %236 : vector<4x1xf32> to vector<1x4x1xf32>
    tpu.vector_store %arg25[%c0_135, %c0_136, %c0_137], %244 {strides = array<i32>} : memref<1x4x1xf32, #tpu.memory_space<vmem>>, vector<1x4x1xf32>,
    %c0_138 = arith.constant 0 : index
    %c0_139 = arith.constant 0 : index
    %c0_140 = arith.constant 0 : index
    %245 = vector.load %arg26[%c0_138, %c0_139, %c0_140] : memref<1x4x1xf32, #tpu.memory_space<vmem>>, vector<1x4x1xf32>
    %246 = vector.shape_cast %245 : vector<1x4x1xf32> to vector<4x1xf32>
    %247 = vector.shape_cast %241 : vector<4x1xf32> to vector<1x4x1xf32>
    tpu.vector_store %arg26[%c0_138, %c0_139, %c0_140], %247 {strides = array<i32>} : memref<1x4x1xf32, #tpu.memory_space<vmem>>, vector<1x4x1xf32>,
    return
  }
  func.func @transform_0(%arg0: i32) -> (i32, i32, i32) {
    %c0_i32 = arith.constant 0 : i32
    %c0_i32_0 = arith.constant 0 : i32
    %c0_i32_1 = arith.constant 0 : i32
    return %arg0, %c0_i32, %c0_i32_0 : i32, i32, i32
  }
  func.func @transform_1(%arg0: i32) -> (i32, i32, i32) {
    %c0_i32 = arith.constant 0 : i32
    %c0_i32_0 = arith.constant 0 : i32
    %c0_i32_1 = arith.constant 0 : i32
    return %arg0, %c0_i32, %c0_i32_0 : i32, i32, i32
  }
  func.func @transform_2(%arg0: i32) -> (i32, i32, i32) {
    %c0_i32 = arith.constant 0 : i32
    %c0_i32_0 = arith.constant 0 : i32
    %c0_i32_1 = arith.constant 0 : i32
    return %arg0, %c0_i32, %c0_i32_0 : i32, i32, i32
  }
  func.func @transform_3(%arg0: i32) -> (i32, i32, i32) {
    %c0_i32 = arith.constant 0 : i32
    %c0_i32_0 = arith.constant 0 : i32
    %c0_i32_1 = arith.constant 0 : i32
    return %arg0, %c0_i32, %c0_i32_0 : i32, i32, i32
  }
  func.func @transform_4(%arg0: i32) -> (i32, i32) {
    %c0_i32 = arith.constant 0 : i32
    %c0_i32_0 = arith.constant 0 : i32
    %c0_i32_1 = arith.constant 0 : i32
    return %c0_i32, %c0_i32_0 : i32, i32
  }
  func.func @transform_5(%arg0: i32) -> (i32, i32) {
    %c0_i32 = arith.constant 0 : i32
    %c0_i32_0 = arith.constant 0 : i32
    %c0_i32_1 = arith.constant 0 : i32
    return %c0_i32, %c0_i32_0 : i32, i32
  }
  func.func @transform_6(%arg0: i32) -> (i32, i32) {
    %c0_i32 = arith.constant 0 : i32
    %c0_i32_0 = arith.constant 0 : i32
    %c0_i32_1 = arith.constant 0 : i32
    return %c0_i32, %c0_i32_0 : i32, i32
  }
  func.func @transform_7(%arg0: i32) -> (i32, i32) {
    %c0_i32 = arith.constant 0 : i32
    %c0_i32_0 = arith.constant 0 : i32
    %c0_i32_1 = arith.constant 0 : i32
    return %c0_i32, %c0_i32_0 : i32, i32
  }
  func.func @transform_8(%arg0: i32) -> (i32, i32) {
    %c0_i32 = arith.constant 0 : i32
    %c0_i32_0 = arith.constant 0 : i32
    %c0_i32_1 = arith.constant 0 : i32
    return %c0_i32, %c0_i32_0 : i32, i32
  }
  func.func @transform_9(%arg0: i32) -> (i32, i32) {
    %c0_i32 = arith.constant 0 : i32
    %c0_i32_0 = arith.constant 0 : i32
    %c0_i32_1 = arith.constant 0 : i32
    return %c0_i32, %c0_i32_0 : i32, i32
  }
  func.func @transform_10(%arg0: i32) -> (i32, i32) {
    %c0_i32 = arith.constant 0 : i32
    %c0_i32_0 = arith.constant 0 : i32
    %c0_i32_1 = arith.constant 0 : i32
    return %c0_i32, %c0_i32_0 : i32, i32
  }
  func.func @transform_11(%arg0: i32) -> (i32, i32) {
    %c0_i32 = arith.constant 0 : i32
    %c0_i32_0 = arith.constant 0 : i32
    %c0_i32_1 = arith.constant 0 : i32
    return %c0_i32, %c0_i32_0 : i32, i32
  }
  func.func @transform_12(%arg0: i32) -> (i32, i32) {
    %c0_i32 = arith.constant 0 : i32
    %c0_i32_0 = arith.constant 0 : i32
    %c0_i32_1 = arith.constant 0 : i32
    return %c0_i32, %c0_i32_0 : i32, i32
  }
  func.func @transform_13(%arg0: i32) -> (i32, i32) {
    %c0_i32 = arith.constant 0 : i32
    %c0_i32_0 = arith.constant 0 : i32
    %c0_i32_1 = arith.constant 0 : i32
    return %c0_i32, %c0_i32_0 : i32, i32
  }
  func.func @transform_14(%arg0: i32) -> (i32, i32) {
    %c0_i32 = arith.constant 0 : i32
    %c0_i32_0 = arith.constant 0 : i32
    %c0_i32_1 = arith.constant 0 : i32
    return %c0_i32, %c0_i32_0 : i32, i32
  }
  func.func @transform_15(%arg0: i32) -> (i32, i32) {
    %c0_i32 = arith.constant 0 : i32
    %c0_i32_0 = arith.constant 0 : i32
    %c0_i32_1 = arith.constant 0 : i32
    return %c0_i32, %c0_i32_0 : i32, i32
  }
  func.func @transform_16(%arg0: i32) -> (i32, i32) {
    %c0_i32 = arith.constant 0 : i32
    %c0_i32_0 = arith.constant 0 : i32
    %c0_i32_1 = arith.constant 0 : i32
    return %c0_i32, %c0_i32_0 : i32, i32
  }
  func.func @transform_17(%arg0: i32) -> (i32, i32, i32) {
    %c0_i32 = arith.constant 0 : i32
    %c0_i32_0 = arith.constant 0 : i32
    %c0_i32_1 = arith.constant 0 : i32
    %c0_i32_2 = arith.constant 0 : i32
    return %c0_i32, %c0_i32_0, %c0_i32_1 : i32, i32, i32
  }
  func.func @transform_18(%arg0: i32) -> (i32, i32) {
    %c0_i32 = arith.constant 0 : i32
    %c0_i32_0 = arith.constant 0 : i32
    %c0_i32_1 = arith.constant 0 : i32
    return %c0_i32, %c0_i32_0 : i32, i32
  }
  func.func @transform_19(%arg0: i32) -> (i32, i32, i32) {
    %c0_i32 = arith.constant 0 : i32
    %c0_i32_0 = arith.constant 0 : i32
    %c0_i32_1 = arith.constant 0 : i32
    %c0_i32_2 = arith.constant 0 : i32
    return %c0_i32, %c0_i32_0, %c0_i32_1 : i32, i32, i32
  }
  func.func @transform_20(%arg0: i32) -> (i32, i32) {
    %c0_i32 = arith.constant 0 : i32
    %c0_i32_0 = arith.constant 0 : i32
    %c0_i32_1 = arith.constant 0 : i32
    return %c0_i32, %c0_i32_0 : i32, i32
  }
  func.func @transform_21(%arg0: i32) -> (i32, i32) {
    %c0_i32 = arith.constant 0 : i32
    %c0_i32_0 = arith.constant 0 : i32
    %c0_i32_1 = arith.constant 0 : i32
    return %c0_i32, %c0_i32_0 : i32, i32
  }
  func.func @transform_22(%arg0: i32) -> (i32, i32, i32) {
    %c0_i32 = arith.constant 0 : i32
    %c0_i32_0 = arith.constant 0 : i32
    %c0_i32_1 = arith.constant 0 : i32
    return %arg0, %c0_i32, %c0_i32_0 : i32, i32, i32
  }
  func.func @transform_23(%arg0: i32) -> (i32, i32, i32) {
    %c0_i32 = arith.constant 0 : i32
    %c0_i32_0 = arith.constant 0 : i32
    %c0_i32_1 = arith.constant 0 : i32
    return %arg0, %c0_i32, %c0_i32_0 : i32, i32, i32
  }
  func.func @transform_24(%arg0: i32) -> (i32, i32, i32) {
    %c0_i32 = arith.constant 0 : i32
    %c0_i32_0 = arith.constant 0 : i32
    %c0_i32_1 = arith.constant 0 : i32
    return %arg0, %c0_i32, %c0_i32_0 : i32, i32, i32
  }
  func.func @transform_25(%arg0: i32) -> (i32, i32, i32) {
    %c0_i32 = arith.constant 0 : i32
    %c0_i32_0 = arith.constant 0 : i32
    %c0_i32_1 = arith.constant 0 : i32
    return %arg0, %c0_i32, %c0_i32_0 : i32, i32, i32
  }
}

module attributes {stable_mosaic.version = 11 : i64} {
  func.func @_stage3_kernel(%arg0: i32, %arg1: memref<1x4x256xf32, #tpu.memory_space<vmem>>, %arg2: memref<1x4x256xf32, #tpu.memory_space<vmem>>, %arg3: memref<4x1xf32, #tpu.memory_space<vmem>>, %arg4: memref<4x1xf32, #tpu.memory_space<vmem>>, %arg5: memref<1x4x256xf32, #tpu.memory_space<vmem>>) attributes {dimension_semantics = [#tpu.dimension_semantics<parallel>], iteration_bounds = array<i64: 2>, scalar_prefetch = 0 : i64, scratch_operands = 0 : i64, tpu.core_type = #tpu.core_type<tc>, window_params = [{transform_indices = @transform_0, window_bounds = array<i64: 1, 4, 256>}, {transform_indices = @transform_1, window_bounds = array<i64: 1, 4, 256>}, {pipeline_mode = #tpu.pipeline_mode<synchronous>, transform_indices = @transform_2, window_bounds = array<i64: 4, 1>}, {pipeline_mode = #tpu.pipeline_mode<synchronous>, transform_indices = @transform_3, window_bounds = array<i64: 4, 1>}, {transform_indices = @transform_4, window_bounds = array<i64: 1, 4, 256>}]} {
    %c0 = arith.constant 0 : index
    %c0_0 = arith.constant 0 : index
    %c0_1 = arith.constant 0 : index
    %0 = vector.load %arg1[%c0, %c0_0, %c0_1] : memref<1x4x256xf32, #tpu.memory_space<vmem>>, vector<1x4x256xf32>
    %1 = vector.shape_cast %0 : vector<1x4x256xf32> to vector<4x256xf32>
    %c0_2 = arith.constant 0 : index
    %c0_3 = arith.constant 0 : index
    %2 = vector.load %arg3[%c0_2, %c0_3] : memref<4x1xf32, #tpu.memory_space<vmem>>, vector<4x1xf32>
    %3 = vector.broadcast %2 : vector<4x1xf32> to vector<4x256xf32>
    %4 = arith.mulf %1, %3 : vector<4x256xf32>
    %c0_4 = arith.constant 0 : index
    %c0_5 = arith.constant 0 : index
    %5 = vector.load %arg4[%c0_4, %c0_5] : memref<4x1xf32, #tpu.memory_space<vmem>>, vector<4x1xf32>
    %6 = vector.broadcast %5 : vector<4x1xf32> to vector<4x256xf32>
    %7 = arith.addf %4, %6 : vector<4x256xf32>
    %c0_6 = arith.constant 0 : index
    %c0_7 = arith.constant 0 : index
    %c0_8 = arith.constant 0 : index
    %8 = vector.load %arg2[%c0_6, %c0_7, %c0_8] : memref<1x4x256xf32, #tpu.memory_space<vmem>>, vector<1x4x256xf32>
    %9 = vector.shape_cast %8 : vector<1x4x256xf32> to vector<4x256xf32>
    %10 = arith.addf %7, %9 : vector<4x256xf32>
    %c0_9 = arith.constant 0 : index
    %c0_10 = arith.constant 0 : index
    %c0_11 = arith.constant 0 : index
    %11 = vector.load %arg5[%c0_9, %c0_10, %c0_11] : memref<1x4x256xf32, #tpu.memory_space<vmem>>, vector<1x4x256xf32>
    %12 = vector.shape_cast %11 : vector<1x4x256xf32> to vector<4x256xf32>
    %13 = vector.shape_cast %10 : vector<4x256xf32> to vector<1x4x256xf32>
    tpu.vector_store %arg5[%c0_9, %c0_10, %c0_11], %13 {strides = array<i32>} : memref<1x4x256xf32, #tpu.memory_space<vmem>>, vector<1x4x256xf32>,
    return
  }
  func.func @transform_0(%arg0: i32) -> (i32, i32, i32) {
    %c0_i32 = arith.constant 0 : i32
    %c0_i32_0 = arith.constant 0 : i32
    %c0_i32_1 = arith.constant 0 : i32
    return %arg0, %c0_i32, %c0_i32_0 : i32, i32, i32
  }
  func.func @transform_1(%arg0: i32) -> (i32, i32, i32) {
    %c0_i32 = arith.constant 0 : i32
    %c0_i32_0 = arith.constant 0 : i32
    %c0_i32_1 = arith.constant 0 : i32
    return %arg0, %c0_i32, %c0_i32_0 : i32, i32, i32
  }
  func.func @transform_2(%arg0: i32) -> (i32, i32) {
    %c0_i32 = arith.constant 0 : i32
    %c0_i32_0 = arith.constant 0 : i32
    %c0_i32_1 = arith.constant 0 : i32
    return %c0_i32, %c0_i32_0 : i32, i32
  }
  func.func @transform_3(%arg0: i32) -> (i32, i32) {
    %c0_i32 = arith.constant 0 : i32
    %c0_i32_0 = arith.constant 0 : i32
    %c0_i32_1 = arith.constant 0 : i32
    return %c0_i32, %c0_i32_0 : i32, i32
  }
  func.func @transform_4(%arg0: i32) -> (i32, i32, i32) {
    %c0_i32 = arith.constant 0 : i32
    %c0_i32_0 = arith.constant 0 : i32
    %c0_i32_1 = arith.constant 0 : i32
    return %arg0, %c0_i32, %c0_i32_0 : i32, i32, i32
  }
}

</mosaic_0001>

<llo_original>
// kernel: hpb_forward.5
$region0: #{hpb_forward.5}
  #allocation0 [shape = 'u32[]', space=smem, size = 0x4, offset = 0x4, fixed_abs, tag = 'smem constant byte address 0x4 - core index']
  #allocation1 [shape = 'u32[144,128]{1,0:T(1,128)}', space=vmem, size = 0x12000, scoped, tag = 'internal scratch']
  %s0 = inlined_call_operand.vmem [shape: f32[2,4,256], index: 0, kind: input, shape index: {}]
  %s1 = inlined_call_operand.vmem [shape: f32[2,4,256], index: 1, kind: input, shape index: {}]
  %s2 = inlined_call_operand.vmem [shape: f32[4,1], index: 2, kind: input, shape index: {}]
  %s3 = inlined_call_operand.vmem [shape: f32[4,1], index: 3, kind: input, shape index: {}]
  %s4 = inlined_call_operand.vmem [shape: f32[2,4,256], index: 4, kind: output, shape index: {}]
  %s5 = sld [smem:[#allocation0]]
  $region49: #{hpb_forward.5} parent=0
    _
  %s7 = ssub.s32 1, %s5
  %s8 = scalar_select 0, %s7, %s5
  loop: start=0, step=1, limit=4
  $region2: #{hpb_forward.5} parent=0 // loop_pre_header
    _
  $region3: #{hpb_forward.5} parent=0 // loop_header
    %s10 = sphi 0, %s14
    %p11 = scmp.ge.s32.totalorder %s10, 4
    %s20 = sphi 0, %s22
    %s23 = sphi 0, %s20
    %s24 = sphi 0, %s23
    %s40 = sphi 0, %s24
    %s46 = sphi 0, %s48
    %s49 = sphi 0, %s46
    %s50 = sphi 0, %s49
    %s66 = sphi 0, %s50
    %s70 = sphi 0, %s70
    %s72 = sphi 0, %s70
    %s73 = sphi 0, %s72
    %s87 = sphi 0, %s73
    %s91 = sphi 0, %s91
    %s93 = sphi 0, %s91
    %s94 = sphi 0, %s93
    %s108 = sphi 0, %s94
    %s114 = sphi 0, %s116
    %s117 = sphi 0, %s114
    %s118 = sphi 0, %s117
    %s134 = sphi 0, %s118
  $region4: #{hpb_forward.5} parent=0 // loop_header_branch
    %13 = sbr.rel (%p11) target = $region8
  $region5: #{hpb_forward.5} parent=0 // loop_body
    %s15 = ssub.s32 %s10, 1
    %s16 = ssub.s32 %s10, 2
    %s17 = sadd.s32 %s10, 1
    %s18 = ssub.s32 %s10, %s17
    %p19 = scmp.eq.s32.totalorder %s18, 0
    %s21 = sadd.s32 %s20, 1
    %s22 = scalar_select %p19, %s20, %s21
    %p25 = pneg %p19
    %p26 = scmp.eq.s32.totalorder %s10, 1
    %p27 = por %p25, %p26
    %p28 = scmp.ne.s32.totalorder %s20, %s23
    %p29 = scmp.eq.s32.totalorder %s10, 0
    %p30 = por %p28, %p29
    %p31 = scmp.ne.s32.totalorder %s20, %s23
    %p32 = scmp.eq.s32.totalorder %s15, 1
    %p33 = por %p31, %p32
    %p34 = scmp.ne.s32.totalorder %s23, %s24
    %p35 = scmp.eq.s32.totalorder %s15, 0
    %p36 = por %p34, %p35
    %p37 = scmp.ne.s32.totalorder %s23, %s24
    %p38 = scmp.eq.s32.totalorder %s16, 1
    %p39 = por %p37, %p38
    %p41 = scmp.ne.s32.totalorder %s24, %s40
    %p42 = scmp.eq.s32.totalorder %s16, 0
    %p43 = por %p41, %p42
    %s44 = ssub.s32 %s10, %s17
    %p45 = scmp.eq.s32.totalorder %s44, 0
    %s47 = sadd.s32 %s46, 1
    %s48 = scalar_select %p45, %s46, %s47
    %p51 = pneg %p45
    %p52 = scmp.eq.s32.totalorder %s10, 1
    %p53 = por %p51, %p52
    %p54 = scmp.ne.s32.totalorder %s46, %s49
    %p55 = scmp.eq.s32.totalorder %s10, 0
    %p56 = por %p54, %p55
    %p57 = scmp.ne.s32.totalorder %s46, %s49
    %p58 = scmp.eq.s32.totalorder %s15, 1
    %p59 = por %p57, %p58
    %p60 = scmp.ne.s32.totalorder %s49, %s50
    %p61 = scmp.eq.s32.totalorder %s15, 0
    %p62 = por %p60, %p61
    %p63 = scmp.ne.s32.totalorder %s49, %s50
    %p64 = scmp.eq.s32.totalorder %s16, 1
    %p65 = por %p63, %p64
    %p67 = scmp.ne.s32.totalorder %s50, %s66
    %p68 = scmp.eq.s32.totalorder %s16, 0
    %p69 = por %p67, %p68
    %s71 = sadd.s32 %s70, 1
    %p74 = scmp.eq.s32.totalorder %s10, 1
    %p75 = scmp.ne.s32.totalorder %s70, %s72
    %p76 = scmp.eq.s32.totalorder %s10, 0
    %p77 = por %p75, %p76
    %p78 = scmp.ne.s32.totalorder %s70, %s72
    %p79 = scmp.eq.s32.totalorder %s15, 1
    %p80 = por %p78, %p79
    %p81 = scmp.ne.s32.totalorder %s72, %s73
    %p82 = scmp.eq.s32.totalorder %s15, 0
    %p83 = por %p81, %p82
    %p84 = scmp.ne.s32.totalorder %s72, %s73
    %p85 = scmp.eq.s32.totalorder %s16, 1
    %p86 = por %p84, %p85
    %p88 = scmp.ne.s32.totalorder %s73, %s87
    %p89 = scmp.eq.s32.totalorder %s16, 0
    %p90 = por %p88, %p89
    %s92 = sadd.s32 %s91, 1
    %p95 = scmp.eq.s32.totalorder %s10, 1
    %p96 = scmp.ne.s32.totalorder %s91, %s93
    %p97 = scmp.eq.s32.totalorder %s10, 0
    %p98 = por %p96, %p97
    %p99 = scmp.ne.s32.totalorder %s91, %s93
    %p100 = scmp.eq.s32.totalorder %s15, 1
    %p101 = por %p99, %p100
    %p102 = scmp.ne.s32.totalorder %s93, %s94
    %p103 = scmp.eq.s32.totalorder %s15, 0
    %p104 = por %p102, %p103
    %p105 = scmp.ne.s32.totalorder %s93, %s94
    %p106 = scmp.eq.s32.totalorder %s16, 1
    %p107 = por %p105, %p106
    %p109 = scmp.ne.s32.totalorder %s94, %s108
    %p110 = scmp.eq.s32.totalorder %s16, 0
    %p111 = por %p109, %p110
    %s112 = ssub.s32 %s10, %s17
    %p113 = scmp.eq.s32.totalorder %s112, 0
    %s115 = sadd.s32 %s114, 1
    %s116 = scalar_select %p113, %s114, %s115
    %p119 = pneg %p113
    %p120 = scmp.eq.s32.totalorder %s10, 1
    %p121 = por %p119, %p120
    %p122 = scmp.ne.s32.totalorder %s114, %s117
    %p123 = scmp.eq.s32.totalorder %s10, 0
    %p124 = por %p122, %p123
    %p125 = scmp.ne.s32.totalorder %s114, %s117
    %p126 = scmp.eq.s32.totalorder %s15, 1
    %p127 = por %p125, %p126
    %p128 = scmp.ne.s32.totalorder %s117, %s118
    %p129 = scmp.eq.s32.totalorder %s15, 0
    %p130 = por %p128, %p129
    %p131 = scmp.ne.s32.totalorder %s117, %s118
    %p132 = scmp.eq.s32.totalorder %s16, 1
    %p133 = por %p131, %p132
    %p135 = scmp.ne.s32.totalorder %s118, %s134
    %p136 = scmp.eq.s32.totalorder %s16, 0
    %p137 = por %p135, %p136
    %p138 = scmp.le.s32.totalorder 1, %s10
    %p139 = scmp.lt.s32.totalorder %s10, 3
    %p140 = pnand %p138, %p139
    %p141 = pneg %p140
    // Predicated region
    $region9: #{hpb_forward.5} parent=5 // pred_check
      _
    $region10: #{hpb_forward.5} parent=5 // pred_check_branch
      %143 = sbr.rel (%p140) target = $region12
    $region11: #{hpb_forward.5} parent=5 // pred_region
      %s144 = ssub.s32 %s10, 1
      // Predicated region
      $region13: #{hpb_forward.5} parent=11 // pred_check
        %p145 = pneg %p83
      $region14: #{hpb_forward.5} parent=11 // pred_check_branch
        %147 = sbr.rel (%p145) target = $region16
      $region15: #{hpb_forward.5} parent=11 // pred_region
        _
      $region16: #{hpb_forward.5} parent=11 // pred_fallthru
        _
      // Predicated region
      $region17: #{hpb_forward.5} parent=11 // pred_check
        %p148 = pneg %p104
      $region18: #{hpb_forward.5} parent=11 // pred_check_branch
        %150 = sbr.rel (%p148) target = $region20
      $region19: #{hpb_forward.5} parent=11 // pred_region
        _
      $region20: #{hpb_forward.5} parent=11 // pred_fallthru
        _
    $region12: #{hpb_forward.5} parent=5 // pred_fallthru
      _
    %p151 = scmp.lt.s32.totalorder %s10, 2
    // Predicated region
    $region21: #{hpb_forward.5} parent=5 // pred_check
      %p152 = pneg %p151
    $region22: #{hpb_forward.5} parent=5 // pred_check_branch
      %154 = sbr.rel (%p152) target = $region24
    $region23: #{hpb_forward.5} parent=5 // pred_region
      // Predicated region
      $region25: #{hpb_forward.5} parent=23 // pred_check
        %p155 = pneg %p30
      $region26: #{hpb_forward.5} parent=23 // pred_check_branch
        %157 = sbr.rel (%p155) target = $region28
      $region27: #{hpb_forward.5} parent=23 // pred_region
        %p158 = scmp.lt.s32.totalorder %s10, 1
        %s159 = scalar_select %p158, %s10, 1
        %s160 = smul.addr %s159, 2
        %s161 = smul.addr %s160, 4
        %s162 = scalar_lea.vmem %s0, %s161
      $region28: #{hpb_forward.5} parent=23 // pred_fallthru
        _
      // Predicated region
      $region29: #{hpb_forward.5} parent=23 // pred_check
        %p163 = pneg %p56
      $region30: #{hpb_forward.5} parent=23 // pred_check_branch
        %165 = sbr.rel (%p163) target = $region32
      $region31: #{hpb_forward.5} parent=23 // pred_region
        %p166 = scmp.lt.s32.totalorder %s10, 1
        %s167 = scalar_select %p166, %s10, 1
        %s168 = smul.addr %s167, 2
        %s169 = smul.addr %s168, 4
        %s170 = scalar_lea.vmem %s1, %s169
      $region32: #{hpb_forward.5} parent=23 // pred_fallthru
        _
    $region24: #{hpb_forward.5} parent=5 // pred_fallthru
      _
    %p171 = scmp.le.s32.totalorder 1, %s10
    %p172 = scmp.lt.s32.totalorder %s10, 3
    %p173 = pnand %p171, %p172
    %p174 = pneg %p173
    // Predicated region
    $region33: #{hpb_forward.5} parent=5 // pred_check
      _
    $region34: #{hpb_forward.5} parent=5 // pred_check_branch
      %176 = sbr.rel (%p173) target = $region36
    $region35: #{hpb_forward.5} parent=5 // pred_region
      %s177 = ssub.s32 %s10, 1
      %p178 = scmp.lt.s32.totalorder %s15, 1
      %s179 = scalar_select %p178, %s15, 1
      %s180 = smul.addr %s179, 2
      %s181 = smul.addr %s180, 4
      %s182 = scalar_lea.vmem %s0, %s181
      %p183 = pneg %p36
      %p184 = pneg %p33
      %p185 = scmp.lt.s32.totalorder %s15, 1
      %s186 = scalar_select %p185, %s15, 1
      %s187 = smul.addr %s186, 2
      %s188 = smul.addr %s187, 4
      %s189 = scalar_lea.vmem %s1, %s188
      %p190 = pneg %p62
      %p191 = pneg %p59
      %p192 = pneg %p83
      %p193 = pneg %p80
      %p194 = pneg %p104
      %p195 = pneg %p101
      %p196 = pneg %p130
      %p197 = pneg %p127
      %p198 = scmp.lt.s32.totalorder %s15, 1
      %s199 = scalar_select %p198, %s15, 1
      %s200 = smul.addr %s199, 2
      %s201 = smul.addr %s200, 4
      %s202 = scalar_lea.vmem %s4, %s201
      %p203 = scmp.lt.s32.totalorder %s15, 1
      %s204 = scalar_select %p203, %s15, 1
      %s205 = smul.addr %s204, 2
      %s206 = smul.addr %s205, 4
      %s207 = scalar_lea.vmem %s0, %s206
      %p208 = scmp.lt.s32.totalorder %s15, 1
      %s209 = scalar_select %p208, %s15, 1
      %s210 = smul.addr %s209, 2
      %s211 = smul.addr %s210, 4
      %s212 = scalar_lea.vmem %s1, %s211
      %p213 = scmp.lt.s32.totalorder %s15, 1
      %s214 = scalar_select %p213, %s15, 1
      %s215 = smul.addr %s214, 2
      %s216 = smul.addr %s215, 4
      %s217 = scalar_lea.vmem %s4, %s216
      %v218 = vld [vmem:[%s207] sm:$0xff]
      %v219 = vld [vmem:[%s2] sm:$0xf]
      %221 = vset.pattern.permute.xlu0 0
      %222 = vperm.xlu0 %221, %v219
      %v223 = vpop.permute.xlu0 %222
      %v225 = vunpack.c.l.s4 839922192
      %v226 = vunpack.c.0.s8 %v225
      %v227 = vlaneseq
      %v228 = vshrl.u32 %v227, 7
      %v229 = vsub.s32 %v226, %v228
      %v230 = vrot.slane %v223, %v229
      %v232 = vmul.f32 %v218, %v230
      %v233 = vld [vmem:[%s3] sm:$0xf]
      %235 = vset.pattern.permute.xlu0 0
      %236 = vperm.xlu0 %235, %v233
      %v237 = vpop.permute.xlu0 %236
      %v239 = vunpack.c.l.s4 839922192
      %v240 = vunpack.c.0.s8 %v239
      %v241 = vlaneseq
      %v242 = vshrl.u32 %v241, 7
      %v243 = vsub.s32 %v240, %v242
      %v244 = vrot.slane %v237, %v243
      %v246 = vadd.f32 %v232, %v244
      %v247 = vld [vmem:[%s212] sm:$0xff]
      %v248 = vadd.f32 %v246, %v247
      %249 = vst [vmem:[%s217] sm:$0xff] %v248
      %p250 = scmp.lt.s32.totalorder %s15, 1
      %s251 = scalar_select %p250, %s15, 1
      %s252 = smul.addr %s251, 2
      %s253 = smul.addr %s252, 4
      %s254 = scalar_lea.vmem %s4, %s253
      // Predicated region
      $region37: #{hpb_forward.5} parent=35 // pred_check
        %p255 = pneg %p127
      $region38: #{hpb_forward.5} parent=35 // pred_check_branch
        %257 = sbr.rel (%p255) target = $region40
      $region39: #{hpb_forward.5} parent=35 // pred_region
        _
      $region40: #{hpb_forward.5} parent=35 // pred_fallthru
        _
    $region36: #{hpb_forward.5} parent=5 // pred_fallthru
      _
    %p258 = scmp.le.s32.totalorder 2, %s10
    // Predicated region
    $region41: #{hpb_forward.5} parent=5 // pred_check
      %p259 = pneg %p258
    $region42: #{hpb_forward.5} parent=5 // pred_check_branch
      %261 = sbr.rel (%p259) target = $region44
    $region43: #{hpb_forward.5} parent=5 // pred_region
      %s262 = ssub.s32 %s10, 2
      // Predicated region
      $region45: #{hpb_forward.5} parent=43 // pred_check
        %p263 = pneg %p133
      $region46: #{hpb_forward.5} parent=43 // pred_check_branch
        %265 = sbr.rel (%p263) target = $region48
      $region47: #{hpb_forward.5} parent=43 // pred_region
        %p266 = scmp.lt.s32.totalorder %s16, 1
        %s267 = scalar_select %p266, %s16, 1
        %s268 = smul.addr %s267, 2
        %s269 = smul.addr %s268, 4
        %s270 = scalar_lea.vmem %s4, %s269
      $region48: #{hpb_forward.5} parent=43 // pred_fallthru
        _
    $region44: #{hpb_forward.5} parent=5 // pred_fallthru
      _
  $region6: #{hpb_forward.5} parent=0 // loop_footer
    %s14 = sadd.s32 1, %s10
  $region7: #{hpb_forward.5} parent=0 // loop_footer_branch
    %9 = sbr.rel target = $region3
  $region8: #{hpb_forward.5} parent=0 // loop_exit
    _

// kernel: hpb_forward.3
$region0: #{hpb_forward.3}
  #allocation0 [shape = 'u32[]', space=smem, size = 0x4, offset = 0x4, fixed_abs, tag = 'smem constant byte address 0x4 - core index']
  #allocation1 [shape = 'u32[144,128]{1,0:T(1,128)}', space=vmem, size = 0x12000, scoped, tag = 'internal scratch']
  %s0 = inlined_call_operand.vmem [shape: f32[2,4,64], index: 0, kind: input, shape index: {}]
  %s1 = inlined_call_operand.vmem [shape: f32[4,4], index: 1, kind: input, shape index: {}]
  %s2 = inlined_call_operand.vmem [shape: f32[4,1], index: 2, kind: input, shape index: {}]
  %s3 = inlined_call_operand.vmem [shape: f32[4,4], index: 3, kind: input, shape index: {}]
  %s4 = inlined_call_operand.vmem [shape: f32[4,1], index: 4, kind: input, shape index: {}]
  %s5 = inlined_call_operand.vmem [shape: f32[4,4], index: 5, kind: input, shape index: {}]
  %s6 = inlined_call_operand.vmem [shape: f32[4,1], index: 6, kind: input, shape index: {}]
  %s7 = inlined_call_operand.vmem [shape: f32[5,4,1], index: 7, kind: input, shape index: {}]
  %s8 = inlined_call_operand.vmem [shape: f32[4,1], index: 8, kind: input, shape index: {}]
  %s9 = inlined_call_operand.vmem [shape: f32[4,4], index: 9, kind: input, shape index: {}]
  %s10 = inlined_call_operand.vmem [shape: f32[4,1], index: 10, kind: input, shape index: {}]
  %s11 = inlined_call_operand.vmem [shape: f32[5,4,1], index: 11, kind: input, shape index: {}]
  %s12 = inlined_call_operand.vmem [shape: f32[4,1], index: 12, kind: input, shape index: {}]
  %s13 = inlined_call_operand.vmem [shape: f32[5,1,64], index: 13, kind: input, shape index: {}]
  %s14 = inlined_call_operand.vmem [shape: f32[4,4], index: 14, kind: input, shape index: {}]
  %s15 = inlined_call_operand.vmem [shape: f32[4,1], index: 15, kind: input, shape index: {}]
  %s16 = inlined_call_operand.vmem [shape: f32[2,4,64], index: 16, kind: output, shape index: {0}]
  %s17 = inlined_call_operand.vmem [shape: f32[2,4,64], index: 17, kind: output, shape index: {1}]
  %s18 = inlined_call_operand.vmem [shape: f32[2,4,64], index: 18, kind: output, shape index: {2}]
  %s19 = inlined_call_operand.vmem [shape: f32[2,4,1], index: 19, kind: output, shape index: {3}]
  %s20 = inlined_call_operand.vmem [shape: f32[2,4,1], index: 20, kind: output, shape index: {4}]
  %s21 = inlined_call_operand.vmem [shape: f32[2,4,1], index: 21, kind: output, shape index: {5}]
  %s22 = inlined_call_operand.vmem [shape: f32[2,4,1], index: 22, kind: output, shape index: {6}]
  %23 = xla_tuple %s16, %s17, %s18, %s19, %s20, %s21, %s22
  %s24 = sld [smem:[#allocation0]]
  $region145: #{hpb_forward.3} parent=0
    _
  %s26 = ssub.s32 1, %s24
  %s27 = scalar_select 0, %s26, %s24
  loop: start=0, step=1, limit=4
  $region2: #{hpb_forward.3} parent=0 // loop_pre_header
    _
  $region3: #{hpb_forward.3} parent=0 // loop_header
    %s29 = sphi 0, %s33
    %p30 = scmp.ge.s32.totalorder %s29, 4
    %s39 = sphi 0, %s41
    %s42 = sphi 0, %s39
    %s43 = sphi 0, %s42
    %s59 = sphi 0, %s43
    %s63 = sphi 0, %s63
    %s65 = sphi 0, %s63
    %s66 = sphi 0, %s65
    %s80 = sphi 0, %s66
    %s84 = sphi 0, %s84
    %s86 = sphi 0, %s84
    %s87 = sphi 0, %s86
    %s101 = sphi 0, %s87
    %s105 = sphi 0, %s105
    %s107 = sphi 0, %s105
    %s108 = sphi 0, %s107
    %s122 = sphi 0, %s108
    %s126 = sphi 0, %s126
    %s128 = sphi 0, %s126
    %s129 = sphi 0, %s128
    %s143 = sphi 0, %s129
    %s147 = sphi 0, %s147
    %s149 = sphi 0, %s147
    %s150 = sphi 0, %s149
    %s164 = sphi 0, %s150
    %s168 = sphi 0, %s168
    %s170 = sphi 0, %s168
    %s171 = sphi 0, %s170
    %s185 = sphi 0, %s171
    %s189 = sphi 0, %s189
    %s191 = sphi 0, %s189
    %s192 = sphi 0, %s191
    %s206 = sphi 0, %s192
    %s210 = sphi 0, %s210
    %s212 = sphi 0, %s210
    %s213 = sphi 0, %s212
    %s227 = sphi 0, %s213
    %s231 = sphi 0, %s231
    %s233 = sphi 0, %s231
    %s234 = sphi 0, %s233
    %s248 = sphi 0, %s234
    %s252 = sphi 0, %s252
    %s254 = sphi 0, %s252
    %s255 = sphi 0, %s254
    %s269 = sphi 0, %s255
    %s273 = sphi 0, %s273
    %s275 = sphi 0, %s273
    %s276 = sphi 0, %s275
    %s290 = sphi 0, %s276
    %s294 = sphi 0, %s294
    %s296 = sphi 0, %s294
    %s297 = sphi 0, %s296
    %s311 = sphi 0, %s297
    %s315 = sphi 0, %s315
    %s317 = sphi 0, %s315
    %s318 = sphi 0, %s317
    %s332 = sphi 0, %s318
    %s336 = sphi 0, %s336
    %s338 = sphi 0, %s336
    %s339 = sphi 0, %s338
    %s353 = sphi 0, %s339
    %s357 = sphi 0, %s357
    %s359 = sphi 0, %s357
    %s360 = sphi 0, %s359
    %s374 = sphi 0, %s360
    %s380 = sphi 0, %s382
    %s383 = sphi 0, %s380
    %s384 = sphi 0, %s383
    %s400 = sphi 0, %s384
    %s406 = sphi 0, %s408
    %s409 = sphi 0, %s406
    %s410 = sphi 0, %s409
    %s426 = sphi 0, %s410
    %s432 = sphi 0, %s434
    %s435 = sphi 0, %s432
    %s436 = sphi 0, %s435
    %s452 = sphi 0, %s436
    %s458 = sphi 0, %s460
    %s461 = sphi 0, %s458
    %s462 = sphi 0, %s461
    %s478 = sphi 0, %s462
    %s484 = sphi 0, %s486
    %s487 = sphi 0, %s484
    %s488 = sphi 0, %s487
    %s504 = sphi 0, %s488
    %s510 = sphi 0, %s512
    %s513 = sphi 0, %s510
    %s514 = sphi 0, %s513
    %s530 = sphi 0, %s514
    %s536 = sphi 0, %s538
    %s539 = sphi 0, %s536
    %s540 = sphi 0, %s539
    %s556 = sphi 0, %s540
  $region4: #{hpb_forward.3} parent=0 // loop_header_branch
    %32 = sbr.rel (%p30) target = $region8
  $region5: #{hpb_forward.3} parent=0 // loop_body
    %s34 = ssub.s32 %s29, 1
    %s35 = ssub.s32 %s29, 2
    %s36 = sadd.s32 %s29, 1
    %s37 = ssub.s32 %s29, %s36
    %p38 = scmp.eq.s32.totalorder %s37, 0
    %s40 = sadd.s32 %s39, 1
    %s41 = scalar_select %p38, %s39, %s40
    %p44 = pneg %p38
    %p45 = scmp.eq.s32.totalorder %s29, 1
    %p46 = por %p44, %p45
    %p47 = scmp.ne.s32.totalorder %s39, %s42
    %p48 = scmp.eq.s32.totalorder %s29, 0
    %p49 = por %p47, %p48
    %p50 = scmp.ne.s32.totalorder %s39, %s42
    %p51 = scmp.eq.s32.totalorder %s34, 1
    %p52 = por %p50, %p51
    %p53 = scmp.ne.s32.totalorder %s42, %s43
    %p54 = scmp.eq.s32.totalorder %s34, 0
    %p55 = por %p53, %p54
    %p56 = scmp.ne.s32.totalorder %s42, %s43
    %p57 = scmp.eq.s32.totalorder %s35, 1
    %p58 = por %p56, %p57
    %p60 = scmp.ne.s32.totalorder %s43, %s59
    %p61 = scmp.eq.s32.totalorder %s35, 0
    %p62 = por %p60, %p61
    %s64 = sadd.s32 %s63, 1
    %p67 = scmp.eq.s32.totalorder %s29, 1
    %p68 = scmp.ne.s32.totalorder %s63, %s65
    %p69 = scmp.eq.s32.totalorder %s29, 0
    %p70 = por %p68, %p69
    %p71 = scmp.ne.s32.totalorder %s63, %s65
    %p72 = scmp.eq.s32.totalorder %s34, 1
    %p73 = por %p71, %p72
    %p74 = scmp.ne.s32.totalorder %s65, %s66
    %p75 = scmp.eq.s32.totalorder %s34, 0
    %p76 = por %p74, %p75
    %p77 = scmp.ne.s32.totalorder %s65, %s66
    %p78 = scmp.eq.s32.totalorder %s35, 1
    %p79 = por %p77, %p78
    %p81 = scmp.ne.s32.totalorder %s66, %s80
    %p82 = scmp.eq.s32.totalorder %s35, 0
    %p83 = por %p81, %p82
    %s85 = sadd.s32 %s84, 1
    %p88 = scmp.eq.s32.totalorder %s29, 1
    %p89 = scmp.ne.s32.totalorder %s84, %s86
    %p90 = scmp.eq.s32.totalorder %s29, 0
    %p91 = por %p89, %p90
    %p92 = scmp.ne.s32.totalorder %s84, %s86
    %p93 = scmp.eq.s32.totalorder %s34, 1
    %p94 = por %p92, %p93
    %p95 = scmp.ne.s32.totalorder %s86, %s87
    %p96 = scmp.eq.s32.totalorder %s34, 0
    %p97 = por %p95, %p96
    %p98 = scmp.ne.s32.totalorder %s86, %s87
    %p99 = scmp.eq.s32.totalorder %s35, 1
    %p100 = por %p98, %p99
    %p102 = scmp.ne.s32.totalorder %s87, %s101
    %p103 = scmp.eq.s32.totalorder %s35, 0
    %p104 = por %p102, %p103
    %s106 = sadd.s32 %s105, 1
    %p109 = scmp.eq.s32.totalorder %s29, 1
    %p110 = scmp.ne.s32.totalorder %s105, %s107
    %p111 = scmp.eq.s32.totalorder %s29, 0
    %p112 = por %p110, %p111
    %p113 = scmp.ne.s32.totalorder %s105, %s107
    %p114 = scmp.eq.s32.totalorder %s34, 1
    %p115 = por %p113, %p114
    %p116 = scmp.ne.s32.totalorder %s107, %s108
    %p117 = scmp.eq.s32.totalorder %s34, 0
    %p118 = por %p116, %p117
    %p119 = scmp.ne.s32.totalorder %s107, %s108
    %p120 = scmp.eq.s32.totalorder %s35, 1
    %p121 = por %p119, %p120
    %p123 = scmp.ne.s32.totalorder %s108, %s122
    %p124 = scmp.eq.s32.totalorder %s35, 0
    %p125 = por %p123, %p124
    %s127 = sadd.s32 %s126, 1
    %p130 = scmp.eq.s32.totalorder %s29, 1
    %p131 = scmp.ne.s32.totalorder %s126, %s128
    %p132 = scmp.eq.s32.totalorder %s29, 0
    %p133 = por %p131, %p132
    %p134 = scmp.ne.s32.totalorder %s126, %s128
    %p135 = scmp.eq.s32.totalorder %s34, 1
    %p136 = por %p134, %p135
    %p137 = scmp.ne.s32.totalorder %s128, %s129
    %p138 = scmp.eq.s32.totalorder %s34, 0
    %p139 = por %p137, %p138
    %p140 = scmp.ne.s32.totalorder %s128, %s129
    %p141 = scmp.eq.s32.totalorder %s35, 1
    %p142 = por %p140, %p141
    %p144 = scmp.ne.s32.totalorder %s129, %s143
    %p145 = scmp.eq.s32.totalorder %s35, 0
    %p146 = por %p144, %p145
    %s148 = sadd.s32 %s147, 1
    %p151 = scmp.eq.s32.totalorder %s29, 1
    %p152 = scmp.ne.s32.totalorder %s147, %s149
    %p153 = scmp.eq.s32.totalorder %s29, 0
    %p154 = por %p152, %p153
    %p155 = scmp.ne.s32.totalorder %s147, %s149
    %p156 = scmp.eq.s32.totalorder %s34, 1
    %p157 = por %p155, %p156
    %p158 = scmp.ne.s32.totalorder %s149, %s150
    %p159 = scmp.eq.s32.totalorder %s34, 0
    %p160 = por %p158, %p159
    %p161 = scmp.ne.s32.totalorder %s149, %s150
    %p162 = scmp.eq.s32.totalorder %s35, 1
    %p163 = por %p161, %p162
    %p165 = scmp.ne.s32.totalorder %s150, %s164
    %p166 = scmp.eq.s32.totalorder %s35, 0
    %p167 = por %p165, %p166
    %s169 = sadd.s32 %s168, 1
    %p172 = scmp.eq.s32.totalorder %s29, 1
    %p173 = scmp.ne.s32.totalorder %s168, %s170
    %p174 = scmp.eq.s32.totalorder %s29, 0
    %p175 = por %p173, %p174
    %p176 = scmp.ne.s32.totalorder %s168, %s170
    %p177 = scmp.eq.s32.totalorder %s34, 1
    %p178 = por %p176, %p177
    %p179 = scmp.ne.s32.totalorder %s170, %s171
    %p180 = scmp.eq.s32.totalorder %s34, 0
    %p181 = por %p179, %p180
    %p182 = scmp.ne.s32.totalorder %s170, %s171
    %p183 = scmp.eq.s32.totalorder %s35, 1
    %p184 = por %p182, %p183
    %p186 = scmp.ne.s32.totalorder %s171, %s185
    %p187 = scmp.eq.s32.totalorder %s35, 0
    %p188 = por %p186, %p187
    %s190 = sadd.s32 %s189, 1
    %p193 = scmp.eq.s32.totalorder %s29, 1
    %p194 = scmp.ne.s32.totalorder %s189, %s191
    %p195 = scmp.eq.s32.totalorder %s29, 0
    %p196 = por %p194, %p195
    %p197 = scmp.ne.s32.totalorder %s189, %s191
    %p198 = scmp.eq.s32.totalorder %s34, 1
    %p199 = por %p197, %p198
    %p200 = scmp.ne.s32.totalorder %s191, %s192
    %p201 = scmp.eq.s32.totalorder %s34, 0
    %p202 = por %p200, %p201
    %p203 = scmp.ne.s32.totalorder %s191, %s192
    %p204 = scmp.eq.s32.totalorder %s35, 1
    %p205 = por %p203, %p204
    %p207 = scmp.ne.s32.totalorder %s192, %s206
    %p208 = scmp.eq.s32.totalorder %s35, 0
    %p209 = por %p207, %p208
    %s211 = sadd.s32 %s210, 1
    %p214 = scmp.eq.s32.totalorder %s29, 1
    %p215 = scmp.ne.s32.totalorder %s210, %s212
    %p216 = scmp.eq.s32.totalorder %s29, 0
    %p217 = por %p215, %p216
    %p218 = scmp.ne.s32.totalorder %s210, %s212
    %p219 = scmp.eq.s32.totalorder %s34, 1
    %p220 = por %p218, %p219
    %p221 = scmp.ne.s32.totalorder %s212, %s213
    %p222 = scmp.eq.s32.totalorder %s34, 0
    %p223 = por %p221, %p222
    %p224 = scmp.ne.s32.totalorder %s212, %s213
    %p225 = scmp.eq.s32.totalorder %s35, 1
    %p226 = por %p224, %p225
    %p228 = scmp.ne.s32.totalorder %s213, %s227
    %p229 = scmp.eq.s32.totalorder %s35, 0
    %p230 = por %p228, %p229
    %s232 = sadd.s32 %s231, 1
    %p235 = scmp.eq.s32.totalorder %s29, 1
    %p236 = scmp.ne.s32.totalorder %s231, %s233
    %p237 = scmp.eq.s32.totalorder %s29, 0
    %p238 = por %p236, %p237
    %p239 = scmp.ne.s32.totalorder %s231, %s233
    %p240 = scmp.eq.s32.totalorder %s34, 1
    %p241 = por %p239, %p240
    %p242 = scmp.ne.s32.totalorder %s233, %s234
    %p243 = scmp.eq.s32.totalorder %s34, 0
    %p244 = por %p242, %p243
    %p245 = scmp.ne.s32.totalorder %s233, %s234
    %p246 = scmp.eq.s32.totalorder %s35, 1
    %p247 = por %p245, %p246
    %p249 = scmp.ne.s32.totalorder %s234, %s248
    %p250 = scmp.eq.s32.totalorder %s35, 0
    %p251 = por %p249, %p250
    %s253 = sadd.s32 %s252, 1
    %p256 = scmp.eq.s32.totalorder %s29, 1
    %p257 = scmp.ne.s32.totalorder %s252, %s254
    %p258 = scmp.eq.s32.totalorder %s29, 0
    %p259 = por %p257, %p258
    %p260 = scmp.ne.s32.totalorder %s252, %s254
    %p261 = scmp.eq.s32.totalorder %s34, 1
    %p262 = por %p260, %p261
    %p263 = scmp.ne.s32.totalorder %s254, %s255
    %p264 = scmp.eq.s32.totalorder %s34, 0
    %p265 = por %p263, %p264
    %p266 = scmp.ne.s32.totalorder %s254, %s255
    %p267 = scmp.eq.s32.totalorder %s35, 1
    %p268 = por %p266, %p267
    %p270 = scmp.ne.s32.totalorder %s255, %s269
    %p271 = scmp.eq.s32.totalorder %s35, 0
    %p272 = por %p270, %p271
    %s274 = sadd.s32 %s273, 1
    %p277 = scmp.eq.s32.totalorder %s29, 1
    %p278 = scmp.ne.s32.totalorder %s273, %s275
    %p279 = scmp.eq.s32.totalorder %s29, 0
    %p280 = por %p278, %p279
    %p281 = scmp.ne.s32.totalorder %s273, %s275
    %p282 = scmp.eq.s32.totalorder %s34, 1
    %p283 = por %p281, %p282
    %p284 = scmp.ne.s32.totalorder %s275, %s276
    %p285 = scmp.eq.s32.totalorder %s34, 0
    %p286 = por %p284, %p285
    %p287 = scmp.ne.s32.totalorder %s275, %s276
    %p288 = scmp.eq.s32.totalorder %s35, 1
    %p289 = por %p287, %p288
    %p291 = scmp.ne.s32.totalorder %s276, %s290
    %p292 = scmp.eq.s32.totalorder %s35, 0
    %p293 = por %p291, %p292
    %s295 = sadd.s32 %s294, 1
    %p298 = scmp.eq.s32.totalorder %s29, 1
    %p299 = scmp.ne.s32.totalorder %s294, %s296
    %p300 = scmp.eq.s32.totalorder %s29, 0
    %p301 = por %p299, %p300
    %p302 = scmp.ne.s32.totalorder %s294, %s296
    %p303 = scmp.eq.s32.totalorder %s34, 1
    %p304 = por %p302, %p303
    %p305 = scmp.ne.s32.totalorder %s296, %s297
    %p306 = scmp.eq.s32.totalorder %s34, 0
    %p307 = por %p305, %p306
    %p308 = scmp.ne.s32.totalorder %s296, %s297
    %p309 = scmp.eq.s32.totalorder %s35, 1
    %p310 = por %p308, %p309
    %p312 = scmp.ne.s32.totalorder %s297, %s311
    %p313 = scmp.eq.s32.totalorder %s35, 0
    %p314 = por %p312, %p313
    %s316 = sadd.s32 %s315, 1
    %p319 = scmp.eq.s32.totalorder %s29, 1
    %p320 = scmp.ne.s32.totalorder %s315, %s317
    %p321 = scmp.eq.s32.totalorder %s29, 0
    %p322 = por %p320, %p321
    %p323 = scmp.ne.s32.totalorder %s315, %s317
    %p324 = scmp.eq.s32.totalorder %s34, 1
    %p325 = por %p323, %p324
    %p326 = scmp.ne.s32.totalorder %s317, %s318
    %p327 = scmp.eq.s32.totalorder %s34, 0
    %p328 = por %p326, %p327
    %p329 = scmp.ne.s32.totalorder %s317, %s318
    %p330 = scmp.eq.s32.totalorder %s35, 1
    %p331 = por %p329, %p330
    %p333 = scmp.ne.s32.totalorder %s318, %s332
    %p334 = scmp.eq.s32.totalorder %s35, 0
    %p335 = por %p333, %p334
    %s337 = sadd.s32 %s336, 1
    %p340 = scmp.eq.s32.totalorder %s29, 1
    %p341 = scmp.ne.s32.totalorder %s336, %s338
    %p342 = scmp.eq.s32.totalorder %s29, 0
    %p343 = por %p341, %p342
    %p344 = scmp.ne.s32.totalorder %s336, %s338
    %p345 = scmp.eq.s32.totalorder %s34, 1
    %p346 = por %p344, %p345
    %p347 = scmp.ne.s32.totalorder %s338, %s339
    %p348 = scmp.eq.s32.totalorder %s34, 0
    %p349 = por %p347, %p348
    %p350 = scmp.ne.s32.totalorder %s338, %s339
    %p351 = scmp.eq.s32.totalorder %s35, 1
    %p352 = por %p350, %p351
    %p354 = scmp.ne.s32.totalorder %s339, %s353
    %p355 = scmp.eq.s32.totalorder %s35, 0
    %p356 = por %p354, %p355
    %s358 = sadd.s32 %s357, 1
    %p361 = scmp.eq.s32.totalorder %s29, 1
    %p362 = scmp.ne.s32.totalorder %s357, %s359
    %p363 = scmp.eq.s32.totalorder %s29, 0
    %p364 = por %p362, %p363
    %p365 = scmp.ne.s32.totalorder %s357, %s359
    %p366 = scmp.eq.s32.totalorder %s34, 1
    %p367 = por %p365, %p366
    %p368 = scmp.ne.s32.totalorder %s359, %s360
    %p369 = scmp.eq.s32.totalorder %s34, 0
    %p370 = por %p368, %p369
    %p371 = scmp.ne.s32.totalorder %s359, %s360
    %p372 = scmp.eq.s32.totalorder %s35, 1
    %p373 = por %p371, %p372
    %p375 = scmp.ne.s32.totalorder %s360, %s374
    %p376 = scmp.eq.s32.totalorder %s35, 0
    %p377 = por %p375, %p376
    %s378 = ssub.s32 %s29, %s36
    %p379 = scmp.eq.s32.totalorder %s378, 0
    %s381 = sadd.s32 %s380, 1
    %s382 = scalar_select %p379, %s380, %s381
    %p385 = pneg %p379
    %p386 = scmp.eq.s32.totalorder %s29, 1
    %p387 = por %p385, %p386
    %p388 = scmp.ne.s32.totalorder %s380, %s383
    %p389 = scmp.eq.s32.totalorder %s29, 0
    %p390 = por %p388, %p389
    %p391 = scmp.ne.s32.totalorder %s380, %s383
    %p392 = scmp.eq.s32.totalorder %s34, 1
    %p393 = por %p391, %p392
    %p394 = scmp.ne.s32.totalorder %s383, %s384
    %p395 = scmp.eq.s32.totalorder %s34, 0
    %p396 = por %p394, %p395
    %p397 = scmp.ne.s32.totalorder %s383, %s384
    %p398 = scmp.eq.s32.totalorder %s35, 1
    %p399 = por %p397, %p398
    %p401 = scmp.ne.s32.totalorder %s384, %s400
    %p402 = scmp.eq.s32.totalorder %s35, 0
    %p403 = por %p401, %p402
    %s404 = ssub.s32 %s29, %s36
    %p405 = scmp.eq.s32.totalorder %s404, 0
    %s407 = sadd.s32 %s406, 1
    %s408 = scalar_select %p405, %s406, %s407
    %p411 = pneg %p405
    %p412 = scmp.eq.s32.totalorder %s29, 1
    %p413 = por %p411, %p412
    %p414 = scmp.ne.s32.totalorder %s406, %s409
    %p415 = scmp.eq.s32.totalorder %s29, 0
    %p416 = por %p414, %p415
    %p417 = scmp.ne.s32.totalorder %s406, %s409
    %p418 = scmp.eq.s32.totalorder %s34, 1
    %p419 = por %p417, %p418
    %p420 = scmp.ne.s32.totalorder %s409, %s410
    %p421 = scmp.eq.s32.totalorder %s34, 0
    %p422 = por %p420, %p421
    %p423 = scmp.ne.s32.totalorder %s409, %s410
    %p424 = scmp.eq.s32.totalorder %s35, 1
    %p425 = por %p423, %p424
    %p427 = scmp.ne.s32.totalorder %s410, %s426
    %p428 = scmp.eq.s32.totalorder %s35, 0
    %p429 = por %p427, %p428
    %s430 = ssub.s32 %s29, %s36
    %p431 = scmp.eq.s32.totalorder %s430, 0
    %s433 = sadd.s32 %s432, 1
    %s434 = scalar_select %p431, %s432, %s433
    %p437 = pneg %p431
    %p438 = scmp.eq.s32.totalorder %s29, 1
    %p439 = por %p437, %p438
    %p440 = scmp.ne.s32.totalorder %s432, %s435
    %p441 = scmp.eq.s32.totalorder %s29, 0
    %p442 = por %p440, %p441
    %p443 = scmp.ne.s32.totalorder %s432, %s435
    %p444 = scmp.eq.s32.totalorder %s34, 1
    %p445 = por %p443, %p444
    %p446 = scmp.ne.s32.totalorder %s435, %s436
    %p447 = scmp.eq.s32.totalorder %s34, 0
    %p448 = por %p446, %p447
    %p449 = scmp.ne.s32.totalorder %s435, %s436
    %p450 = scmp.eq.s32.totalorder %s35, 1
    %p451 = por %p449, %p450
    %p453 = scmp.ne.s32.totalorder %s436, %s452
    %p454 = scmp.eq.s32.totalorder %s35, 0
    %p455 = por %p453, %p454
    %s456 = ssub.s32 %s29, %s36
    %p457 = scmp.eq.s32.totalorder %s456, 0
    %s459 = sadd.s32 %s458, 1
    %s460 = scalar_select %p457, %s458, %s459
    %p463 = pneg %p457
    %p464 = scmp.eq.s32.totalorder %s29, 1
    %p465 = por %p463, %p464
    %p466 = scmp.ne.s32.totalorder %s458, %s461
    %p467 = scmp.eq.s32.totalorder %s29, 0
    %p468 = por %p466, %p467
    %p469 = scmp.ne.s32.totalorder %s458, %s461
    %p470 = scmp.eq.s32.totalorder %s34, 1
    %p471 = por %p469, %p470
    %p472 = scmp.ne.s32.totalorder %s461, %s462
    %p473 = scmp.eq.s32.totalorder %s34, 0
    %p474 = por %p472, %p473
    %p475 = scmp.ne.s32.totalorder %s461, %s462
    %p476 = scmp.eq.s32.totalorder %s35, 1
    %p477 = por %p475, %p476
    %p479 = scmp.ne.s32.totalorder %s462, %s478
    %p480 = scmp.eq.s32.totalorder %s35, 0
    %p481 = por %p479, %p480
    %s482 = ssub.s32 %s29, %s36
    %p483 = scmp.eq.s32.totalorder %s482, 0
    %s485 = sadd.s32 %s484, 1
    %s486 = scalar_select %p483, %s484, %s485
    %p489 = pneg %p483
    %p490 = scmp.eq.s32.totalorder %s29, 1
    %p491 = por %p489, %p490
    %p492 = scmp.ne.s32.totalorder %s484, %s487
    %p493 = scmp.eq.s32.totalorder %s29, 0
    %p494 = por %p492, %p493
    %p495 = scmp.ne.s32.totalorder %s484, %s487
    %p496 = scmp.eq.s32.totalorder %s34, 1
    %p497 = por %p495, %p496
    %p498 = scmp.ne.s32.totalorder %s487, %s488
    %p499 = scmp.eq.s32.totalorder %s34, 0
    %p500 = por %p498, %p499
    %p501 = scmp.ne.s32.totalorder %s487, %s488
    %p502 = scmp.eq.s32.totalorder %s35, 1
    %p503 = por %p501, %p502
    %p505 = scmp.ne.s32.totalorder %s488, %s504
    %p506 = scmp.eq.s32.totalorder %s35, 0
    %p507 = por %p505, %p506
    %s508 = ssub.s32 %s29, %s36
    %p509 = scmp.eq.s32.totalorder %s508, 0
    %s511 = sadd.s32 %s510, 1
    %s512 = scalar_select %p509, %s510, %s511
    %p515 = pneg %p509
    %p516 = scmp.eq.s32.totalorder %s29, 1
    %p517 = por %p515, %p516
    %p518 = scmp.ne.s32.totalorder %s510, %s513
    %p519 = scmp.eq.s32.totalorder %s29, 0
    %p520 = por %p518, %p519
    %p521 = scmp.ne.s32.totalorder %s510, %s513
    %p522 = scmp.eq.s32.totalorder %s34, 1
    %p523 = por %p521, %p522
    %p524 = scmp.ne.s32.totalorder %s513, %s514
    %p525 = scmp.eq.s32.totalorder %s34, 0
    %p526 = por %p524, %p525
    %p527 = scmp.ne.s32.totalorder %s513, %s514
    %p528 = scmp.eq.s32.totalorder %s35, 1
    %p529 = por %p527, %p528
    %p531 = scmp.ne.s32.totalorder %s514, %s530
    %p532 = scmp.eq.s32.totalorder %s35, 0
    %p533 = por %p531, %p532
    %s534 = ssub.s32 %s29, %s36
    %p535 = scmp.eq.s32.totalorder %s534, 0
    %s537 = sadd.s32 %s536, 1
    %s538 = scalar_select %p535, %s536, %s537
    %p541 = pneg %p535
    %p542 = scmp.eq.s32.totalorder %s29, 1
    %p543 = por %p541, %p542
    %p544 = scmp.ne.s32.totalorder %s536, %s539
    %p545 = scmp.eq.s32.totalorder %s29, 0
    %p546 = por %p544, %p545
    %p547 = scmp.ne.s32.totalorder %s536, %s539
    %p548 = scmp.eq.s32.totalorder %s34, 1
    %p549 = por %p547, %p548
    %p550 = scmp.ne.s32.totalorder %s539, %s540
    %p551 = scmp.eq.s32.totalorder %s34, 0
    %p552 = por %p550, %p551
    %p553 = scmp.ne.s32.totalorder %s539, %s540
    %p554 = scmp.eq.s32.totalorder %s35, 1
    %p555 = por %p553, %p554
    %p557 = scmp.ne.s32.totalorder %s540, %s556
    %p558 = scmp.eq.s32.totalorder %s35, 0
    %p559 = por %p557, %p558
    %p560 = scmp.le.s32.totalorder 1, %s29
    %p561 = scmp.lt.s32.totalorder %s29, 3
    %p562 = pnand %p560, %p561
    %p563 = pneg %p562
    // Predicated region
    $region9: #{hpb_forward.3} parent=5 // pred_check
      _
    $region10: #{hpb_forward.3} parent=5 // pred_check_branch
      %565 = sbr.rel (%p562) target = $region12
    $region11: #{hpb_forward.3} parent=5 // pred_region
      %s566 = ssub.s32 %s29, 1
      // Predicated region
      $region13: #{hpb_forward.3} parent=11 // pred_check
        %p567 = pneg %p76
      $region14: #{hpb_forward.3} parent=11 // pred_check_branch
        %569 = sbr.rel (%p567) target = $region16
      $region15: #{hpb_forward.3} parent=11 // pred_region
        _
      $region16: #{hpb_forward.3} parent=11 // pred_fallthru
        _
      // Predicated region
      $region17: #{hpb_forward.3} parent=11 // pred_check
        %p570 = pneg %p97
      $region18: #{hpb_forward.3} parent=11 // pred_check_branch
        %572 = sbr.rel (%p570) target = $region20
      $region19: #{hpb_forward.3} parent=11 // pred_region
        _
      $region20: #{hpb_forward.3} parent=11 // pred_fallthru
        _
      // Predicated region
      $region21: #{hpb_forward.3} parent=11 // pred_check
        %p573 = pneg %p118
      $region22: #{hpb_forward.3} parent=11 // pred_check_branch
        %575 = sbr.rel (%p573) target = $region24
      $region23: #{hpb_forward.3} parent=11 // pred_region
        _
      $region24: #{hpb_forward.3} parent=11 // pred_fallthru
        _
      // Predicated region
      $region25: #{hpb_forward.3} parent=11 // pred_check
        %p576 = pneg %p139
      $region26: #{hpb_forward.3} parent=11 // pred_check_branch
        %578 = sbr.rel (%p576) target = $region28
      $region27: #{hpb_forward.3} parent=11 // pred_region
        _
      $region28: #{hpb_forward.3} parent=11 // pred_fallthru
        _
      // Predicated region
      $region29: #{hpb_forward.3} parent=11 // pred_check
        %p579 = pneg %p160
      $region30: #{hpb_forward.3} parent=11 // pred_check_branch
        %581 = sbr.rel (%p579) target = $region32
      $region31: #{hpb_forward.3} parent=11 // pred_region
        _
      $region32: #{hpb_forward.3} parent=11 // pred_fallthru
        _
      // Predicated region
      $region33: #{hpb_forward.3} parent=11 // pred_check
        %p582 = pneg %p181
      $region34: #{hpb_forward.3} parent=11 // pred_check_branch
        %584 = sbr.rel (%p582) target = $region36
      $region35: #{hpb_forward.3} parent=11 // pred_region
        _
      $region36: #{hpb_forward.3} parent=11 // pred_fallthru
        _
      // Predicated region
      $region37: #{hpb_forward.3} parent=11 // pred_check
        %p585 = pneg %p202
      $region38: #{hpb_forward.3} parent=11 // pred_check_branch
        %587 = sbr.rel (%p585) target = $region40
      $region39: #{hpb_forward.3} parent=11 // pred_region
        _
      $region40: #{hpb_forward.3} parent=11 // pred_fallthru
        _
      // Predicated region
      $region41: #{hpb_forward.3} parent=11 // pred_check
        %p588 = pneg %p223
      $region42: #{hpb_forward.3} parent=11 // pred_check_branch
        %590 = sbr.rel (%p588) target = $region44
      $region43: #{hpb_forward.3} parent=11 // pred_region
        _
      $region44: #{hpb_forward.3} parent=11 // pred_fallthru
        _
      // Predicated region
      $region45: #{hpb_forward.3} parent=11 // pred_check
        %p591 = pneg %p244
      $region46: #{hpb_forward.3} parent=11 // pred_check_branch
        %593 = sbr.rel (%p591) target = $region48
      $region47: #{hpb_forward.3} parent=11 // pred_region
        _
      $region48: #{hpb_forward.3} parent=11 // pred_fallthru
        _
      // Predicated region
      $region49: #{hpb_forward.3} parent=11 // pred_check
        %p594 = pneg %p265
      $region50: #{hpb_forward.3} parent=11 // pred_check_branch
        %596 = sbr.rel (%p594) target = $region52
      $region51: #{hpb_forward.3} parent=11 // pred_region
        _
      $region52: #{hpb_forward.3} parent=11 // pred_fallthru
        _
      // Predicated region
      $region53: #{hpb_forward.3} parent=11 // pred_check
        %p597 = pneg %p286
      $region54: #{hpb_forward.3} parent=11 // pred_check_branch
        %599 = sbr.rel (%p597) target = $region56
      $region55: #{hpb_forward.3} parent=11 // pred_region
        _
      $region56: #{hpb_forward.3} parent=11 // pred_fallthru
        _
      // Predicated region
      $region57: #{hpb_forward.3} parent=11 // pred_check
        %p600 = pneg %p307
      $region58: #{hpb_forward.3} parent=11 // pred_check_branch
        %602 = sbr.rel (%p600) target = $region60
      $region59: #{hpb_forward.3} parent=11 // pred_region
        _
      $region60: #{hpb_forward.3} parent=11 // pred_fallthru
        _
      // Predicated region
      $region61: #{hpb_forward.3} parent=11 // pred_check
        %p603 = pneg %p328
      $region62: #{hpb_forward.3} parent=11 // pred_check_branch
        %605 = sbr.rel (%p603) target = $region64
      $region63: #{hpb_forward.3} parent=11 // pred_region
        _
      $region64: #{hpb_forward.3} parent=11 // pred_fallthru
        _
      // Predicated region
      $region65: #{hpb_forward.3} parent=11 // pred_check
        %p606 = pneg %p349
      $region66: #{hpb_forward.3} parent=11 // pred_check_branch
        %608 = sbr.rel (%p606) target = $region68
      $region67: #{hpb_forward.3} parent=11 // pred_region
        _
      $region68: #{hpb_forward.3} parent=11 // pred_fallthru
        _
      // Predicated region
      $region69: #{hpb_forward.3} parent=11 // pred_check
        %p609 = pneg %p370
      $region70: #{hpb_forward.3} parent=11 // pred_check_branch
        %611 = sbr.rel (%p609) target = $region72
      $region71: #{hpb_forward.3} parent=11 // pred_region
        _
      $region72: #{hpb_forward.3} parent=11 // pred_fallthru
        _
    $region12: #{hpb_forward.3} parent=5 // pred_fallthru
      _
    %p612 = scmp.lt.s32.totalorder %s29, 2
    // Predicated region
    $region73: #{hpb_forward.3} parent=5 // pred_check
      %p613 = pneg %p612
    $region74: #{hpb_forward.3} parent=5 // pred_check_branch
      %615 = sbr.rel (%p613) target = $region76
    $region75: #{hpb_forward.3} parent=5 // pred_region
      // Predicated region
      $region77: #{hpb_forward.3} parent=75 // pred_check
        %p616 = pneg %p49
      $region78: #{hpb_forward.3} parent=75 // pred_check_branch
        %618 = sbr.rel (%p616) target = $region80
      $region79: #{hpb_forward.3} parent=75 // pred_region
        %p619 = scmp.lt.s32.totalorder %s29, 1
        %s620 = scalar_select %p619, %s29, 1
        %s621 = smul.addr %s620, 4
        %s622 = scalar_lea.vmem %s0, %s621
      $region80: #{hpb_forward.3} parent=75 // pred_fallthru
        _
    $region76: #{hpb_forward.3} parent=5 // pred_fallthru
      _
    %p623 = scmp.le.s32.totalorder 1, %s29
    %p624 = scmp.lt.s32.totalorder %s29, 3
    %p625 = pnand %p623, %p624
    %p626 = pneg %p625
    // Predicated region
    $region81: #{hpb_forward.3} parent=5 // pred_check
      _
    $region82: #{hpb_forward.3} parent=5 // pred_check_branch
      %628 = sbr.rel (%p625) target = $region84
    $region83: #{hpb_forward.3} parent=5 // pred_region
      %s629 = ssub.s32 %s29, 1
      %p630 = scmp.lt.s32.totalorder %s34, 1
      %s631 = scalar_select %p630, %s34, 1
      %s632 = smul.addr %s631, 4
      %s633 = scalar_lea.vmem %s0, %s632
      %p634 = pneg %p55
      %p635 = pneg %p52
      %p636 = pneg %p76
      %p637 = pneg %p73
      %p638 = pneg %p97
      %p639 = pneg %p94
      %p640 = pneg %p118
      %p641 = pneg %p115
      %p642 = pneg %p139
      %p643 = pneg %p136
      %p644 = pneg %p160
      %p645 = pneg %p157
      %p646 = pneg %p181
      %p647 = pneg %p178
      %p648 = pneg %p202
      %p649 = pneg %p199
      %p650 = pneg %p223
      %p651 = pneg %p220
      %p652 = pneg %p244
      %p653 = pneg %p241
      %p654 = pneg %p265
      %p655 = pneg %p262
      %p656 = pneg %p286
      %p657 = pneg %p283
      %p658 = pneg %p307
      %p659 = pneg %p304
      %p660 = pneg %p328
      %p661 = pneg %p325
      %p662 = pneg %p349
      %p663 = pneg %p346
      %p664 = pneg %p370
      %p665 = pneg %p367
      %p666 = pneg %p396
      %p667 = pneg %p393
      %p668 = scmp.lt.s32.totalorder %s34, 1
      %s669 = scalar_select %p668, %s34, 1
      %s670 = smul.addr %s669, 4
      %s671 = scalar_lea.vmem %s16, %s670
      %p672 = pneg %p422
      %p673 = pneg %p419
      %p674 = scmp.lt.s32.totalorder %s34, 1
      %s675 = scalar_select %p674, %s34, 1
      %s676 = smul.addr %s675, 4
      %s677 = scalar_lea.vmem %s17, %s676
      %p678 = pneg %p448
      %p679 = pneg %p445
      %p680 = scmp.lt.s32.totalorder %s34, 1
      %s681 = scalar_select %p680, %s34, 1
      %s682 = smul.addr %s681, 4
      %s683 = scalar_lea.vmem %s18, %s682
      %p684 = pneg %p474
      %p685 = pneg %p471
      %p686 = scmp.lt.s32.totalorder %s34, 1
      %s687 = scalar_select %p686, %s34, 1
      %s688 = smul.addr %s687, 4
      %s689 = scalar_lea.vmem %s19, %s688
      %p690 = pneg %p500
      %p691 = pneg %p497
      %p692 = scmp.lt.s32.totalorder %s34, 1
      %s693 = scalar_select %p692, %s34, 1
      %s694 = smul.addr %s693, 4
      %s695 = scalar_lea.vmem %s20, %s694
      %p696 = pneg %p526
      %p697 = pneg %p523
      %p698 = scmp.lt.s32.totalorder %s34, 1
      %s699 = scalar_select %p698, %s34, 1
      %s700 = smul.addr %s699, 4
      %s701 = scalar_lea.vmem %s21, %s700
      %p702 = pneg %p552
      %p703 = pneg %p549
      %p704 = scmp.lt.s32.totalorder %s34, 1
      %s705 = scalar_select %p704, %s34, 1
      %s706 = smul.addr %s705, 4
      %s707 = scalar_lea.vmem %s22, %s706
      %p708 = scmp.lt.s32.totalorder %s34, 1
      %s709 = scalar_select %p708, %s34, 1
      %s710 = smul.addr %s709, 4
      %s711 = scalar_lea.vmem %s0, %s710
      %p712 = scmp.lt.s32.totalorder %s34, 1
      %s713 = scalar_select %p712, %s34, 1
      %s714 = smul.addr %s713, 4
      %s715 = scalar_lea.vmem %s16, %s714
      %p716 = scmp.lt.s32.totalorder %s34, 1
      %s717 = scalar_select %p716, %s34, 1
      %s718 = smul.addr %s717, 4
      %s719 = scalar_lea.vmem %s17, %s718
      %p720 = scmp.lt.s32.totalorder %s34, 1
      %s721 = scalar_select %p720, %s34, 1
      %s722 = smul.addr %s721, 4
      %s723 = scalar_lea.vmem %s18, %s722
      %p724 = scmp.lt.s32.totalorder %s34, 1
      %s725 = scalar_select %p724, %s34, 1
      %s726 = smul.addr %s725, 4
      %s727 = scalar_lea.vmem %s19, %s726
      %p728 = scmp.lt.s32.totalorder %s34, 1
      %s729 = scalar_select %p728, %s34, 1
      %s730 = smul.addr %s729, 4
      %s731 = scalar_lea.vmem %s20, %s730
      %p732 = scmp.lt.s32.totalorder %s34, 1
      %s733 = scalar_select %p732, %s34, 1
      %s734 = smul.addr %s733, 4
      %s735 = scalar_lea.vmem %s21, %s734
      %p736 = scmp.lt.s32.totalorder %s34, 1
      %s737 = scalar_select %p736, %s34, 1
      %s738 = smul.addr %s737, 4
      %s739 = scalar_lea.vmem %s22, %s738
      %v740 = vld [vmem:[%s711] sm:$0xf]
      %vm741 = vcmask 519168
      %v742 = vsel %vm741, %v740, 0.0
      %743 = vadd.xlane.f32.xlu0 %v742
      %v744 = vpop.xlane.xlu0 %743
      %v745 = vrcp.pop 64.0
      %v746 = vmul.f32 %v744, %v745
      %v747 = vmul.f32 %v746, %v740
      %v748 = vld [vmem:[%s1] sm:$0xf]
      %v749 = vld [vmem:[%s2] sm:$0xf]
      %751 = vset.pattern.permute.xlu0 0
      %752 = vperm.xlu0 %751, %v749
      %v753 = vpop.permute.xlu0 %752
      %vm755 = vcmask 31744
      %v757 = vsel %vm755, %v748, 0
      %vm759 = vcmask 1043456
      %v761 = vsel %vm759, %v747, 0
      %763 = vmatprep.subr.mxu0 0.0
      %764 = vmatpush1.msra.mxu0 %v761
      %765 = vmatprep.subr.mxu0 0.0
      %766 = vmatpush1.msra.mxu0 0.0
      %767 = vmatprep.subr.mxu0 0.0
      %768 = vmatpush1.msra.mxu0 0.0
      %769 = vmatprep.subr.mxu0 0.0
      %770 = vmatpush1.msra.mxu0 0.0
      %771 = vmatprep.subr.mxu0 0.0
      %772 = vmatpush1.msra.mxu0 0.0
      %773 = vmatprep.subr.mxu0 0.0
      %774 = vmatpush1.msra.mxu0 0.0
      %775 = vmatprep.subr.mxu0 0.0
      %776 = vmatpush1.msra.mxu0 0.0
      %777 = vmatprep.subr.mxu0 0.0
      %778 = vmatpush1.msra.mxu0 0.0
      %779 = vmatprep.subr.mxu0 0.0
      %780 = vmatpush1.msra.mxu0 0.0
      %781 = vmatprep.subr.mxu0 0.0
      %782 = vmatpush1.msra.mxu0 0.0
      %783 = vmatprep.subr.mxu0 0.0
      %784 = vmatpush1.msra.mxu0 0.0
      %785 = vmatprep.subr.mxu0 0.0
      %786 = vmatpush1.msra.mxu0 0.0
      %787 = vmatprep.subr.mxu0 0.0
      %788 = vmatpush1.msra.mxu0 0.0
      %789 = vmatprep.subr.mxu0 0.0
      %790 = vmatpush1.msra.mxu0 0.0
      %791 = vmatprep.subr.mxu0 0.0
      %792 = vmatpush1.msra.mxu0 0.0
      %793 = vmatprep.subr.mxu0 0.0
      %794 = vmatpush1.msra.mxu0 0.0
      %795 = vmatprep.subr.mxu0 0.0
      %796 = vmatpush1.msra.mxu0 0.0
      %797 = vmatprep.subr.mxu0 0.0
      %798 = vmatpush1.msra.mxu0 0.0
      %799 = vmatprep.subr.mxu0 0.0
      %800 = vmatpush1.msra.mxu0 0.0
      %801 = vmatprep.subr.mxu0 0.0
      %802 = vmatpush1.msra.mxu0 0.0
      %803 = vmatprep.subr.mxu0 0.0
      %804 = vmatpush1.msra.mxu0 0.0
      %805 = vmatprep.subr.mxu0 0.0
      %806 = vmatpush1.msra.mxu0 0.0
      %807 = vmatprep.subr.mxu0 0.0
      %808 = vmatpush1.msra.mxu0 0.0
      %809 = vmatprep.subr.mxu0 0.0
      %810 = vmatpush1.msra.mxu0 0.0
      %811 = vmatprep.subr.mxu0 0.0
      %812 = vmatpush1.msra.mxu0 0.0
      %813 = vmatprep.subr.mxu0 0.0
      %814 = vmatpush1.msra.mxu0 0.0
      %815 = vmatprep.subr.mxu0 0.0
      %816 = vmatpush1.msra.mxu0 0.0
      %817 = vmatprep.subr.mxu0 0.0
      %818 = vmatpush1.msra.mxu0 0.0
      %819 = vmatprep.subr.mxu0 0.0
      %820 = vmatpush1.msra.mxu0 0.0
      %821 = vmatprep.subr.mxu0 0.0
      %822 = vmatpush1.msra.mxu0 0.0
      %823 = vmatprep.subr.mxu0 0.0
      %824 = vmatpush1.msra.mxu0 0.0
      %825 = vmatprep.subr.mxu0 0.0
      %826 = vmatpush1.msra.mxu0 0.0
      %827 = vmatprep.mubr.f32.mxu0 0.0
      %828 = vmatmul.mubr.f32.gmra.mrb[0].mxu0 %v757
      %v829 = vpop.f32.mrb[0].mxu0
      %v830 = vadd.f32 %v753, %v829
      %v831 = vpop.f32.mrb[0].mxu0
      %832 = vdwg.mxu0
      %v833 = vld [vmem:[%s3] sm:$0xf]
      %v834 = vld [vmem:[%s4] sm:$0xf]
      %836 = vset.pattern.permute.xlu0 0
      %837 = vperm.xlu0 %836, %v834
      %v838 = vpop.permute.xlu0 %837
      %v841 = vsel %vm755, %v833, 0
      %843 = vmatprep.subr.mxu0 0.0
      %844 = vmatpush1.msra.mxu0 %v761
      %845 = vmatprep.subr.mxu0 0.0
      %846 = vmatpush1.msra.mxu0 0.0
      %847 = vmatprep.subr.mxu0 0.0
      %848 = vmatpush1.msra.mxu0 0.0
      %849 = vmatprep.subr.mxu0 0.0
      %850 = vmatpush1.msra.mxu0 0.0
      %851 = vmatprep.subr.mxu0 0.0
      %852 = vmatpush1.msra.mxu0 0.0
      %853 = vmatprep.subr.mxu0 0.0
      %854 = vmatpush1.msra.mxu0 0.0
      %855 = vmatprep.subr.mxu0 0.0
      %856 = vmatpush1.msra.mxu0 0.0
      %857 = vmatprep.subr.mxu0 0.0
      %858 = vmatpush1.msra.mxu0 0.0
      %859 = vmatprep.subr.mxu0 0.0
      %860 = vmatpush1.msra.mxu0 0.0
      %861 = vmatprep.subr.mxu0 0.0
      %862 = vmatpush1.msra.mxu0 0.0
      %863 = vmatprep.subr.mxu0 0.0
      %864 = vmatpush1.msra.mxu0 0.0
      %865 = vmatprep.subr.mxu0 0.0
      %866 = vmatpush1.msra.mxu0 0.0
      %867 = vmatprep.subr.mxu0 0.0
      %868 = vmatpush1.msra.mxu0 0.0
      %869 = vmatprep.subr.mxu0 0.0
      %870 = vmatpush1.msra.mxu0 0.0
      %871 = vmatprep.subr.mxu0 0.0
      %872 = vmatpush1.msra.mxu0 0.0
      %873 = vmatprep.subr.mxu0 0.0
      %874 = vmatpush1.msra.mxu0 0.0
      %875 = vmatprep.subr.mxu0 0.0
      %876 = vmatpush1.msra.mxu0 0.0
      %877 = vmatprep.subr.mxu0 0.0
      %878 = vmatpush1.msra.mxu0 0.0
      %879 = vmatprep.subr.mxu0 0.0
      %880 = vmatpush1.msra.mxu0 0.0
      %881 = vmatprep.subr.mxu0 0.0
      %882 = vmatpush1.msra.mxu0 0.0
      %883 = vmatprep.subr.mxu0 0.0
      %884 = vmatpush1.msra.mxu0 0.0
      %885 = vmatprep.subr.mxu0 0.0
      %886 = vmatpush1.msra.mxu0 0.0
      %887 = vmatprep.subr.mxu0 0.0
      %888 = vmatpush1.msra.mxu0 0.0
      %889 = vmatprep.subr.mxu0 0.0
      %890 = vmatpush1.msra.mxu0 0.0
      %891 = vmatprep.subr.mxu0 0.0
      %892 = vmatpush1.msra.mxu0 0.0
      %893 = vmatprep.subr.mxu0 0.0
      %894 = vmatpush1.msra.mxu0 0.0
      %895 = vmatprep.subr.mxu0 0.0
      %896 = vmatpush1.msra.mxu0 0.0
      %897 = vmatprep.subr.mxu0 0.0
      %898 = vmatpush1.msra.mxu0 0.0
      %899 = vmatprep.subr.mxu0 0.0
      %900 = vmatpush1.msra.mxu0 0.0
      %901 = vmatprep.subr.mxu0 0.0
      %902 = vmatpush1.msra.mxu0 0.0
      %903 = vmatprep.subr.mxu0 0.0
      %904 = vmatpush1.msra.mxu0 0.0
      %905 = vmatprep.subr.mxu0 0.0
      %906 = vmatpush1.msra.mxu0 0.0
      %907 = vmatprep.mubr.f32.mxu0 0.0
      %908 = vmatmul.mubr.f32.gmra.mrb[0].mxu0 %v841
      %v909 = vpop.f32.mrb[0].mxu0
      %v910 = vadd.f32 %v838, %v909
      %v911 = vpop.f32.mrb[0].mxu0
      %912 = vdwg.mxu0
      %v913 = vxor.u32 %v830, 2147483648
      %v914 = vmul.f32 %v913, 1.442695
      %v915 = vpow.pop %v914
      %v916 = vadd.f32 %v915, 1.0
      %v917 = vrcp.pop %v916
      %v918 = vmul.f32 1.0, %v917
      %v919 = vmul.f32 %v918, %v910
      %v920 = vadd.f32 %v919, %v747
      %v921 = vld [vmem:[%s5] sm:$0xf]
      %v922 = vld [vmem:[%s6] sm:$0xf]
      %924 = vset.pattern.permute.xlu0 0
      %925 = vperm.xlu0 %924, %v922
      %v926 = vpop.permute.xlu0 %925
      %v929 = vsel %vm755, %v921, 0
      %v932 = vsel %vm759, %v920, 0
      %934 = vmatprep.subr.mxu0 0.0
      %935 = vmatpush1.msra.mxu0 %v932
      %936 = vmatprep.subr.mxu0 0.0
      %937 = vmatpush1.msra.mxu0 0.0
      %938 = vmatprep.subr.mxu0 0.0
      %939 = vmatpush1.msra.mxu0 0.0
      %940 = vmatprep.subr.mxu0 0.0
      %941 = vmatpush1.msra.mxu0 0.0
      %942 = vmatprep.subr.mxu0 0.0
      %943 = vmatpush1.msra.mxu0 0.0
      %944 = vmatprep.subr.mxu0 0.0
      %945 = vmatpush1.msra.mxu0 0.0
      %946 = vmatprep.subr.mxu0 0.0
      %947 = vmatpush1.msra.mxu0 0.0
      %948 = vmatprep.subr.mxu0 0.0
      %949 = vmatpush1.msra.mxu0 0.0
      %950 = vmatprep.subr.mxu0 0.0
      %951 = vmatpush1.msra.mxu0 0.0
      %952 = vmatprep.subr.mxu0 0.0
      %953 = vmatpush1.msra.mxu0 0.0
      %954 = vmatprep.subr.mxu0 0.0
      %955 = vmatpush1.msra.mxu0 0.0
      %956 = vmatprep.subr.mxu0 0.0
      %957 = vmatpush1.msra.mxu0 0.0
      %958 = vmatprep.subr.mxu0 0.0
      %959 = vmatpush1.msra.mxu0 0.0
      %960 = vmatprep.subr.mxu0 0.0
      %961 = vmatpush1.msra.mxu0 0.0
      %962 = vmatprep.subr.mxu0 0.0
      %963 = vmatpush1.msra.mxu0 0.0
      %964 = vmatprep.subr.mxu0 0.0
      %965 = vmatpush1.msra.mxu0 0.0
      %966 = vmatprep.subr.mxu0 0.0
      %967 = vmatpush1.msra.mxu0 0.0
      %968 = vmatprep.subr.mxu0 0.0
      %969 = vmatpush1.msra.mxu0 0.0
      %970 = vmatprep.subr.mxu0 0.0
      %971 = vmatpush1.msra.mxu0 0.0
      %972 = vmatprep.subr.mxu0 0.0
      %973 = vmatpush1.msra.mxu0 0.0
      %974 = vmatprep.subr.mxu0 0.0
      %975 = vmatpush1.msra.mxu0 0.0
      %976 = vmatprep.subr.mxu0 0.0
      %977 = vmatpush1.msra.mxu0 0.0
      %978 = vmatprep.subr.mxu0 0.0
      %979 = vmatpush1.msra.mxu0 0.0
      %980 = vmatprep.subr.mxu0 0.0
      %981 = vmatpush1.msra.mxu0 0.0
      %982 = vmatprep.subr.mxu0 0.0
      %983 = vmatpush1.msra.mxu0 0.0
      %984 = vmatprep.subr.mxu0 0.0
      %985 = vmatpush1.msra.mxu0 0.0
      %986 = vmatprep.subr.mxu0 0.0
      %987 = vmatpush1.msra.mxu0 0.0
      %988 = vmatprep.subr.mxu0 0.0
      %989 = vmatpush1.msra.mxu0 0.0
      %990 = vmatprep.subr.mxu0 0.0
      %991 = vmatpush1.msra.mxu0 0.0
      %992 = vmatprep.subr.mxu0 0.0
      %993 = vmatpush1.msra.mxu0 0.0
      %994 = vmatprep.subr.mxu0 0.0
      %995 = vmatpush1.msra.mxu0 0.0
      %996 = vmatprep.subr.mxu0 0.0
      %997 = vmatpush1.msra.mxu0 0.0
      %998 = vmatprep.mubr.f32.mxu0 0.0
      %999 = vmatmul.mubr.f32.gmra.mrb[0].mxu0 %v929
      %v1000 = vpop.f32.mrb[0].mxu0
      %v1001 = vadd.f32 %v926, %v1000
      %v1002 = vpop.f32.mrb[0].mxu0
      %1003 = vdwg.mxu0
      %1004 = vst.msk [vmem:[%s715] sm:$0xf] %vm741, %v1001
      %1006 = vrot.lane.b32.xlu0 %v740, 16
      %v1007 = vpop.permute.xlu0 %1006
      %vm1009 = vcmask 130048
      %v1010 = vsel %vm1009, 0.0, %v1007
      %v1011 = vld [vmem:[%s7] sm:$0xf]
      %1013 = vset.pattern.permute.xlu0 0
      %1014 = vperm.xlu0 %1013, %v1011
      %v1015 = vpop.permute.xlu0 %1014
      %v1017 = vmul.f32 %v1010, %v1015
      %1018 = vrot.lane.b32.xlu0 %v740, 8
      %v1019 = vpop.permute.xlu0 %1018
      %vm1021 = vcmask 64512
      %v1022 = vsel %vm1021, 0.0, %v1019
      %s1023 = scalar_lea.vmem %s7, 4
      %v1024 = vld [vmem:[%s1023] sm:$0xf]
      %1026 = vset.pattern.permute.xlu0 0
      %1027 = vperm.xlu0 %1026, %v1024
      %v1028 = vpop.permute.xlu0 %1027
      %v1030 = vmul.f32 %v1022, %v1028
      %v1031 = vadd.f32 %v1017, %v1030
      %s1032 = scalar_lea.vmem %s7, 8
      %v1033 = vld [vmem:[%s1032] sm:$0xf]
      %1035 = vset.pattern.permute.xlu0 0
      %1036 = vperm.xlu0 %1035, %v1033
      %v1037 = vpop.permute.xlu0 %1036
      %v1039 = vmul.f32 %v740, %v1037
      %v1040 = vadd.f32 %v1031, %v1039
      %1041 = vrot.lane.b32.xlu0 %v740, 120
      %v1042 = vpop.permute.xlu0 %1041
      %vm1044 = vcmask 457728
      %v1045 = vsel %vm1044, %v1042, 0.0
      %s1046 = scalar_lea.vmem %s7, 12
      %v1047 = vld [vmem:[%s1046] sm:$0xf]
      %1049 = vset.pattern.permute.xlu0 0
      %1050 = vperm.xlu0 %1049, %v1047
      %v1051 = vpop.permute.xlu0 %1050
      %v1053 = vmul.f32 %v1045, %v1051
      %v1054 = vadd.f32 %v1040, %v1053
      %1055 = vrot.lane.b32.xlu0 %v740, 112
      %v1056 = vpop.permute.xlu0 %1055
      %vm1058 = vcmask 392192
      %v1059 = vsel %vm1058, %v1056, 0.0
      %s1060 = scalar_lea.vmem %s7, 16
      %v1061 = vld [vmem:[%s1060] sm:$0xf]
      %1063 = vset.pattern.permute.xlu0 0
      %1064 = vperm.xlu0 %1063, %v1061
      %v1065 = vpop.permute.xlu0 %1064
      %v1067 = vmul.f32 %v1059, %v1065
      %v1068 = vadd.f32 %v1054, %v1067
      %v1069 = vld [vmem:[%s8] sm:$0xf]
      %1071 = vset.pattern.permute.xlu0 0
      %1072 = vperm.xlu0 %1071, %v1069
      %v1073 = vpop.permute.xlu0 %1072
      %v1075 = vadd.f32 %v1068, %v1073
      %v1076 = vmul.f32 %v1075, 0.5
      %v1077 = vmul.f32 %v1075, 0.70710677
      %v1078 = vand.u32 2147483647, %v1077
      %v1079 = vmul.f32 %v1078, 0.3275911
      %v1080 = vadd.f32 %v1079, 1.0
      %v1081 = vrcp.pop %v1080
      %v1082 = vmul.f32 1.0, %v1081
      %v1083 = vmul.f32 %v1082, 1.0614054
      %v1084 = vadd.f32 %v1083, -1.4531521
      %v1085 = vmul.f32 %v1084, %v1082
      %v1086 = vadd.f32 %v1085, 1.4214138
      %v1087 = vmul.f32 %v1086, %v1082
      %v1088 = vadd.f32 %v1087, -0.28449672
      %v1089 = vmul.f32 %v1088, %v1082
      %v1090 = vadd.f32 %v1089, 0.2548296
      %v1091 = vmul.f32 %v1090, %v1082
      %v1092 = vsub.f32 0.0, %v1078
      %v1093 = vmul.f32 %v1092, %v1078
      %v1094 = vmul.f32 %v1093, 1.442695
      %v1095 = vpow.pop %v1094
      %v1096 = vmul.f32 %v1091, %v1095
      %v1097 = vsub.f32 1.0, %v1096
      %vm1098 = vcmp.ge.f32.partialorder %v1077, 0.0
      %v1099 = vsub.f32 0.0, %v1097
      %v1100 = vsel %vm1098, %v1097, %v1099
      %v1101 = vadd.f32 %v1100, 1.0
      %v1102 = vmul.f32 %v1076, %v1101
      %v1103 = vld [vmem:[%s9] sm:$0xf]
      %v1104 = vld [vmem:[%s10] sm:$0xf]
      %1106 = vset.pattern.permute.xlu0 0
      %1107 = vperm.xlu0 %1106, %v1104
      %v1108 = vpop.permute.xlu0 %1107
      %v1111 = vsel %vm755, %v1103, 0
      %v1114 = vsel %vm759, %v1102, 0
      %1116 = vmatprep.subr.mxu0 0.0
      %1117 = vmatpush1.msra.mxu0 %v1114
      %1118 = vmatprep.subr.mxu0 0.0
      %1119 = vmatpush1.msra.mxu0 0.0
      %1120 = vmatprep.subr.mxu0 0.0
      %1121 = vmatpush1.msra.mxu0 0.0
      %1122 = vmatprep.subr.mxu0 0.0
      %1123 = vmatpush1.msra.mxu0 0.0
      %1124 = vmatprep.subr.mxu0 0.0
      %1125 = vmatpush1.msra.mxu0 0.0
      %1126 = vmatprep.subr.mxu0 0.0
      %1127 = vmatpush1.msra.mxu0 0.0
      %1128 = vmatprep.subr.mxu0 0.0
      %1129 = vmatpush1.msra.mxu0 0.0
      %1130 = vmatprep.subr.mxu0 0.0
      %1131 = vmatpush1.msra.mxu0 0.0
      %1132 = vmatprep.subr.mxu0 0.0
      %1133 = vmatpush1.msra.mxu0 0.0
      %1134 = vmatprep.subr.mxu0 0.0
      %1135 = vmatpush1.msra.mxu0 0.0
      %1136 = vmatprep.subr.mxu0 0.0
      %1137 = vmatpush1.msra.mxu0 0.0
      %1138 = vmatprep.subr.mxu0 0.0
      %1139 = vmatpush1.msra.mxu0 0.0
      %1140 = vmatprep.subr.mxu0 0.0
      %1141 = vmatpush1.msra.mxu0 0.0
      %1142 = vmatprep.subr.mxu0 0.0
      %1143 = vmatpush1.msra.mxu0 0.0
      %1144 = vmatprep.subr.mxu0 0.0
      %1145 = vmatpush1.msra.mxu0 0.0
      %1146 = vmatprep.subr.mxu0 0.0
      %1147 = vmatpush1.msra.mxu0 0.0
      %1148 = vmatprep.subr.mxu0 0.0
      %1149 = vmatpush1.msra.mxu0 0.0
      %1150 = vmatprep.subr.mxu0 0.0
      %1151 = vmatpush1.msra.mxu0 0.0
      %1152 = vmatprep.subr.mxu0 0.0
      %1153 = vmatpush1.msra.mxu0 0.0
      %1154 = vmatprep.subr.mxu0 0.0
      %1155 = vmatpush1.msra.mxu0 0.0
      %1156 = vmatprep.subr.mxu0 0.0
      %1157 = vmatpush1.msra.mxu0 0.0
      %1158 = vmatprep.subr.mxu0 0.0
      %1159 = vmatpush1.msra.mxu0 0.0
      %1160 = vmatprep.subr.mxu0 0.0
      %1161 = vmatpush1.msra.mxu0 0.0
      %1162 = vmatprep.subr.mxu0 0.0
      %1163 = vmatpush1.msra.mxu0 0.0
      %1164 = vmatprep.subr.mxu0 0.0
      %1165 = vmatpush1.msra.mxu0 0.0
      %1166 = vmatprep.subr.mxu0 0.0
      %1167 = vmatpush1.msra.mxu0 0.0
      %1168 = vmatprep.subr.mxu0 0.0
      %1169 = vmatpush1.msra.mxu0 0.0
      %1170 = vmatprep.subr.mxu0 0.0
      %1171 = vmatpush1.msra.mxu0 0.0
      %1172 = vmatprep.subr.mxu0 0.0
      %1173 = vmatpush1.msra.mxu0 0.0
      %1174 = vmatprep.subr.mxu0 0.0
      %1175 = vmatpush1.msra.mxu0 0.0
      %1176 = vmatprep.subr.mxu0 0.0
      %1177 = vmatpush1.msra.mxu0 0.0
      %1178 = vmatprep.subr.mxu0 0.0
      %1179 = vmatpush1.msra.mxu0 0.0
      %1180 = vmatprep.mubr.f32.mxu0 0.0
      %1181 = vmatmul.mubr.f32.gmra.mrb[0].mxu0 %v1111
      %v1182 = vpop.f32.mrb[0].mxu0
      %v1183 = vadd.f32 %v1108, %v1182
      %v1184 = vpop.f32.mrb[0].mxu0
      %1185 = vdwg.mxu0
      %1186 = vst.msk [vmem:[%s719] sm:$0xf] %vm741, %v1183
      %v1187 = vsel %vm741, %v1183, 0.0
      %1188 = vadd.xlane.f32.xlu0 %v1187
      %v1189 = vpop.xlane.xlu0 %1188
      %v1190 = vmul.f32 %v1189, %v745
      %v1191 = vsub.f32 %v1183, %v1190
      %v1192 = vmul.f32 %v1191, %v1191
      %v1193 = vsel %vm741, %v1192, 0.0
      %1194 = vadd.xlane.f32.xlu0 %v1193
      %v1195 = vpop.xlane.xlu0 %1194
      %vm1196 = vcmask 3072
      %1197 = vst.msk [vmem:[%s727] sm:$0xf] %vm1196, %v1190
      %1198 = vst.msk [vmem:[%s731] sm:$0xf] %vm1196, %v1195
      %1199 = vrot.lane.b32.xlu0 %v740, 2
      %v1200 = vpop.permute.xlu0 %1199
      %vm1202 = vcmask 15360
      %v1203 = vsel %vm1202, 0.0, %v1200
      %v1204 = vld [vmem:[%s13] sm:$0x1]
      %v1206 = vlaneseq
      %v1207 = vshrl.u32 %v1206, 7
      %v1208 = vsub.s32 0, %v1207
      %v1209 = vrot.slane %v1204, %v1208
      %v1211 = vmul.f32 %v1203, %v1209
      %v1212 = vld [vmem:[%s11] sm:$0xf]
      %1214 = vset.pattern.permute.xlu0 0
      %1215 = vperm.xlu0 %1214, %v1212
      %v1216 = vpop.permute.xlu0 %1215
      %v1218 = vmul.f32 %v1211, %v1216
      %1219 = vrot.lane.b32.xlu0 %v740, 1
      %v1220 = vpop.permute.xlu0 %1219
      %vm1222 = vcmask 7168
      %v1223 = vsel %vm1222, 0.0, %v1220
      %s1224 = scalar_lea.vmem %s13, 1
      %v1225 = vld [vmem:[%s1224] sm:$0x1]
      %v1227 = vlaneseq
      %v1228 = vshrl.u32 %v1227, 7
      %v1229 = vsub.s32 0, %v1228
      %v1230 = vrot.slane %v1225, %v1229
      %v1232 = vmul.f32 %v1223, %v1230
      %s1233 = scalar_lea.vmem %s11, 4
      %v1234 = vld [vmem:[%s1233] sm:$0xf]
      %1236 = vset.pattern.permute.xlu0 0
      %1237 = vperm.xlu0 %1236, %v1234
      %v1238 = vpop.permute.xlu0 %1237
      %v1240 = vmul.f32 %v1232, %v1238
      %v1241 = vadd.f32 %v1218, %v1240
      %s1242 = scalar_lea.vmem %s13, 2
      %v1243 = vld [vmem:[%s1242] sm:$0x1]
      %v1245 = vlaneseq
      %v1246 = vshrl.u32 %v1245, 7
      %v1247 = vsub.s32 0, %v1246
      %v1248 = vrot.slane %v1243, %v1247
      %v1250 = vmul.f32 %v740, %v1248
      %s1251 = scalar_lea.vmem %s11, 8
      %v1252 = vld [vmem:[%s1251] sm:$0xf]
      %1254 = vset.pattern.permute.xlu0 0
      %1255 = vperm.xlu0 %1254, %v1252
      %v1256 = vpop.permute.xlu0 %1255
      %v1258 = vmul.f32 %v1250, %v1256
      %v1259 = vadd.f32 %v1241, %v1258
      %1260 = vrot.lane.b32.xlu0 %v740, 127
      %v1261 = vpop.permute.xlu0 %1260
      %vm1263 = vcmask 515072
      %v1264 = vsel %vm1263, %v1261, 0.0
      %s1265 = scalar_lea.vmem %s13, 3
      %v1266 = vld [vmem:[%s1265] sm:$0x1]
      %v1268 = vlaneseq
      %v1269 = vshrl.u32 %v1268, 7
      %v1270 = vsub.s32 0, %v1269
      %v1271 = vrot.slane %v1266, %v1270
      %v1273 = vmul.f32 %v1264, %v1271
      %s1274 = scalar_lea.vmem %s11, 12
      %v1275 = vld [vmem:[%s1274] sm:$0xf]
      %1277 = vset.pattern.permute.xlu0 0
      %1278 = vperm.xlu0 %1277, %v1275
      %v1279 = vpop.permute.xlu0 %1278
      %v1281 = vmul.f32 %v1273, %v1279
      %v1282 = vadd.f32 %v1259, %v1281
      %1283 = vrot.lane.b32.xlu0 %v740, 126
      %v1284 = vpop.permute.xlu0 %1283
      %vm1286 = vcmask 506880
      %v1287 = vsel %vm1286, %v1284, 0.0
      %s1288 = scalar_lea.vmem %s13, 4
      %v1289 = vld [vmem:[%s1288] sm:$0x1]
      %v1291 = vlaneseq
      %v1292 = vshrl.u32 %v1291, 7
      %v1293 = vsub.s32 0, %v1292
      %v1294 = vrot.slane %v1289, %v1293
      %v1296 = vmul.f32 %v1287, %v1294
      %s1297 = scalar_lea.vmem %s11, 16
      %v1298 = vld [vmem:[%s1297] sm:$0xf]
      %1300 = vset.pattern.permute.xlu0 0
      %1301 = vperm.xlu0 %1300, %v1298
      %v1302 = vpop.permute.xlu0 %1301
      %v1304 = vmul.f32 %v1296, %v1302
      %v1305 = vadd.f32 %v1282, %v1304
      %v1306 = vld [vmem:[%s12] sm:$0xf]
      %1308 = vset.pattern.permute.xlu0 0
      %1309 = vperm.xlu0 %1308, %v1306
      %v1310 = vpop.permute.xlu0 %1309
      %v1312 = vadd.f32 %v1305, %v1310
      %v1313 = vmul.f32 %v1312, 0.5
      %v1314 = vmul.f32 %v1312, 0.70710677
      %v1315 = vand.u32 2147483647, %v1314
      %v1316 = vmul.f32 %v1315, 0.3275911
      %v1317 = vadd.f32 %v1316, 1.0
      %v1318 = vrcp.pop %v1317
      %v1319 = vmul.f32 1.0, %v1318
      %v1320 = vmul.f32 %v1319, 1.0614054
      %v1321 = vadd.f32 %v1320, -1.4531521
      %v1322 = vmul.f32 %v1321, %v1319
      %v1323 = vadd.f32 %v1322, 1.4214138
      %v1324 = vmul.f32 %v1323, %v1319
      %v1325 = vadd.f32 %v1324, -0.28449672
      %v1326 = vmul.f32 %v1325, %v1319
      %v1327 = vadd.f32 %v1326, 0.2548296
      %v1328 = vmul.f32 %v1327, %v1319
      %v1329 = vsub.f32 0.0, %v1315
      %v1330 = vmul.f32 %v1329, %v1315
      %v1331 = vmul.f32 %v1330, 1.442695
      %v1332 = vpow.pop %v1331
      %v1333 = vmul.f32 %v1328, %v1332
      %v1334 = vsub.f32 1.0, %v1333
      %vm1335 = vcmp.ge.f32.partialorder %v1314, 0.0
      %v1336 = vsub.f32 0.0, %v1334
      %v1337 = vsel %vm1335, %v1334, %v1336
      %v1338 = vadd.f32 %v1337, 1.0
      %v1339 = vmul.f32 %v1313, %v1338
      %v1340 = vld [vmem:[%s14] sm:$0xf]
      %v1341 = vld [vmem:[%s15] sm:$0xf]
      %1343 = vset.pattern.permute.xlu0 0
      %1344 = vperm.xlu0 %1343, %v1341
      %v1345 = vpop.permute.xlu0 %1344
      %v1348 = vsel %vm755, %v1340, 0
      %v1351 = vsel %vm759, %v1339, 0
      %1353 = vmatprep.subr.mxu0 0.0
      %1354 = vmatpush1.msra.mxu0 %v1351
      %1355 = vmatprep.subr.mxu0 0.0
      %1356 = vmatpush1.msra.mxu0 0.0
      %1357 = vmatprep.subr.mxu0 0.0
      %1358 = vmatpush1.msra.mxu0 0.0
      %1359 = vmatprep.subr.mxu0 0.0
      %1360 = vmatpush1.msra.mxu0 0.0
      %1361 = vmatprep.subr.mxu0 0.0
      %1362 = vmatpush1.msra.mxu0 0.0
      %1363 = vmatprep.subr.mxu0 0.0
      %1364 = vmatpush1.msra.mxu0 0.0
      %1365 = vmatprep.subr.mxu0 0.0
      %1366 = vmatpush1.msra.mxu0 0.0
      %1367 = vmatprep.subr.mxu0 0.0
      %1368 = vmatpush1.msra.mxu0 0.0
      %1369 = vmatprep.subr.mxu0 0.0
      %1370 = vmatpush1.msra.mxu0 0.0
      %1371 = vmatprep.subr.mxu0 0.0
      %1372 = vmatpush1.msra.mxu0 0.0
      %1373 = vmatprep.subr.mxu0 0.0
      %1374 = vmatpush1.msra.mxu0 0.0
      %1375 = vmatprep.subr.mxu0 0.0
      %1376 = vmatpush1.msra.mxu0 0.0
      %1377 = vmatprep.subr.mxu0 0.0
      %1378 = vmatpush1.msra.mxu0 0.0
      %1379 = vmatprep.subr.mxu0 0.0
      %1380 = vmatpush1.msra.mxu0 0.0
      %1381 = vmatprep.subr.mxu0 0.0
      %1382 = vmatpush1.msra.mxu0 0.0
      %1383 = vmatprep.subr.mxu0 0.0
      %1384 = vmatpush1.msra.mxu0 0.0
      %1385 = vmatprep.subr.mxu0 0.0
      %1386 = vmatpush1.msra.mxu0 0.0
      %1387 = vmatprep.subr.mxu0 0.0
      %1388 = vmatpush1.msra.mxu0 0.0
      %1389 = vmatprep.subr.mxu0 0.0
      %1390 = vmatpush1.msra.mxu0 0.0
      %1391 = vmatprep.subr.mxu0 0.0
      %1392 = vmatpush1.msra.mxu0 0.0
      %1393 = vmatprep.subr.mxu0 0.0
      %1394 = vmatpush1.msra.mxu0 0.0
      %1395 = vmatprep.subr.mxu0 0.0
      %1396 = vmatpush1.msra.mxu0 0.0
      %1397 = vmatprep.subr.mxu0 0.0
      %1398 = vmatpush1.msra.mxu0 0.0
      %1399 = vmatprep.subr.mxu0 0.0
      %1400 = vmatpush1.msra.mxu0 0.0
      %1401 = vmatprep.subr.mxu0 0.0
      %1402 = vmatpush1.msra.mxu0 0.0
      %1403 = vmatprep.subr.mxu0 0.0
      %1404 = vmatpush1.msra.mxu0 0.0
      %1405 = vmatprep.subr.mxu0 0.0
      %1406 = vmatpush1.msra.mxu0 0.0
      %1407 = vmatprep.subr.mxu0 0.0
      %1408 = vmatpush1.msra.mxu0 0.0
      %1409 = vmatprep.subr.mxu0 0.0
      %1410 = vmatpush1.msra.mxu0 0.0
      %1411 = vmatprep.subr.mxu0 0.0
      %1412 = vmatpush1.msra.mxu0 0.0
      %1413 = vmatprep.subr.mxu0 0.0
      %1414 = vmatpush1.msra.mxu0 0.0
      %1415 = vmatprep.subr.mxu0 0.0
      %1416 = vmatpush1.msra.mxu0 0.0
      %1417 = vmatprep.mubr.f32.mxu0 0.0
      %1418 = vmatmul.mubr.f32.gmra.mrb[0].mxu0 %v1348
      %v1419 = vpop.f32.mrb[0].mxu0
      %v1420 = vadd.f32 %v1345, %v1419
      %v1421 = vpop.f32.mrb[0].mxu0
      %1422 = vdwg.mxu0
      %1423 = vst.msk [vmem:[%s723] sm:$0xf] %vm741, %v1420
      %v1424 = vsel %vm741, %v1420, 0.0
      %1425 = vadd.xlane.f32.xlu0 %v1424
      %v1426 = vpop.xlane.xlu0 %1425
      %v1427 = vmul.f32 %v1426, %v745
      %v1428 = vsub.f32 %v1420, %v1427
      %v1429 = vmul.f32 %v1428, %v1428
      %v1430 = vsel %vm741, %v1429, 0.0
      %1431 = vadd.xlane.f32.xlu0 %v1430
      %v1432 = vpop.xlane.xlu0 %1431
      %1433 = vst.msk [vmem:[%s735] sm:$0xf] %vm1196, %v1427
      %1434 = vst.msk [vmem:[%s739] sm:$0xf] %vm1196, %v1432
      %p1435 = scmp.lt.s32.totalorder %s34, 1
      %s1436 = scalar_select %p1435, %s34, 1
      %s1437 = smul.addr %s1436, 4
      %s1438 = scalar_lea.vmem %s16, %s1437
      %p1439 = scmp.lt.s32.totalorder %s34, 1
      %s1440 = scalar_select %p1439, %s34, 1
      %s1441 = smul.addr %s1440, 4
      %s1442 = scalar_lea.vmem %s17, %s1441
      %p1443 = scmp.lt.s32.totalorder %s34, 1
      %s1444 = scalar_select %p1443, %s34, 1
      %s1445 = smul.addr %s1444, 4
      %s1446 = scalar_lea.vmem %s18, %s1445
      %p1447 = scmp.lt.s32.totalorder %s34, 1
      %s1448 = scalar_select %p1447, %s34, 1
      %s1449 = smul.addr %s1448, 4
      %s1450 = scalar_lea.vmem %s19, %s1449
      %p1451 = scmp.lt.s32.totalorder %s34, 1
      %s1452 = scalar_select %p1451, %s34, 1
      %s1453 = smul.addr %s1452, 4
      %s1454 = scalar_lea.vmem %s20, %s1453
      %p1455 = scmp.lt.s32.totalorder %s34, 1
      %s1456 = scalar_select %p1455, %s34, 1
      %s1457 = smul.addr %s1456, 4
      %s1458 = scalar_lea.vmem %s21, %s1457
      %p1459 = scmp.lt.s32.totalorder %s34, 1
      %s1460 = scalar_select %p1459, %s34, 1
      %s1461 = smul.addr %s1460, 4
      %s1462 = scalar_lea.vmem %s22, %s1461
      // Predicated region
      $region85: #{hpb_forward.3} parent=83 // pred_check
        %p1463 = pneg %p393
      $region86: #{hpb_forward.3} parent=83 // pred_check_branch
        %1465 = sbr.rel (%p1463) target = $region88
      $region87: #{hpb_forward.3} parent=83 // pred_region
        _
      $region88: #{hpb_forward.3} parent=83 // pred_fallthru
        _
      // Predicated region
      $region89: #{hpb_forward.3} parent=83 // pred_check
        %p1466 = pneg %p419
      $region90: #{hpb_forward.3} parent=83 // pred_check_branch
        %1468 = sbr.rel (%p1466) target = $region92
      $region91: #{hpb_forward.3} parent=83 // pred_region
        _
      $region92: #{hpb_forward.3} parent=83 // pred_fallthru
        _
      // Predicated region
      $region93: #{hpb_forward.3} parent=83 // pred_check
        %p1469 = pneg %p445
      $region94: #{hpb_forward.3} parent=83 // pred_check_branch
        %1471 = sbr.rel (%p1469) target = $region96
      $region95: #{hpb_forward.3} parent=83 // pred_region
        _
      $region96: #{hpb_forward.3} parent=83 // pred_fallthru
        _
      // Predicated region
      $region97: #{hpb_forward.3} parent=83 // pred_check
        %p1472 = pneg %p471
      $region98: #{hpb_forward.3} parent=83 // pred_check_branch
        %1474 = sbr.rel (%p1472) target = $region100
      $region99: #{hpb_forward.3} parent=83 // pred_region
        _
      $region100: #{hpb_forward.3} parent=83 // pred_fallthru
        _
      // Predicated region
      $region101: #{hpb_forward.3} parent=83 // pred_check
        %p1475 = pneg %p497
      $region102: #{hpb_forward.3} parent=83 // pred_check_branch
        %1477 = sbr.rel (%p1475) target = $region104
      $region103: #{hpb_forward.3} parent=83 // pred_region
        _
      $region104: #{hpb_forward.3} parent=83 // pred_fallthru
        _
      // Predicated region
      $region105: #{hpb_forward.3} parent=83 // pred_check
        %p1478 = pneg %p523
      $region106: #{hpb_forward.3} parent=83 // pred_check_branch
        %1480 = sbr.rel (%p1478) target = $region108
      $region107: #{hpb_forward.3} parent=83 // pred_region
        _
      $region108: #{hpb_forward.3} parent=83 // pred_fallthru
        _
      // Predicated region
      $region109: #{hpb_forward.3} parent=83 // pred_check
        %p1481 = pneg %p549
      $region110: #{hpb_forward.3} parent=83 // pred_check_branch
        %1483 = sbr.rel (%p1481) target = $region112
      $region111: #{hpb_forward.3} parent=83 // pred_region
        _
      $region112: #{hpb_forward.3} parent=83 // pred_fallthru
        _
    $region84: #{hpb_forward.3} parent=5 // pred_fallthru
      _
    %p1484 = scmp.le.s32.totalorder 2, %s29
    // Predicated region
    $region113: #{hpb_forward.3} parent=5 // pred_check
      %p1485 = pneg %p1484
    $region114: #{hpb_forward.3} parent=5 // pred_check_branch
      %1487 = sbr.rel (%p1485) target = $region116
    $region115: #{hpb_forward.3} parent=5 // pred_region
      %s1488 = ssub.s32 %s29, 2
      // Predicated region
      $region117: #{hpb_forward.3} parent=115 // pred_check
        %p1489 = pneg %p399
      $region118: #{hpb_forward.3} parent=115 // pred_check_branch
        %1491 = sbr.rel (%p1489) target = $region120
      $region119: #{hpb_forward.3} parent=115 // pred_region
        %p1492 = scmp.lt.s32.totalorder %s35, 1
        %s1493 = scalar_select %p1492, %s35, 1
        %s1494 = smul.addr %s1493, 4
        %s1495 = scalar_lea.vmem %s16, %s1494
      $region120: #{hpb_forward.3} parent=115 // pred_fallthru
        _
      // Predicated region
      $region121: #{hpb_forward.3} parent=115 // pred_check
        %p1496 = pneg %p425
      $region122: #{hpb_forward.3} parent=115 // pred_check_branch
        %1498 = sbr.rel (%p1496) target = $region124
      $region123: #{hpb_forward.3} parent=115 // pred_region
        %p1499 = scmp.lt.s32.totalorder %s35, 1
        %s1500 = scalar_select %p1499, %s35, 1
        %s1501 = smul.addr %s1500, 4
        %s1502 = scalar_lea.vmem %s17, %s1501
      $region124: #{hpb_forward.3} parent=115 // pred_fallthru
        _
      // Predicated region
      $region125: #{hpb_forward.3} parent=115 // pred_check
        %p1503 = pneg %p451
      $region126: #{hpb_forward.3} parent=115 // pred_check_branch
        %1505 = sbr.rel (%p1503) target = $region128
      $region127: #{hpb_forward.3} parent=115 // pred_region
        %p1506 = scmp.lt.s32.totalorder %s35, 1
        %s1507 = scalar_select %p1506, %s35, 1
        %s1508 = smul.addr %s1507, 4
        %s1509 = scalar_lea.vmem %s18, %s1508
      $region128: #{hpb_forward.3} parent=115 // pred_fallthru
        _
      // Predicated region
      $region129: #{hpb_forward.3} parent=115 // pred_check
        %p1510 = pneg %p477
      $region130: #{hpb_forward.3} parent=115 // pred_check_branch
        %1512 = sbr.rel (%p1510) target = $region132
      $region131: #{hpb_forward.3} parent=115 // pred_region
        %p1513 = scmp.lt.s32.totalorder %s35, 1
        %s1514 = scalar_select %p1513, %s35, 1
        %s1515 = smul.addr %s1514, 4
        %s1516 = scalar_lea.vmem %s19, %s1515
      $region132: #{hpb_forward.3} parent=115 // pred_fallthru
        _
      // Predicated region
      $region133: #{hpb_forward.3} parent=115 // pred_check
        %p1517 = pneg %p503
      $region134: #{hpb_forward.3} parent=115 // pred_check_branch
        %1519 = sbr.rel (%p1517) target = $region136
      $region135: #{hpb_forward.3} parent=115 // pred_region
        %p1520 = scmp.lt.s32.totalorder %s35, 1
        %s1521 = scalar_select %p1520, %s35, 1
        %s1522 = smul.addr %s1521, 4
        %s1523 = scalar_lea.vmem %s20, %s1522
      $region136: #{hpb_forward.3} parent=115 // pred_fallthru
        _
      // Predicated region
      $region137: #{hpb_forward.3} parent=115 // pred_check
        %p1524 = pneg %p529
      $region138: #{hpb_forward.3} parent=115 // pred_check_branch
        %1526 = sbr.rel (%p1524) target = $region140
      $region139: #{hpb_forward.3} parent=115 // pred_region
        %p1527 = scmp.lt.s32.totalorder %s35, 1
        %s1528 = scalar_select %p1527, %s35, 1
        %s1529 = smul.addr %s1528, 4
        %s1530 = scalar_lea.vmem %s21, %s1529
      $region140: #{hpb_forward.3} parent=115 // pred_fallthru
        _
      // Predicated region
      $region141: #{hpb_forward.3} parent=115 // pred_check
        %p1531 = pneg %p555
      $region142: #{hpb_forward.3} parent=115 // pred_check_branch
        %1533 = sbr.rel (%p1531) target = $region144
      $region143: #{hpb_forward.3} parent=115 // pred_region
        %p1534 = scmp.lt.s32.totalorder %s35, 1
        %s1535 = scalar_select %p1534, %s35, 1
        %s1536 = smul.addr %s1535, 4
        %s1537 = scalar_lea.vmem %s22, %s1536
      $region144: #{hpb_forward.3} parent=115 // pred_fallthru
        _
    $region116: #{hpb_forward.3} parent=5 // pred_fallthru
      _
  $region6: #{hpb_forward.3} parent=0 // loop_footer
    %s33 = sadd.s32 1, %s29
  $region7: #{hpb_forward.3} parent=0 // loop_footer_branch
    %28 = sbr.rel target = $region3
  $region8: #{hpb_forward.3} parent=0 // loop_exit
    _

// kernel: hpb_forward.4
$region0: #{hpb_forward.4}
  #allocation0 [shape = 'u32[]', space=smem, size = 0x4, offset = 0x4, fixed_abs, tag = 'smem constant byte address 0x4 - core index']
  #allocation1 [shape = 'u32[144,128]{1,0:T(1,128)}', space=vmem, size = 0x12000, scoped, tag = 'internal scratch']
  %s0 = inlined_call_operand.vmem [shape: f32[2,4,64], index: 0, kind: input, shape index: {}]
  %s1 = inlined_call_operand.vmem [shape: f32[2,4,64], index: 1, kind: input, shape index: {}]
  %s2 = inlined_call_operand.vmem [shape: f32[2,4,64], index: 2, kind: input, shape index: {}]
  %s3 = inlined_call_operand.vmem [shape: f32[2,4,64], index: 3, kind: input, shape index: {}]
  %s4 = inlined_call_operand.vmem [shape: f32[4,1], index: 4, kind: input, shape index: {}]
  %s5 = inlined_call_operand.vmem [shape: f32[4,1], index: 5, kind: input, shape index: {}]
  %s6 = inlined_call_operand.vmem [shape: f32[4,1], index: 6, kind: input, shape index: {}]
  %s7 = inlined_call_operand.vmem [shape: f32[4,1], index: 7, kind: input, shape index: {}]
  %s8 = inlined_call_operand.vmem [shape: f32[4,4], index: 8, kind: input, shape index: {}]
  %s9 = inlined_call_operand.vmem [shape: f32[4,1], index: 9, kind: input, shape index: {}]
  %s10 = inlined_call_operand.vmem [shape: f32[4,4], index: 10, kind: input, shape index: {}]
  %s11 = inlined_call_operand.vmem [shape: f32[4,1], index: 11, kind: input, shape index: {}]
  %s12 = inlined_call_operand.vmem [shape: f32[4,4], index: 12, kind: input, shape index: {}]
  %s13 = inlined_call_operand.vmem [shape: f32[4,1], index: 13, kind: input, shape index: {}]
  %s14 = inlined_call_operand.vmem [shape: f32[4,1], index: 14, kind: input, shape index: {}]
  %s15 = inlined_call_operand.vmem [shape: f32[4,1], index: 15, kind: input, shape index: {}]
  %s16 = inlined_call_operand.vmem [shape: f32[64,256], index: 16, kind: input, shape index: {}]
  %s17 = inlined_call_operand.vmem [shape: f32[9,4,1], index: 17, kind: input, shape index: {}]
  %s18 = inlined_call_operand.vmem [shape: f32[4,1], index: 18, kind: input, shape index: {}]
  %s19 = inlined_call_operand.vmem [shape: f32[9,1,256], index: 19, kind: input, shape index: {}]
  %s20 = inlined_call_operand.vmem [shape: f32[4,4], index: 20, kind: input, shape index: {}]
  %s21 = inlined_call_operand.vmem [shape: f32[4,1], index: 21, kind: input, shape index: {}]
  %s22 = inlined_call_operand.vmem [shape: f32[2,4,256], index: 22, kind: output, shape index: {0}]
  %s23 = inlined_call_operand.vmem [shape: f32[2,4,256], index: 23, kind: output, shape index: {1}]
  %s24 = inlined_call_operand.vmem [shape: f32[2,4,1], index: 24, kind: output, shape index: {2}]
  %s25 = inlined_call_operand.vmem [shape: f32[2,4,1], index: 25, kind: output, shape index: {3}]
  %26 = xla_tuple %s22, %s23, %s24, %s25
  %s27 = sld [smem:[#allocation0]]
  $region145: #{hpb_forward.4} parent=0
    _
  %s29 = ssub.s32 1, %s27
  %s30 = scalar_select 0, %s29, %s27
  loop: start=0, step=1, limit=4
  $region2: #{hpb_forward.4} parent=0 // loop_pre_header
    _
  $region3: #{hpb_forward.4} parent=0 // loop_header
    %s32 = sphi 0, %s36
    %p33 = scmp.ge.s32.totalorder %s32, 4
    %s42 = sphi 0, %s44
    %s45 = sphi 0, %s42
    %s46 = sphi 0, %s45
    %s62 = sphi 0, %s46
    %s68 = sphi 0, %s70
    %s71 = sphi 0, %s68
    %s72 = sphi 0, %s71
    %s88 = sphi 0, %s72
    %s94 = sphi 0, %s96
    %s97 = sphi 0, %s94
    %s98 = sphi 0, %s97
    %s114 = sphi 0, %s98
    %s120 = sphi 0, %s122
    %s123 = sphi 0, %s120
    %s124 = sphi 0, %s123
    %s140 = sphi 0, %s124
    %s144 = sphi 0, %s144
    %s146 = sphi 0, %s144
    %s147 = sphi 0, %s146
    %s161 = sphi 0, %s147
    %s165 = sphi 0, %s165
    %s167 = sphi 0, %s165
    %s168 = sphi 0, %s167
    %s182 = sphi 0, %s168
    %s186 = sphi 0, %s186
    %s188 = sphi 0, %s186
    %s189 = sphi 0, %s188
    %s203 = sphi 0, %s189
    %s207 = sphi 0, %s207
    %s209 = sphi 0, %s207
    %s210 = sphi 0, %s209
    %s224 = sphi 0, %s210
    %s228 = sphi 0, %s228
    %s230 = sphi 0, %s228
    %s231 = sphi 0, %s230
    %s245 = sphi 0, %s231
    %s249 = sphi 0, %s249
    %s251 = sphi 0, %s249
    %s252 = sphi 0, %s251
    %s266 = sphi 0, %s252
    %s270 = sphi 0, %s270
    %s272 = sphi 0, %s270
    %s273 = sphi 0, %s272
    %s287 = sphi 0, %s273
    %s291 = sphi 0, %s291
    %s293 = sphi 0, %s291
    %s294 = sphi 0, %s293
    %s308 = sphi 0, %s294
    %s312 = sphi 0, %s312
    %s314 = sphi 0, %s312
    %s315 = sphi 0, %s314
    %s329 = sphi 0, %s315
    %s333 = sphi 0, %s333
    %s335 = sphi 0, %s333
    %s336 = sphi 0, %s335
    %s350 = sphi 0, %s336
    %s354 = sphi 0, %s354
    %s356 = sphi 0, %s354
    %s357 = sphi 0, %s356
    %s371 = sphi 0, %s357
    %s375 = sphi 0, %s375
    %s377 = sphi 0, %s375
    %s378 = sphi 0, %s377
    %s392 = sphi 0, %s378
    %s396 = sphi 0, %s396
    %s398 = sphi 0, %s396
    %s399 = sphi 0, %s398
    %s413 = sphi 0, %s399
    %s417 = sphi 0, %s417
    %s419 = sphi 0, %s417
    %s420 = sphi 0, %s419
    %s434 = sphi 0, %s420
    %s438 = sphi 0, %s438
    %s440 = sphi 0, %s438
    %s441 = sphi 0, %s440
    %s455 = sphi 0, %s441
    %s459 = sphi 0, %s459
    %s461 = sphi 0, %s459
    %s462 = sphi 0, %s461
    %s476 = sphi 0, %s462
    %s480 = sphi 0, %s480
    %s482 = sphi 0, %s480
    %s483 = sphi 0, %s482
    %s497 = sphi 0, %s483
    %s501 = sphi 0, %s501
    %s503 = sphi 0, %s501
    %s504 = sphi 0, %s503
    %s518 = sphi 0, %s504
    %s524 = sphi 0, %s526
    %s527 = sphi 0, %s524
    %s528 = sphi 0, %s527
    %s544 = sphi 0, %s528
    %s550 = sphi 0, %s552
    %s553 = sphi 0, %s550
    %s554 = sphi 0, %s553
    %s570 = sphi 0, %s554
    %s576 = sphi 0, %s578
    %s579 = sphi 0, %s576
    %s580 = sphi 0, %s579
    %s596 = sphi 0, %s580
    %s602 = sphi 0, %s604
    %s605 = sphi 0, %s602
    %s606 = sphi 0, %s605
    %s622 = sphi 0, %s606
  $region4: #{hpb_forward.4} parent=0 // loop_header_branch
    %35 = sbr.rel (%p33) target = $region8
  $region5: #{hpb_forward.4} parent=0 // loop_body
    %s37 = ssub.s32 %s32, 1
    %s38 = ssub.s32 %s32, 2
    %s39 = sadd.s32 %s32, 1
    %s40 = ssub.s32 %s32, %s39
    %p41 = scmp.eq.s32.totalorder %s40, 0
    %s43 = sadd.s32 %s42, 1
    %s44 = scalar_select %p41, %s42, %s43
    %p47 = pneg %p41
    %p48 = scmp.eq.s32.totalorder %s32, 1
    %p49 = por %p47, %p48
    %p50 = scmp.ne.s32.totalorder %s42, %s45
    %p51 = scmp.eq.s32.totalorder %s32, 0
    %p52 = por %p50, %p51
    %p53 = scmp.ne.s32.totalorder %s42, %s45
    %p54 = scmp.eq.s32.totalorder %s37, 1
    %p55 = por %p53, %p54
    %p56 = scmp.ne.s32.totalorder %s45, %s46
    %p57 = scmp.eq.s32.totalorder %s37, 0
    %p58 = por %p56, %p57
    %p59 = scmp.ne.s32.totalorder %s45, %s46
    %p60 = scmp.eq.s32.totalorder %s38, 1
    %p61 = por %p59, %p60
    %p63 = scmp.ne.s32.totalorder %s46, %s62
    %p64 = scmp.eq.s32.totalorder %s38, 0
    %p65 = por %p63, %p64
    %s66 = ssub.s32 %s32, %s39
    %p67 = scmp.eq.s32.totalorder %s66, 0
    %s69 = sadd.s32 %s68, 1
    %s70 = scalar_select %p67, %s68, %s69
    %p73 = pneg %p67
    %p74 = scmp.eq.s32.totalorder %s32, 1
    %p75 = por %p73, %p74
    %p76 = scmp.ne.s32.totalorder %s68, %s71
    %p77 = scmp.eq.s32.totalorder %s32, 0
    %p78 = por %p76, %p77
    %p79 = scmp.ne.s32.totalorder %s68, %s71
    %p80 = scmp.eq.s32.totalorder %s37, 1
    %p81 = por %p79, %p80
    %p82 = scmp.ne.s32.totalorder %s71, %s72
    %p83 = scmp.eq.s32.totalorder %s37, 0
    %p84 = por %p82, %p83
    %p85 = scmp.ne.s32.totalorder %s71, %s72
    %p86 = scmp.eq.s32.totalorder %s38, 1
    %p87 = por %p85, %p86
    %p89 = scmp.ne.s32.totalorder %s72, %s88
    %p90 = scmp.eq.s32.totalorder %s38, 0
    %p91 = por %p89, %p90
    %s92 = ssub.s32 %s32, %s39
    %p93 = scmp.eq.s32.totalorder %s92, 0
    %s95 = sadd.s32 %s94, 1
    %s96 = scalar_select %p93, %s94, %s95
    %p99 = pneg %p93
    %p100 = scmp.eq.s32.totalorder %s32, 1
    %p101 = por %p99, %p100
    %p102 = scmp.ne.s32.totalorder %s94, %s97
    %p103 = scmp.eq.s32.totalorder %s32, 0
    %p104 = por %p102, %p103
    %p105 = scmp.ne.s32.totalorder %s94, %s97
    %p106 = scmp.eq.s32.totalorder %s37, 1
    %p107 = por %p105, %p106
    %p108 = scmp.ne.s32.totalorder %s97, %s98
    %p109 = scmp.eq.s32.totalorder %s37, 0
    %p110 = por %p108, %p109
    %p111 = scmp.ne.s32.totalorder %s97, %s98
    %p112 = scmp.eq.s32.totalorder %s38, 1
    %p113 = por %p111, %p112
    %p115 = scmp.ne.s32.totalorder %s98, %s114
    %p116 = scmp.eq.s32.totalorder %s38, 0
    %p117 = por %p115, %p116
    %s118 = ssub.s32 %s32, %s39
    %p119 = scmp.eq.s32.totalorder %s118, 0
    %s121 = sadd.s32 %s120, 1
    %s122 = scalar_select %p119, %s120, %s121
    %p125 = pneg %p119
    %p126 = scmp.eq.s32.totalorder %s32, 1
    %p127 = por %p125, %p126
    %p128 = scmp.ne.s32.totalorder %s120, %s123
    %p129 = scmp.eq.s32.totalorder %s32, 0
    %p130 = por %p128, %p129
    %p131 = scmp.ne.s32.totalorder %s120, %s123
    %p132 = scmp.eq.s32.totalorder %s37, 1
    %p133 = por %p131, %p132
    %p134 = scmp.ne.s32.totalorder %s123, %s124
    %p135 = scmp.eq.s32.totalorder %s37, 0
    %p136 = por %p134, %p135
    %p137 = scmp.ne.s32.totalorder %s123, %s124
    %p138 = scmp.eq.s32.totalorder %s38, 1
    %p139 = por %p137, %p138
    %p141 = scmp.ne.s32.totalorder %s124, %s140
    %p142 = scmp.eq.s32.totalorder %s38, 0
    %p143 = por %p141, %p142
    %s145 = sadd.s32 %s144, 1
    %p148 = scmp.eq.s32.totalorder %s32, 1
    %p149 = scmp.ne.s32.totalorder %s144, %s146
    %p150 = scmp.eq.s32.totalorder %s32, 0
    %p151 = por %p149, %p150
    %p152 = scmp.ne.s32.totalorder %s144, %s146
    %p153 = scmp.eq.s32.totalorder %s37, 1
    %p154 = por %p152, %p153
    %p155 = scmp.ne.s32.totalorder %s146, %s147
    %p156 = scmp.eq.s32.totalorder %s37, 0
    %p157 = por %p155, %p156
    %p158 = scmp.ne.s32.totalorder %s146, %s147
    %p159 = scmp.eq.s32.totalorder %s38, 1
    %p160 = por %p158, %p159
    %p162 = scmp.ne.s32.totalorder %s147, %s161
    %p163 = scmp.eq.s32.totalorder %s38, 0
    %p164 = por %p162, %p163
    %s166 = sadd.s32 %s165, 1
    %p169 = scmp.eq.s32.totalorder %s32, 1
    %p170 = scmp.ne.s32.totalorder %s165, %s167
    %p171 = scmp.eq.s32.totalorder %s32, 0
    %p172 = por %p170, %p171
    %p173 = scmp.ne.s32.totalorder %s165, %s167
    %p174 = scmp.eq.s32.totalorder %s37, 1
    %p175 = por %p173, %p174
    %p176 = scmp.ne.s32.totalorder %s167, %s168
    %p177 = scmp.eq.s32.totalorder %s37, 0
    %p178 = por %p176, %p177
    %p179 = scmp.ne.s32.totalorder %s167, %s168
    %p180 = scmp.eq.s32.totalorder %s38, 1
    %p181 = por %p179, %p180
    %p183 = scmp.ne.s32.totalorder %s168, %s182
    %p184 = scmp.eq.s32.totalorder %s38, 0
    %p185 = por %p183, %p184
    %s187 = sadd.s32 %s186, 1
    %p190 = scmp.eq.s32.totalorder %s32, 1
    %p191 = scmp.ne.s32.totalorder %s186, %s188
    %p192 = scmp.eq.s32.totalorder %s32, 0
    %p193 = por %p191, %p192
    %p194 = scmp.ne.s32.totalorder %s186, %s188
    %p195 = scmp.eq.s32.totalorder %s37, 1
    %p196 = por %p194, %p195
    %p197 = scmp.ne.s32.totalorder %s188, %s189
    %p198 = scmp.eq.s32.totalorder %s37, 0
    %p199 = por %p197, %p198
    %p200 = scmp.ne.s32.totalorder %s188, %s189
    %p201 = scmp.eq.s32.totalorder %s38, 1
    %p202 = por %p200, %p201
    %p204 = scmp.ne.s32.totalorder %s189, %s203
    %p205 = scmp.eq.s32.totalorder %s38, 0
    %p206 = por %p204, %p205
    %s208 = sadd.s32 %s207, 1
    %p211 = scmp.eq.s32.totalorder %s32, 1
    %p212 = scmp.ne.s32.totalorder %s207, %s209
    %p213 = scmp.eq.s32.totalorder %s32, 0
    %p214 = por %p212, %p213
    %p215 = scmp.ne.s32.totalorder %s207, %s209
    %p216 = scmp.eq.s32.totalorder %s37, 1
    %p217 = por %p215, %p216
    %p218 = scmp.ne.s32.totalorder %s209, %s210
    %p219 = scmp.eq.s32.totalorder %s37, 0
    %p220 = por %p218, %p219
    %p221 = scmp.ne.s32.totalorder %s209, %s210
    %p222 = scmp.eq.s32.totalorder %s38, 1
    %p223 = por %p221, %p222
    %p225 = scmp.ne.s32.totalorder %s210, %s224
    %p226 = scmp.eq.s32.totalorder %s38, 0
    %p227 = por %p225, %p226
    %s229 = sadd.s32 %s228, 1
    %p232 = scmp.eq.s32.totalorder %s32, 1
    %p233 = scmp.ne.s32.totalorder %s228, %s230
    %p234 = scmp.eq.s32.totalorder %s32, 0
    %p235 = por %p233, %p234
    %p236 = scmp.ne.s32.totalorder %s228, %s230
    %p237 = scmp.eq.s32.totalorder %s37, 1
    %p238 = por %p236, %p237
    %p239 = scmp.ne.s32.totalorder %s230, %s231
    %p240 = scmp.eq.s32.totalorder %s37, 0
    %p241 = por %p239, %p240
    %p242 = scmp.ne.s32.totalorder %s230, %s231
    %p243 = scmp.eq.s32.totalorder %s38, 1
    %p244 = por %p242, %p243
    %p246 = scmp.ne.s32.totalorder %s231, %s245
    %p247 = scmp.eq.s32.totalorder %s38, 0
    %p248 = por %p246, %p247
    %s250 = sadd.s32 %s249, 1
    %p253 = scmp.eq.s32.totalorder %s32, 1
    %p254 = scmp.ne.s32.totalorder %s249, %s251
    %p255 = scmp.eq.s32.totalorder %s32, 0
    %p256 = por %p254, %p255
    %p257 = scmp.ne.s32.totalorder %s249, %s251
    %p258 = scmp.eq.s32.totalorder %s37, 1
    %p259 = por %p257, %p258
    %p260 = scmp.ne.s32.totalorder %s251, %s252
    %p261 = scmp.eq.s32.totalorder %s37, 0
    %p262 = por %p260, %p261
    %p263 = scmp.ne.s32.totalorder %s251, %s252
    %p264 = scmp.eq.s32.totalorder %s38, 1
    %p265 = por %p263, %p264
    %p267 = scmp.ne.s32.totalorder %s252, %s266
    %p268 = scmp.eq.s32.totalorder %s38, 0
    %p269 = por %p267, %p268
    %s271 = sadd.s32 %s270, 1
    %p274 = scmp.eq.s32.totalorder %s32, 1
    %p275 = scmp.ne.s32.totalorder %s270, %s272
    %p276 = scmp.eq.s32.totalorder %s32, 0
    %p277 = por %p275, %p276
    %p278 = scmp.ne.s32.totalorder %s270, %s272
    %p279 = scmp.eq.s32.totalorder %s37, 1
    %p280 = por %p278, %p279
    %p281 = scmp.ne.s32.totalorder %s272, %s273
    %p282 = scmp.eq.s32.totalorder %s37, 0
    %p283 = por %p281, %p282
    %p284 = scmp.ne.s32.totalorder %s272, %s273
    %p285 = scmp.eq.s32.totalorder %s38, 1
    %p286 = por %p284, %p285
    %p288 = scmp.ne.s32.totalorder %s273, %s287
    %p289 = scmp.eq.s32.totalorder %s38, 0
    %p290 = por %p288, %p289
    %s292 = sadd.s32 %s291, 1
    %p295 = scmp.eq.s32.totalorder %s32, 1
    %p296 = scmp.ne.s32.totalorder %s291, %s293
    %p297 = scmp.eq.s32.totalorder %s32, 0
    %p298 = por %p296, %p297
    %p299 = scmp.ne.s32.totalorder %s291, %s293
    %p300 = scmp.eq.s32.totalorder %s37, 1
    %p301 = por %p299, %p300
    %p302 = scmp.ne.s32.totalorder %s293, %s294
    %p303 = scmp.eq.s32.totalorder %s37, 0
    %p304 = por %p302, %p303
    %p305 = scmp.ne.s32.totalorder %s293, %s294
    %p306 = scmp.eq.s32.totalorder %s38, 1
    %p307 = por %p305, %p306
    %p309 = scmp.ne.s32.totalorder %s294, %s308
    %p310 = scmp.eq.s32.totalorder %s38, 0
    %p311 = por %p309, %p310
    %s313 = sadd.s32 %s312, 1
    %p316 = scmp.eq.s32.totalorder %s32, 1
    %p317 = scmp.ne.s32.totalorder %s312, %s314
    %p318 = scmp.eq.s32.totalorder %s32, 0
    %p319 = por %p317, %p318
    %p320 = scmp.ne.s32.totalorder %s312, %s314
    %p321 = scmp.eq.s32.totalorder %s37, 1
    %p322 = por %p320, %p321
    %p323 = scmp.ne.s32.totalorder %s314, %s315
    %p324 = scmp.eq.s32.totalorder %s37, 0
    %p325 = por %p323, %p324
    %p326 = scmp.ne.s32.totalorder %s314, %s315
    %p327 = scmp.eq.s32.totalorder %s38, 1
    %p328 = por %p326, %p327
    %p330 = scmp.ne.s32.totalorder %s315, %s329
    %p331 = scmp.eq.s32.totalorder %s38, 0
    %p332 = por %p330, %p331
    %s334 = sadd.s32 %s333, 1
    %p337 = scmp.eq.s32.totalorder %s32, 1
    %p338 = scmp.ne.s32.totalorder %s333, %s335
    %p339 = scmp.eq.s32.totalorder %s32, 0
    %p340 = por %p338, %p339
    %p341 = scmp.ne.s32.totalorder %s333, %s335
    %p342 = scmp.eq.s32.totalorder %s37, 1
    %p343 = por %p341, %p342
    %p344 = scmp.ne.s32.totalorder %s335, %s336
    %p345 = scmp.eq.s32.totalorder %s37, 0
    %p346 = por %p344, %p345
    %p347 = scmp.ne.s32.totalorder %s335, %s336
    %p348 = scmp.eq.s32.totalorder %s38, 1
    %p349 = por %p347, %p348
    %p351 = scmp.ne.s32.totalorder %s336, %s350
    %p352 = scmp.eq.s32.totalorder %s38, 0
    %p353 = por %p351, %p352
    %s355 = sadd.s32 %s354, 1
    %p358 = scmp.eq.s32.totalorder %s32, 1
    %p359 = scmp.ne.s32.totalorder %s354, %s356
    %p360 = scmp.eq.s32.totalorder %s32, 0
    %p361 = por %p359, %p360
    %p362 = scmp.ne.s32.totalorder %s354, %s356
    %p363 = scmp.eq.s32.totalorder %s37, 1
    %p364 = por %p362, %p363
    %p365 = scmp.ne.s32.totalorder %s356, %s357
    %p366 = scmp.eq.s32.totalorder %s37, 0
    %p367 = por %p365, %p366
    %p368 = scmp.ne.s32.totalorder %s356, %s357
    %p369 = scmp.eq.s32.totalorder %s38, 1
    %p370 = por %p368, %p369
    %p372 = scmp.ne.s32.totalorder %s357, %s371
    %p373 = scmp.eq.s32.totalorder %s38, 0
    %p374 = por %p372, %p373
    %s376 = sadd.s32 %s375, 1
    %p379 = scmp.eq.s32.totalorder %s32, 1
    %p380 = scmp.ne.s32.totalorder %s375, %s377
    %p381 = scmp.eq.s32.totalorder %s32, 0
    %p382 = por %p380, %p381
    %p383 = scmp.ne.s32.totalorder %s375, %s377
    %p384 = scmp.eq.s32.totalorder %s37, 1
    %p385 = por %p383, %p384
    %p386 = scmp.ne.s32.totalorder %s377, %s378
    %p387 = scmp.eq.s32.totalorder %s37, 0
    %p388 = por %p386, %p387
    %p389 = scmp.ne.s32.totalorder %s377, %s378
    %p390 = scmp.eq.s32.totalorder %s38, 1
    %p391 = por %p389, %p390
    %p393 = scmp.ne.s32.totalorder %s378, %s392
    %p394 = scmp.eq.s32.totalorder %s38, 0
    %p395 = por %p393, %p394
    %s397 = sadd.s32 %s396, 1
    %p400 = scmp.eq.s32.totalorder %s32, 1
    %p401 = scmp.ne.s32.totalorder %s396, %s398
    %p402 = scmp.eq.s32.totalorder %s32, 0
    %p403 = por %p401, %p402
    %p404 = scmp.ne.s32.totalorder %s396, %s398
    %p405 = scmp.eq.s32.totalorder %s37, 1
    %p406 = por %p404, %p405
    %p407 = scmp.ne.s32.totalorder %s398, %s399
    %p408 = scmp.eq.s32.totalorder %s37, 0
    %p409 = por %p407, %p408
    %p410 = scmp.ne.s32.totalorder %s398, %s399
    %p411 = scmp.eq.s32.totalorder %s38, 1
    %p412 = por %p410, %p411
    %p414 = scmp.ne.s32.totalorder %s399, %s413
    %p415 = scmp.eq.s32.totalorder %s38, 0
    %p416 = por %p414, %p415
    %s418 = sadd.s32 %s417, 1
    %p421 = scmp.eq.s32.totalorder %s32, 1
    %p422 = scmp.ne.s32.totalorder %s417, %s419
    %p423 = scmp.eq.s32.totalorder %s32, 0
    %p424 = por %p422, %p423
    %p425 = scmp.ne.s32.totalorder %s417, %s419
    %p426 = scmp.eq.s32.totalorder %s37, 1
    %p427 = por %p425, %p426
    %p428 = scmp.ne.s32.totalorder %s419, %s420
    %p429 = scmp.eq.s32.totalorder %s37, 0
    %p430 = por %p428, %p429
    %p431 = scmp.ne.s32.totalorder %s419, %s420
    %p432 = scmp.eq.s32.totalorder %s38, 1
    %p433 = por %p431, %p432
    %p435 = scmp.ne.s32.totalorder %s420, %s434
    %p436 = scmp.eq.s32.totalorder %s38, 0
    %p437 = por %p435, %p436
    %s439 = sadd.s32 %s438, 1
    %p442 = scmp.eq.s32.totalorder %s32, 1
    %p443 = scmp.ne.s32.totalorder %s438, %s440
    %p444 = scmp.eq.s32.totalorder %s32, 0
    %p445 = por %p443, %p444
    %p446 = scmp.ne.s32.totalorder %s438, %s440
    %p447 = scmp.eq.s32.totalorder %s37, 1
    %p448 = por %p446, %p447
    %p449 = scmp.ne.s32.totalorder %s440, %s441
    %p450 = scmp.eq.s32.totalorder %s37, 0
    %p451 = por %p449, %p450
    %p452 = scmp.ne.s32.totalorder %s440, %s441
    %p453 = scmp.eq.s32.totalorder %s38, 1
    %p454 = por %p452, %p453
    %p456 = scmp.ne.s32.totalorder %s441, %s455
    %p457 = scmp.eq.s32.totalorder %s38, 0
    %p458 = por %p456, %p457
    %s460 = sadd.s32 %s459, 1
    %p463 = scmp.eq.s32.totalorder %s32, 1
    %p464 = scmp.ne.s32.totalorder %s459, %s461
    %p465 = scmp.eq.s32.totalorder %s32, 0
    %p466 = por %p464, %p465
    %p467 = scmp.ne.s32.totalorder %s459, %s461
    %p468 = scmp.eq.s32.totalorder %s37, 1
    %p469 = por %p467, %p468
    %p470 = scmp.ne.s32.totalorder %s461, %s462
    %p471 = scmp.eq.s32.totalorder %s37, 0
    %p472 = por %p470, %p471
    %p473 = scmp.ne.s32.totalorder %s461, %s462
    %p474 = scmp.eq.s32.totalorder %s38, 1
    %p475 = por %p473, %p474
    %p477 = scmp.ne.s32.totalorder %s462, %s476
    %p478 = scmp.eq.s32.totalorder %s38, 0
    %p479 = por %p477, %p478
    %s481 = sadd.s32 %s480, 1
    %p484 = scmp.eq.s32.totalorder %s32, 1
    %p485 = scmp.ne.s32.totalorder %s480, %s482
    %p486 = scmp.eq.s32.totalorder %s32, 0
    %p487 = por %p485, %p486
    %p488 = scmp.ne.s32.totalorder %s480, %s482
    %p489 = scmp.eq.s32.totalorder %s37, 1
    %p490 = por %p488, %p489
    %p491 = scmp.ne.s32.totalorder %s482, %s483
    %p492 = scmp.eq.s32.totalorder %s37, 0
    %p493 = por %p491, %p492
    %p494 = scmp.ne.s32.totalorder %s482, %s483
    %p495 = scmp.eq.s32.totalorder %s38, 1
    %p496 = por %p494, %p495
    %p498 = scmp.ne.s32.totalorder %s483, %s497
    %p499 = scmp.eq.s32.totalorder %s38, 0
    %p500 = por %p498, %p499
    %s502 = sadd.s32 %s501, 1
    %p505 = scmp.eq.s32.totalorder %s32, 1
    %p506 = scmp.ne.s32.totalorder %s501, %s503
    %p507 = scmp.eq.s32.totalorder %s32, 0
    %p508 = por %p506, %p507
    %p509 = scmp.ne.s32.totalorder %s501, %s503
    %p510 = scmp.eq.s32.totalorder %s37, 1
    %p511 = por %p509, %p510
    %p512 = scmp.ne.s32.totalorder %s503, %s504
    %p513 = scmp.eq.s32.totalorder %s37, 0
    %p514 = por %p512, %p513
    %p515 = scmp.ne.s32.totalorder %s503, %s504
    %p516 = scmp.eq.s32.totalorder %s38, 1
    %p517 = por %p515, %p516
    %p519 = scmp.ne.s32.totalorder %s504, %s518
    %p520 = scmp.eq.s32.totalorder %s38, 0
    %p521 = por %p519, %p520
    %s522 = ssub.s32 %s32, %s39
    %p523 = scmp.eq.s32.totalorder %s522, 0
    %s525 = sadd.s32 %s524, 1
    %s526 = scalar_select %p523, %s524, %s525
    %p529 = pneg %p523
    %p530 = scmp.eq.s32.totalorder %s32, 1
    %p531 = por %p529, %p530
    %p532 = scmp.ne.s32.totalorder %s524, %s527
    %p533 = scmp.eq.s32.totalorder %s32, 0
    %p534 = por %p532, %p533
    %p535 = scmp.ne.s32.totalorder %s524, %s527
    %p536 = scmp.eq.s32.totalorder %s37, 1
    %p537 = por %p535, %p536
    %p538 = scmp.ne.s32.totalorder %s527, %s528
    %p539 = scmp.eq.s32.totalorder %s37, 0
    %p540 = por %p538, %p539
    %p541 = scmp.ne.s32.totalorder %s527, %s528
    %p542 = scmp.eq.s32.totalorder %s38, 1
    %p543 = por %p541, %p542
    %p545 = scmp.ne.s32.totalorder %s528, %s544
    %p546 = scmp.eq.s32.totalorder %s38, 0
    %p547 = por %p545, %p546
    %s548 = ssub.s32 %s32, %s39
    %p549 = scmp.eq.s32.totalorder %s548, 0
    %s551 = sadd.s32 %s550, 1
    %s552 = scalar_select %p549, %s550, %s551
    %p555 = pneg %p549
    %p556 = scmp.eq.s32.totalorder %s32, 1
    %p557 = por %p555, %p556
    %p558 = scmp.ne.s32.totalorder %s550, %s553
    %p559 = scmp.eq.s32.totalorder %s32, 0
    %p560 = por %p558, %p559
    %p561 = scmp.ne.s32.totalorder %s550, %s553
    %p562 = scmp.eq.s32.totalorder %s37, 1
    %p563 = por %p561, %p562
    %p564 = scmp.ne.s32.totalorder %s553, %s554
    %p565 = scmp.eq.s32.totalorder %s37, 0
    %p566 = por %p564, %p565
    %p567 = scmp.ne.s32.totalorder %s553, %s554
    %p568 = scmp.eq.s32.totalorder %s38, 1
    %p569 = por %p567, %p568
    %p571 = scmp.ne.s32.totalorder %s554, %s570
    %p572 = scmp.eq.s32.totalorder %s38, 0
    %p573 = por %p571, %p572
    %s574 = ssub.s32 %s32, %s39
    %p575 = scmp.eq.s32.totalorder %s574, 0
    %s577 = sadd.s32 %s576, 1
    %s578 = scalar_select %p575, %s576, %s577
    %p581 = pneg %p575
    %p582 = scmp.eq.s32.totalorder %s32, 1
    %p583 = por %p581, %p582
    %p584 = scmp.ne.s32.totalorder %s576, %s579
    %p585 = scmp.eq.s32.totalorder %s32, 0
    %p586 = por %p584, %p585
    %p587 = scmp.ne.s32.totalorder %s576, %s579
    %p588 = scmp.eq.s32.totalorder %s37, 1
    %p589 = por %p587, %p588
    %p590 = scmp.ne.s32.totalorder %s579, %s580
    %p591 = scmp.eq.s32.totalorder %s37, 0
    %p592 = por %p590, %p591
    %p593 = scmp.ne.s32.totalorder %s579, %s580
    %p594 = scmp.eq.s32.totalorder %s38, 1
    %p595 = por %p593, %p594
    %p597 = scmp.ne.s32.totalorder %s580, %s596
    %p598 = scmp.eq.s32.totalorder %s38, 0
    %p599 = por %p597, %p598
    %s600 = ssub.s32 %s32, %s39
    %p601 = scmp.eq.s32.totalorder %s600, 0
    %s603 = sadd.s32 %s602, 1
    %s604 = scalar_select %p601, %s602, %s603
    %p607 = pneg %p601
    %p608 = scmp.eq.s32.totalorder %s32, 1
    %p609 = por %p607, %p608
    %p610 = scmp.ne.s32.totalorder %s602, %s605
    %p611 = scmp.eq.s32.totalorder %s32, 0
    %p612 = por %p610, %p611
    %p613 = scmp.ne.s32.totalorder %s602, %s605
    %p614 = scmp.eq.s32.totalorder %s37, 1
    %p615 = por %p613, %p614
    %p616 = scmp.ne.s32.totalorder %s605, %s606
    %p617 = scmp.eq.s32.totalorder %s37, 0
    %p618 = por %p616, %p617
    %p619 = scmp.ne.s32.totalorder %s605, %s606
    %p620 = scmp.eq.s32.totalorder %s38, 1
    %p621 = por %p619, %p620
    %p623 = scmp.ne.s32.totalorder %s606, %s622
    %p624 = scmp.eq.s32.totalorder %s38, 0
    %p625 = por %p623, %p624
    %p626 = scmp.le.s32.totalorder 1, %s32
    %p627 = scmp.lt.s32.totalorder %s32, 3
    %p628 = pnand %p626, %p627
    %p629 = pneg %p628
    // Predicated region
    $region9: #{hpb_forward.4} parent=5 // pred_check
      _
    $region10: #{hpb_forward.4} parent=5 // pred_check_branch
      %631 = sbr.rel (%p628) target = $region12
    $region11: #{hpb_forward.4} parent=5 // pred_region
      %s632 = ssub.s32 %s32, 1
      // Predicated region
      $region13: #{hpb_forward.4} parent=11 // pred_check
        %p633 = pneg %p157
      $region14: #{hpb_forward.4} parent=11 // pred_check_branch
        %635 = sbr.rel (%p633) target = $region16
      $region15: #{hpb_forward.4} parent=11 // pred_region
        _
      $region16: #{hpb_forward.4} parent=11 // pred_fallthru
        _
      // Predicated region
      $region17: #{hpb_forward.4} parent=11 // pred_check
        %p636 = pneg %p178
      $region18: #{hpb_forward.4} parent=11 // pred_check_branch
        %638 = sbr.rel (%p636) target = $region20
      $region19: #{hpb_forward.4} parent=11 // pred_region
        _
      $region20: #{hpb_forward.4} parent=11 // pred_fallthru
        _
      // Predicated region
      $region21: #{hpb_forward.4} parent=11 // pred_check
        %p639 = pneg %p199
      $region22: #{hpb_forward.4} parent=11 // pred_check_branch
        %641 = sbr.rel (%p639) target = $region24
      $region23: #{hpb_forward.4} parent=11 // pred_region
        _
      $region24: #{hpb_forward.4} parent=11 // pred_fallthru
        _
      // Predicated region
      $region25: #{hpb_forward.4} parent=11 // pred_check
        %p642 = pneg %p220
      $region26: #{hpb_forward.4} parent=11 // pred_check_branch
        %644 = sbr.rel (%p642) target = $region28
      $region27: #{hpb_forward.4} parent=11 // pred_region
        _
      $region28: #{hpb_forward.4} parent=11 // pred_fallthru
        _
      // Predicated region
      $region29: #{hpb_forward.4} parent=11 // pred_check
        %p645 = pneg %p241
      $region30: #{hpb_forward.4} parent=11 // pred_check_branch
        %647 = sbr.rel (%p645) target = $region32
      $region31: #{hpb_forward.4} parent=11 // pred_region
        _
      $region32: #{hpb_forward.4} parent=11 // pred_fallthru
        _
      // Predicated region
      $region33: #{hpb_forward.4} parent=11 // pred_check
        %p648 = pneg %p262
      $region34: #{hpb_forward.4} parent=11 // pred_check_branch
        %650 = sbr.rel (%p648) target = $region36
      $region35: #{hpb_forward.4} parent=11 // pred_region
        _
      $region36: #{hpb_forward.4} parent=11 // pred_fallthru
        _
      // Predicated region
      $region37: #{hpb_forward.4} parent=11 // pred_check
        %p651 = pneg %p283
      $region38: #{hpb_forward.4} parent=11 // pred_check_branch
        %653 = sbr.rel (%p651) target = $region40
      $region39: #{hpb_forward.4} parent=11 // pred_region
        _
      $region40: #{hpb_forward.4} parent=11 // pred_fallthru
        _
      // Predicated region
      $region41: #{hpb_forward.4} parent=11 // pred_check
        %p654 = pneg %p304
      $region42: #{hpb_forward.4} parent=11 // pred_check_branch
        %656 = sbr.rel (%p654) target = $region44
      $region43: #{hpb_forward.4} parent=11 // pred_region
        _
      $region44: #{hpb_forward.4} parent=11 // pred_fallthru
        _
      // Predicated region
      $region45: #{hpb_forward.4} parent=11 // pred_check
        %p657 = pneg %p325
      $region46: #{hpb_forward.4} parent=11 // pred_check_branch
        %659 = sbr.rel (%p657) target = $region48
      $region47: #{hpb_forward.4} parent=11 // pred_region
        _
      $region48: #{hpb_forward.4} parent=11 // pred_fallthru
        _
      // Predicated region
      $region49: #{hpb_forward.4} parent=11 // pred_check
        %p660 = pneg %p346
      $region50: #{hpb_forward.4} parent=11 // pred_check_branch
        %662 = sbr.rel (%p660) target = $region52
      $region51: #{hpb_forward.4} parent=11 // pred_region
        _
      $region52: #{hpb_forward.4} parent=11 // pred_fallthru
        _
      // Predicated region
      $region53: #{hpb_forward.4} parent=11 // pred_check
        %p663 = pneg %p367
      $region54: #{hpb_forward.4} parent=11 // pred_check_branch
        %665 = sbr.rel (%p663) target = $region56
      $region55: #{hpb_forward.4} parent=11 // pred_region
        _
      $region56: #{hpb_forward.4} parent=11 // pred_fallthru
        _
      // Predicated region
      $region57: #{hpb_forward.4} parent=11 // pred_check
        %p666 = pneg %p388
      $region58: #{hpb_forward.4} parent=11 // pred_check_branch
        %668 = sbr.rel (%p666) target = $region60
      $region59: #{hpb_forward.4} parent=11 // pred_region
        _
      $region60: #{hpb_forward.4} parent=11 // pred_fallthru
        _
      // Predicated region
      $region61: #{hpb_forward.4} parent=11 // pred_check
        %p669 = pneg %p409
      $region62: #{hpb_forward.4} parent=11 // pred_check_branch
        %671 = sbr.rel (%p669) target = $region64
      $region63: #{hpb_forward.4} parent=11 // pred_region
        _
      $region64: #{hpb_forward.4} parent=11 // pred_fallthru
        _
      // Predicated region
      $region65: #{hpb_forward.4} parent=11 // pred_check
        %p672 = pneg %p430
      $region66: #{hpb_forward.4} parent=11 // pred_check_branch
        %674 = sbr.rel (%p672) target = $region68
      $region67: #{hpb_forward.4} parent=11 // pred_region
        _
      $region68: #{hpb_forward.4} parent=11 // pred_fallthru
        _
      // Predicated region
      $region69: #{hpb_forward.4} parent=11 // pred_check
        %p675 = pneg %p451
      $region70: #{hpb_forward.4} parent=11 // pred_check_branch
        %677 = sbr.rel (%p675) target = $region72
      $region71: #{hpb_forward.4} parent=11 // pred_region
        _
      $region72: #{hpb_forward.4} parent=11 // pred_fallthru
        _
      // Predicated region
      $region73: #{hpb_forward.4} parent=11 // pred_check
        %p678 = pneg %p472
      $region74: #{hpb_forward.4} parent=11 // pred_check_branch
        %680 = sbr.rel (%p678) target = $region76
      $region75: #{hpb_forward.4} parent=11 // pred_region
        _
      $region76: #{hpb_forward.4} parent=11 // pred_fallthru
        _
      // Predicated region
      $region77: #{hpb_forward.4} parent=11 // pred_check
        %p681 = pneg %p493
      $region78: #{hpb_forward.4} parent=11 // pred_check_branch
        %683 = sbr.rel (%p681) target = $region80
      $region79: #{hpb_forward.4} parent=11 // pred_region
        _
      $region80: #{hpb_forward.4} parent=11 // pred_fallthru
        _
      // Predicated region
      $region81: #{hpb_forward.4} parent=11 // pred_check
        %p684 = pneg %p514
      $region82: #{hpb_forward.4} parent=11 // pred_check_branch
        %686 = sbr.rel (%p684) target = $region84
      $region83: #{hpb_forward.4} parent=11 // pred_region
        _
      $region84: #{hpb_forward.4} parent=11 // pred_fallthru
        _
    $region12: #{hpb_forward.4} parent=5 // pred_fallthru
      _
    %p687 = scmp.lt.s32.totalorder %s32, 2
    // Predicated region
    $region85: #{hpb_forward.4} parent=5 // pred_check
      %p688 = pneg %p687
    $region86: #{hpb_forward.4} parent=5 // pred_check_branch
      %690 = sbr.rel (%p688) target = $region88
    $region87: #{hpb_forward.4} parent=5 // pred_region
      // Predicated region
      $region89: #{hpb_forward.4} parent=87 // pred_check
        %p691 = pneg %p52
      $region90: #{hpb_forward.4} parent=87 // pred_check_branch
        %693 = sbr.rel (%p691) target = $region92
      $region91: #{hpb_forward.4} parent=87 // pred_region
        %p694 = scmp.lt.s32.totalorder %s32, 1
        %s695 = scalar_select %p694, %s32, 1
        %s696 = smul.addr %s695, 4
        %s697 = scalar_lea.vmem %s0, %s696
      $region92: #{hpb_forward.4} parent=87 // pred_fallthru
        _
      // Predicated region
      $region93: #{hpb_forward.4} parent=87 // pred_check
        %p698 = pneg %p78
      $region94: #{hpb_forward.4} parent=87 // pred_check_branch
        %700 = sbr.rel (%p698) target = $region96
      $region95: #{hpb_forward.4} parent=87 // pred_region
        %p701 = scmp.lt.s32.totalorder %s32, 1
        %s702 = scalar_select %p701, %s32, 1
        %s703 = smul.addr %s702, 4
        %s704 = scalar_lea.vmem %s1, %s703
      $region96: #{hpb_forward.4} parent=87 // pred_fallthru
        _
      // Predicated region
      $region97: #{hpb_forward.4} parent=87 // pred_check
        %p705 = pneg %p104
      $region98: #{hpb_forward.4} parent=87 // pred_check_branch
        %707 = sbr.rel (%p705) target = $region100
      $region99: #{hpb_forward.4} parent=87 // pred_region
        %p708 = scmp.lt.s32.totalorder %s32, 1
        %s709 = scalar_select %p708, %s32, 1
        %s710 = smul.addr %s709, 4
        %s711 = scalar_lea.vmem %s2, %s710
      $region100: #{hpb_forward.4} parent=87 // pred_fallthru
        _
      // Predicated region
      $region101: #{hpb_forward.4} parent=87 // pred_check
        %p712 = pneg %p130
      $region102: #{hpb_forward.4} parent=87 // pred_check_branch
        %714 = sbr.rel (%p712) target = $region104
      $region103: #{hpb_forward.4} parent=87 // pred_region
        %p715 = scmp.lt.s32.totalorder %s32, 1
        %s716 = scalar_select %p715, %s32, 1
        %s717 = smul.addr %s716, 4
        %s718 = scalar_lea.vmem %s3, %s717
      $region104: #{hpb_forward.4} parent=87 // pred_fallthru
        _
    $region88: #{hpb_forward.4} parent=5 // pred_fallthru
      _
    %p719 = scmp.le.s32.totalorder 1, %s32
    %p720 = scmp.lt.s32.totalorder %s32, 3
    %p721 = pnand %p719, %p720
    %p722 = pneg %p721
    // Predicated region
    $region105: #{hpb_forward.4} parent=5 // pred_check
      _
    $region106: #{hpb_forward.4} parent=5 // pred_check_branch
      %724 = sbr.rel (%p721) target = $region108
    $region107: #{hpb_forward.4} parent=5 // pred_region
      %s725 = ssub.s32 %s32, 1
      %p726 = scmp.lt.s32.totalorder %s37, 1
      %s727 = scalar_select %p726, %s37, 1
      %s728 = smul.addr %s727, 4
      %s729 = scalar_lea.vmem %s0, %s728
      %p730 = pneg %p58
      %p731 = pneg %p55
      %p732 = scmp.lt.s32.totalorder %s37, 1
      %s733 = scalar_select %p732, %s37, 1
      %s734 = smul.addr %s733, 4
      %s735 = scalar_lea.vmem %s1, %s734
      %p736 = pneg %p84
      %p737 = pneg %p81
      %p738 = scmp.lt.s32.totalorder %s37, 1
      %s739 = scalar_select %p738, %s37, 1
      %s740 = smul.addr %s739, 4
      %s741 = scalar_lea.vmem %s2, %s740
      %p742 = pneg %p110
      %p743 = pneg %p107
      %p744 = scmp.lt.s32.totalorder %s37, 1
      %s745 = scalar_select %p744, %s37, 1
      %s746 = smul.addr %s745, 4
      %s747 = scalar_lea.vmem %s3, %s746
      %p748 = pneg %p136
      %p749 = pneg %p133
      %p750 = pneg %p157
      %p751 = pneg %p154
      %p752 = pneg %p178
      %p753 = pneg %p175
      %p754 = pneg %p199
      %p755 = pneg %p196
      %p756 = pneg %p220
      %p757 = pneg %p217
      %p758 = pneg %p241
      %p759 = pneg %p238
      %p760 = pneg %p262
      %p761 = pneg %p259
      %p762 = pneg %p283
      %p763 = pneg %p280
      %p764 = pneg %p304
      %p765 = pneg %p301
      %p766 = pneg %p325
      %p767 = pneg %p322
      %p768 = pneg %p346
      %p769 = pneg %p343
      %p770 = pneg %p367
      %p771 = pneg %p364
      %p772 = pneg %p388
      %p773 = pneg %p385
      %p774 = pneg %p409
      %p775 = pneg %p406
      %p776 = pneg %p430
      %p777 = pneg %p427
      %p778 = pneg %p451
      %p779 = pneg %p448
      %p780 = pneg %p472
      %p781 = pneg %p469
      %p782 = pneg %p493
      %p783 = pneg %p490
      %p784 = pneg %p514
      %p785 = pneg %p511
      %p786 = pneg %p540
      %p787 = pneg %p537
      %p788 = scmp.lt.s32.totalorder %s37, 1
      %s789 = scalar_select %p788, %s37, 1
      %s790 = smul.addr %s789, 2
      %s791 = smul.addr %s790, 4
      %s792 = scalar_lea.vmem %s22, %s791
      %p793 = pneg %p566
      %p794 = pneg %p563
      %p795 = scmp.lt.s32.totalorder %s37, 1
      %s796 = scalar_select %p795, %s37, 1
      %s797 = smul.addr %s796, 2
      %s798 = smul.addr %s797, 4
      %s799 = scalar_lea.vmem %s23, %s798
      %p800 = pneg %p592
      %p801 = pneg %p589
      %p802 = scmp.lt.s32.totalorder %s37, 1
      %s803 = scalar_select %p802, %s37, 1
      %s804 = smul.addr %s803, 4
      %s805 = scalar_lea.vmem %s24, %s804
      %p806 = pneg %p618
      %p807 = pneg %p615
      %p808 = scmp.lt.s32.totalorder %s37, 1
      %s809 = scalar_select %p808, %s37, 1
      %s810 = smul.addr %s809, 4
      %s811 = scalar_lea.vmem %s25, %s810
      %p812 = scmp.lt.s32.totalorder %s37, 1
      %s813 = scalar_select %p812, %s37, 1
      %s814 = smul.addr %s813, 4
      %s815 = scalar_lea.vmem %s0, %s814
      %p816 = scmp.lt.s32.totalorder %s37, 1
      %s817 = scalar_select %p816, %s37, 1
      %s818 = smul.addr %s817, 4
      %s819 = scalar_lea.vmem %s1, %s818
      %p820 = scmp.lt.s32.totalorder %s37, 1
      %s821 = scalar_select %p820, %s37, 1
      %s822 = smul.addr %s821, 4
      %s823 = scalar_lea.vmem %s2, %s822
      %p824 = scmp.lt.s32.totalorder %s37, 1
      %s825 = scalar_select %p824, %s37, 1
      %s826 = smul.addr %s825, 4
      %s827 = scalar_lea.vmem %s3, %s826
      %p828 = scmp.lt.s32.totalorder %s37, 1
      %s829 = scalar_select %p828, %s37, 1
      %s830 = smul.addr %s829, 2
      %s831 = smul.addr %s830, 4
      %s832 = scalar_lea.vmem %s22, %s831
      %p833 = scmp.lt.s32.totalorder %s37, 1
      %s834 = scalar_select %p833, %s37, 1
      %s835 = smul.addr %s834, 2
      %s836 = smul.addr %s835, 4
      %s837 = scalar_lea.vmem %s23, %s836
      %p838 = scmp.lt.s32.totalorder %s37, 1
      %s839 = scalar_select %p838, %s37, 1
      %s840 = smul.addr %s839, 4
      %s841 = scalar_lea.vmem %s24, %s840
      %p842 = scmp.lt.s32.totalorder %s37, 1
      %s843 = scalar_select %p842, %s37, 1
      %s844 = smul.addr %s843, 4
      %s845 = scalar_lea.vmem %s25, %s844
      %v846 = vld [vmem:[%s815] sm:$0xf]
      %v847 = vld [vmem:[%s10] sm:$0xf]
      %v848 = vld [vmem:[%s11] sm:$0xf]
      %850 = vset.pattern.permute.xlu0 0
      %851 = vperm.xlu0 %850, %v848
      %v852 = vpop.permute.xlu0 %851
      %vm854 = vcmask 31744
      %v856 = vsel %vm854, %v847, 0
      %vm858 = vcmask 1043456
      %v860 = vsel %vm858, %v846, 0
      %862 = vmatprep.subr.mxu0 0.0
      %863 = vmatpush1.msra.mxu0 %v860
      %864 = vmatprep.subr.mxu0 0.0
      %865 = vmatpush1.msra.mxu0 0.0
      %866 = vmatprep.subr.mxu0 0.0
      %867 = vmatpush1.msra.mxu0 0.0
      %868 = vmatprep.subr.mxu0 0.0
      %869 = vmatpush1.msra.mxu0 0.0
      %870 = vmatprep.subr.mxu0 0.0
      %871 = vmatpush1.msra.mxu0 0.0
      %872 = vmatprep.subr.mxu0 0.0
      %873 = vmatpush1.msra.mxu0 0.0
      %874 = vmatprep.subr.mxu0 0.0
      %875 = vmatpush1.msra.mxu0 0.0
      %876 = vmatprep.subr.mxu0 0.0
      %877 = vmatpush1.msra.mxu0 0.0
      %878 = vmatprep.subr.mxu0 0.0
      %879 = vmatpush1.msra.mxu0 0.0
      %880 = vmatprep.subr.mxu0 0.0
      %881 = vmatpush1.msra.mxu0 0.0
      %882 = vmatprep.subr.mxu0 0.0
      %883 = vmatpush1.msra.mxu0 0.0
      %884 = vmatprep.subr.mxu0 0.0
      %885 = vmatpush1.msra.mxu0 0.0
      %886 = vmatprep.subr.mxu0 0.0
      %887 = vmatpush1.msra.mxu0 0.0
      %888 = vmatprep.subr.mxu0 0.0
      %889 = vmatpush1.msra.mxu0 0.0
      %890 = vmatprep.subr.mxu0 0.0
      %891 = vmatpush1.msra.mxu0 0.0
      %892 = vmatprep.subr.mxu0 0.0
      %893 = vmatpush1.msra.mxu0 0.0
      %894 = vmatprep.subr.mxu0 0.0
      %895 = vmatpush1.msra.mxu0 0.0
      %896 = vmatprep.subr.mxu0 0.0
      %897 = vmatpush1.msra.mxu0 0.0
      %898 = vmatprep.subr.mxu0 0.0
      %899 = vmatpush1.msra.mxu0 0.0
      %900 = vmatprep.subr.mxu0 0.0
      %901 = vmatpush1.msra.mxu0 0.0
      %902 = vmatprep.subr.mxu0 0.0
      %903 = vmatpush1.msra.mxu0 0.0
      %904 = vmatprep.subr.mxu0 0.0
      %905 = vmatpush1.msra.mxu0 0.0
      %906 = vmatprep.subr.mxu0 0.0
      %907 = vmatpush1.msra.mxu0 0.0
      %908 = vmatprep.subr.mxu0 0.0
      %909 = vmatpush1.msra.mxu0 0.0
      %910 = vmatprep.subr.mxu0 0.0
      %911 = vmatpush1.msra.mxu0 0.0
      %912 = vmatprep.subr.mxu0 0.0
      %913 = vmatpush1.msra.mxu0 0.0
      %914 = vmatprep.subr.mxu0 0.0
      %915 = vmatpush1.msra.mxu0 0.0
      %916 = vmatprep.subr.mxu0 0.0
      %917 = vmatpush1.msra.mxu0 0.0
      %918 = vmatprep.subr.mxu0 0.0
      %919 = vmatpush1.msra.mxu0 0.0
      %920 = vmatprep.subr.mxu0 0.0
      %921 = vmatpush1.msra.mxu0 0.0
      %922 = vmatprep.subr.mxu0 0.0
      %923 = vmatpush1.msra.mxu0 0.0
      %924 = vmatprep.subr.mxu0 0.0
      %925 = vmatpush1.msra.mxu0 0.0
      %926 = vmatprep.mubr.f32.mxu0 0.0
      %927 = vmatmul.mubr.f32.gmra.mrb[0].mxu0 %v856
      %v928 = vpop.f32.mrb[0].mxu0
      %v929 = vadd.f32 %v852, %v928
      %v930 = vpop.f32.mrb[0].mxu0
      %931 = vdwg.mxu0
      %v932 = vld [vmem:[%s823] sm:$0xf]
      %v933 = vld [vmem:[%s4] sm:$0xf]
      %935 = vset.pattern.permute.xlu0 0
      %936 = vperm.xlu0 %935, %v933
      %v937 = vpop.permute.xlu0 %936
      %v939 = vmul.f32 %v932, %v937
      %v940 = vld [vmem:[%s5] sm:$0xf]
      %942 = vset.pattern.permute.xlu0 0
      %943 = vperm.xlu0 %942, %v940
      %v944 = vpop.permute.xlu0 %943
      %v946 = vadd.f32 %v939, %v944
      %v947 = vld [vmem:[%s827] sm:$0xf]
      %v948 = vld [vmem:[%s6] sm:$0xf]
      %950 = vset.pattern.permute.xlu0 0
      %951 = vperm.xlu0 %950, %v948
      %v952 = vpop.permute.xlu0 %951
      %v954 = vmul.f32 %v947, %v952
      %v955 = vld [vmem:[%s7] sm:$0xf]
      %957 = vset.pattern.permute.xlu0 0
      %958 = vperm.xlu0 %957, %v955
      %v959 = vpop.permute.xlu0 %958
      %v961 = vadd.f32 %v954, %v959
      %v962 = vld [vmem:[%s8] sm:$0xf]
      %v963 = vadd.f32 %v946, %v961
      %v964 = vld [vmem:[%s9] sm:$0xf]
      %966 = vset.pattern.permute.xlu0 0
      %967 = vperm.xlu0 %966, %v964
      %v968 = vpop.permute.xlu0 %967
      %v971 = vsel %vm854, %v962, 0
      %v974 = vsel %vm858, %v963, 0
      %976 = vmatprep.subr.mxu0 0.0
      %977 = vmatpush1.msra.mxu0 %v974
      %978 = vmatprep.subr.mxu0 0.0
      %979 = vmatpush1.msra.mxu0 0.0
      %980 = vmatprep.subr.mxu0 0.0
      %981 = vmatpush1.msra.mxu0 0.0
      %982 = vmatprep.subr.mxu0 0.0
      %983 = vmatpush1.msra.mxu0 0.0
      %984 = vmatprep.subr.mxu0 0.0
      %985 = vmatpush1.msra.mxu0 0.0
      %986 = vmatprep.subr.mxu0 0.0
      %987 = vmatpush1.msra.mxu0 0.0
      %988 = vmatprep.subr.mxu0 0.0
      %989 = vmatpush1.msra.mxu0 0.0
      %990 = vmatprep.subr.mxu0 0.0
      %991 = vmatpush1.msra.mxu0 0.0
      %992 = vmatprep.subr.mxu0 0.0
      %993 = vmatpush1.msra.mxu0 0.0
      %994 = vmatprep.subr.mxu0 0.0
      %995 = vmatpush1.msra.mxu0 0.0
      %996 = vmatprep.subr.mxu0 0.0
      %997 = vmatpush1.msra.mxu0 0.0
      %998 = vmatprep.subr.mxu0 0.0
      %999 = vmatpush1.msra.mxu0 0.0
      %1000 = vmatprep.subr.mxu0 0.0
      %1001 = vmatpush1.msra.mxu0 0.0
      %1002 = vmatprep.subr.mxu0 0.0
      %1003 = vmatpush1.msra.mxu0 0.0
      %1004 = vmatprep.subr.mxu0 0.0
      %1005 = vmatpush1.msra.mxu0 0.0
      %1006 = vmatprep.subr.mxu0 0.0
      %1007 = vmatpush1.msra.mxu0 0.0
      %1008 = vmatprep.subr.mxu0 0.0
      %1009 = vmatpush1.msra.mxu0 0.0
      %1010 = vmatprep.subr.mxu0 0.0
      %1011 = vmatpush1.msra.mxu0 0.0
      %1012 = vmatprep.subr.mxu0 0.0
      %1013 = vmatpush1.msra.mxu0 0.0
      %1014 = vmatprep.subr.mxu0 0.0
      %1015 = vmatpush1.msra.mxu0 0.0
      %1016 = vmatprep.subr.mxu0 0.0
      %1017 = vmatpush1.msra.mxu0 0.0
      %1018 = vmatprep.subr.mxu0 0.0
      %1019 = vmatpush1.msra.mxu0 0.0
      %1020 = vmatprep.subr.mxu0 0.0
      %1021 = vmatpush1.msra.mxu0 0.0
      %1022 = vmatprep.subr.mxu0 0.0
      %1023 = vmatpush1.msra.mxu0 0.0
      %1024 = vmatprep.subr.mxu0 0.0
      %1025 = vmatpush1.msra.mxu0 0.0
      %1026 = vmatprep.subr.mxu0 0.0
      %1027 = vmatpush1.msra.mxu0 0.0
      %1028 = vmatprep.subr.mxu0 0.0
      %1029 = vmatpush1.msra.mxu0 0.0
      %1030 = vmatprep.subr.mxu0 0.0
      %1031 = vmatpush1.msra.mxu0 0.0
      %1032 = vmatprep.subr.mxu0 0.0
      %1033 = vmatpush1.msra.mxu0 0.0
      %1034 = vmatprep.subr.mxu0 0.0
      %1035 = vmatpush1.msra.mxu0 0.0
      %1036 = vmatprep.subr.mxu0 0.0
      %1037 = vmatpush1.msra.mxu0 0.0
      %1038 = vmatprep.subr.mxu0 0.0
      %1039 = vmatpush1.msra.mxu0 0.0
      %1040 = vmatprep.mubr.f32.mxu0 0.0
      %1041 = vmatmul.mubr.f32.gmra.mrb[0].mxu0 %v971
      %v1042 = vpop.f32.mrb[0].mxu0
      %v1043 = vadd.f32 %v968, %v1042
      %v1044 = vpop.f32.mrb[0].mxu0
      %1045 = vdwg.mxu0
      %v1046 = vld [vmem:[%s819] sm:$0xf]
      %1047 = vxpose.xlu0.b32.start [1/16] %v1046, 128
      %1048 = vxpose.xlu0.b32.cont [2/16] 0.0, 128
      %1049 = vxpose.xlu0.b32.cont [3/16] 0.0, 128
      %1050 = vxpose.xlu0.b32.cont [4/16] 0.0, 128
      %1051 = vxpose.xlu0.b32.cont [5/16] 0.0, 128
      %1052 = vxpose.xlu0.b32.cont [6/16] 0.0, 128
      %1053 = vxpose.xlu0.b32.cont [7/16] 0.0, 128
      %1054 = vxpose.xlu0.b32.cont [8/16] 0.0, 128
      %1055 = vxpose.xlu0.b32.cont [9/16] 0.0, 128
      %1056 = vxpose.xlu0.b32.cont [10/16] 0.0, 128
      %1057 = vxpose.xlu0.b32.cont [11/16] 0.0, 128
      %1058 = vxpose.xlu0.b32.cont [12/16] 0.0, 128
      %1059 = vxpose.xlu0.b32.cont [13/16] 0.0, 128
      %1060 = vxpose.xlu0.b32.cont [14/16] 0.0, 128
      %1061 = vxpose.xlu0.b32.cont [15/16] 0.0, 128
      %1062 = vxpose.xlu0.b32.end [16/16] 0.0, 128
      %v1063 = vpop.trf.xlu0
      %v1064 = vpop.trf.xlu0
      %v1065 = vpop.trf.xlu0
      %v1066 = vpop.trf.xlu0
      %v1067 = vpop.trf.xlu0
      %v1068 = vpop.trf.xlu0
      %v1069 = vpop.trf.xlu0
      %v1070 = vpop.trf.xlu0
      %v1071 = vpop.trf.xlu0
      %v1072 = vpop.trf.xlu0
      %v1073 = vpop.trf.xlu0
      %v1074 = vpop.trf.xlu0
      %v1075 = vpop.trf.xlu0
      %v1076 = vpop.trf.xlu0
      %v1077 = vpop.trf.xlu0
      %v1078 = vpop.trf.xlu0
      %v1080 = vsel %vm854, %v1063, 0
      %v1083 = vsel %vm854, %v1064, 0
      %v1086 = vsel %vm854, %v1065, 0
      %v1089 = vsel %vm854, %v1066, 0
      %v1092 = vsel %vm854, %v1067, 0
      %v1095 = vsel %vm854, %v1068, 0
      %v1098 = vsel %vm854, %v1069, 0
      %v1101 = vsel %vm854, %v1070, 0
      %v1104 = vsel %vm858, %v1043, 0
      %1106 = vmatprep.subr.mxu0 0.0
      %1107 = vmatpush1.msra.mxu0 %v1104
      %1108 = vmatprep.subr.mxu0 0.0
      %1109 = vmatpush1.msra.mxu0 0.0
      %1110 = vmatprep.subr.mxu0 0.0
      %1111 = vmatpush1.msra.mxu0 0.0
      %1112 = vmatprep.subr.mxu0 0.0
      %1113 = vmatpush1.msra.mxu0 0.0
      %1114 = vmatprep.subr.mxu0 0.0
      %1115 = vmatpush1.msra.mxu0 0.0
      %1116 = vmatprep.subr.mxu0 0.0
      %1117 = vmatpush1.msra.mxu0 0.0
      %1118 = vmatprep.subr.mxu0 0.0
      %1119 = vmatpush1.msra.mxu0 0.0
      %1120 = vmatprep.subr.mxu0 0.0
      %1121 = vmatpush1.msra.mxu0 0.0
      %1122 = vmatprep.subr.mxu0 0.0
      %1123 = vmatpush1.msra.mxu0 0.0
      %1124 = vmatprep.subr.mxu0 0.0
      %1125 = vmatpush1.msra.mxu0 0.0
      %1126 = vmatprep.subr.mxu0 0.0
      %1127 = vmatpush1.msra.mxu0 0.0
      %1128 = vmatprep.subr.mxu0 0.0
      %1129 = vmatpush1.msra.mxu0 0.0
      %1130 = vmatprep.subr.mxu0 0.0
      %1131 = vmatpush1.msra.mxu0 0.0
      %1132 = vmatprep.subr.mxu0 0.0
      %1133 = vmatpush1.msra.mxu0 0.0
      %1134 = vmatprep.subr.mxu0 0.0
      %1135 = vmatpush1.msra.mxu0 0.0
      %1136 = vmatprep.subr.mxu0 0.0
      %1137 = vmatpush1.msra.mxu0 0.0
      %1138 = vmatprep.subr.mxu0 0.0
      %1139 = vmatpush1.msra.mxu0 0.0
      %1140 = vmatprep.subr.mxu0 0.0
      %1141 = vmatpush1.msra.mxu0 0.0
      %1142 = vmatprep.subr.mxu0 0.0
      %1143 = vmatpush1.msra.mxu0 0.0
      %1144 = vmatprep.subr.mxu0 0.0
      %1145 = vmatpush1.msra.mxu0 0.0
      %1146 = vmatprep.subr.mxu0 0.0
      %1147 = vmatpush1.msra.mxu0 0.0
      %1148 = vmatprep.subr.mxu0 0.0
      %1149 = vmatpush1.msra.mxu0 0.0
      %1150 = vmatprep.subr.mxu0 0.0
      %1151 = vmatpush1.msra.mxu0 0.0
      %1152 = vmatprep.subr.mxu0 0.0
      %1153 = vmatpush1.msra.mxu0 0.0
      %1154 = vmatprep.subr.mxu0 0.0
      %1155 = vmatpush1.msra.mxu0 0.0
      %1156 = vmatprep.subr.mxu0 0.0
      %1157 = vmatpush1.msra.mxu0 0.0
      %1158 = vmatprep.subr.mxu0 0.0
      %1159 = vmatpush1.msra.mxu0 0.0
      %1160 = vmatprep.subr.mxu0 0.0
      %1161 = vmatpush1.msra.mxu0 0.0
      %1162 = vmatprep.subr.mxu0 0.0
      %1163 = vmatpush1.msra.mxu0 0.0
      %1164 = vmatprep.subr.mxu0 0.0
      %1165 = vmatpush1.msra.mxu0 0.0
      %1166 = vmatprep.subr.mxu0 0.0
      %1167 = vmatpush1.msra.mxu0 0.0
      %1168 = vmatprep.subr.mxu0 0.0
      %1169 = vmatpush1.msra.mxu0 0.0
      %1170 = vmatprep.mubr.f32.mxu0 0.0
      %1171 = vmatmul.mubr.f32.gmra.mrb[0].mxu0 %v1080
      %v1172 = vpop.f32.mrb[0].mxu0
      %v1173 = vadd.f32 0.0, %v1172
      %v1174 = vpop.f32.mrb[0].mxu0
      %1175 = vmatprep.mubr.f32.mxu0 0.0
      %1176 = vmatmul.mubr.f32.gmra.mrb[0].mxu0 %v1083
      %v1177 = vpop.f32.mrb[0].mxu0
      %v1178 = vadd.f32 0.0, %v1177
      %v1179 = vpop.f32.mrb[0].mxu0
      %1180 = vmatprep.mubr.f32.mxu0 0.0
      %1181 = vmatmul.mubr.f32.gmra.mrb[0].mxu0 %v1086
      %v1182 = vpop.f32.mrb[0].mxu0
      %v1183 = vadd.f32 0.0, %v1182
      %v1184 = vpop.f32.mrb[0].mxu0
      %1185 = vmatprep.mubr.f32.mxu0 0.0
      %1186 = vmatmul.mubr.f32.gmra.mrb[0].mxu0 %v1089
      %v1187 = vpop.f32.mrb[0].mxu0
      %v1188 = vadd.f32 0.0, %v1187
      %v1189 = vpop.f32.mrb[0].mxu0
      %1190 = vmatprep.mubr.f32.mxu0 0.0
      %1191 = vmatmul.mubr.f32.gmra.mrb[0].mxu0 %v1092
      %v1192 = vpop.f32.mrb[0].mxu0
      %v1193 = vadd.f32 0.0, %v1192
      %v1194 = vpop.f32.mrb[0].mxu0
      %1195 = vmatprep.mubr.f32.mxu0 0.0
      %1196 = vmatmul.mubr.f32.gmra.mrb[0].mxu0 %v1095
      %v1197 = vpop.f32.mrb[0].mxu0
      %v1198 = vadd.f32 0.0, %v1197
      %v1199 = vpop.f32.mrb[0].mxu0
      %1200 = vmatprep.mubr.f32.mxu0 0.0
      %1201 = vmatmul.mubr.f32.gmra.mrb[0].mxu0 %v1098
      %v1202 = vpop.f32.mrb[0].mxu0
      %v1203 = vadd.f32 0.0, %v1202
      %v1204 = vpop.f32.mrb[0].mxu0
      %1205 = vmatprep.mubr.f32.mxu0 0.0
      %1206 = vmatmul.mubr.f32.gmra.mrb[0].mxu0 %v1101
      %v1207 = vpop.f32.mrb[0].mxu0
      %v1208 = vadd.f32 0.0, %v1207
      %v1209 = vpop.f32.mrb[0].mxu0
      %1210 = vdwg.mxu0
      %v1211 = vmul.f32 %v1173, 0.5
      %v1212 = vmul.f32 %v1178, 0.5
      %v1213 = vmul.f32 %v1183, 0.5
      %v1214 = vmul.f32 %v1188, 0.5
      %v1215 = vmul.f32 %v1193, 0.5
      %v1216 = vmul.f32 %v1198, 0.5
      %v1217 = vmul.f32 %v1203, 0.5
      %v1218 = vmul.f32 %v1208, 0.5
      %vm1219 = vcmask 523264
      %v1220 = vsel %vm1219, %v1211, -inf
      %v1221 = vsel %vm1219, %v1212, -inf
      %v1222 = vsel %vm1219, %v1213, -inf
      %v1223 = vsel %vm1219, %v1214, -inf
      %v1224 = vsel %vm1219, %v1215, -inf
      %v1225 = vmax.f32 %v1220, %v1224
      %v1226 = vsel %vm1219, %v1216, -inf
      %v1227 = vmax.f32 %v1221, %v1226
      %v1228 = vsel %vm1219, %v1217, -inf
      %v1229 = vmax.f32 %v1222, %v1228
      %v1230 = vsel %vm1219, %v1218, -inf
      %v1231 = vmax.f32 %v1223, %v1230
      %v1232 = vmax.f32 %v1225, %v1227
      %v1233 = vmax.f32 %v1229, %v1231
      %v1234 = vmax.f32 %v1232, %v1233
      %v1235 = vrot.slane %v1234, 4
      %v1236 = vmax.f32 %v1234, %v1235
      %v1237 = vrot.slane %v1236, 2
      %v1238 = vmax.f32 %v1236, %v1237
      %v1239 = vrot.slane %v1238, 1
      %v1240 = vmax.f32 %v1238, %v1239
      %v1241 = vsub.f32 %v1211, %v1240
      %v1242 = vsub.f32 %v1212, %v1240
      %v1243 = vsub.f32 %v1213, %v1240
      %v1244 = vsub.f32 %v1214, %v1240
      %v1245 = vsub.f32 %v1215, %v1240
      %v1246 = vsub.f32 %v1216, %v1240
      %v1247 = vsub.f32 %v1217, %v1240
      %v1248 = vsub.f32 %v1218, %v1240
      %v1249 = vmul.f32 %v1241, 1.442695
      %v1250 = vpow.pop %v1249
      %v1251 = vmul.f32 %v1242, 1.442695
      %v1252 = vpow.pop %v1251
      %v1253 = vmul.f32 %v1243, 1.442695
      %v1254 = vpow.pop %v1253
      %v1255 = vmul.f32 %v1244, 1.442695
      %v1256 = vpow.pop %v1255
      %v1257 = vmul.f32 %v1245, 1.442695
      %v1258 = vpow.pop %v1257
      %v1259 = vmul.f32 %v1246, 1.442695
      %v1260 = vpow.pop %v1259
      %v1261 = vmul.f32 %v1247, 1.442695
      %v1262 = vpow.pop %v1261
      %v1263 = vmul.f32 %v1248, 1.442695
      %v1264 = vpow.pop %v1263
      %v1265 = vsel %vm1219, %v1250, 0.0
      %v1266 = vsel %vm1219, %v1252, 0.0
      %v1267 = vadd.f32 %v1265, %v1266
      %v1268 = vsel %vm1219, %v1254, 0.0
      %v1269 = vadd.f32 %v1267, %v1268
      %v1270 = vsel %vm1219, %v1256, 0.0
      %v1271 = vadd.f32 %v1269, %v1270
      %v1272 = vsel %vm1219, %v1258, 0.0
      %v1273 = vadd.f32 %v1271, %v1272
      %v1274 = vsel %vm1219, %v1260, 0.0
      %v1275 = vadd.f32 %v1273, %v1274
      %v1276 = vsel %vm1219, %v1262, 0.0
      %v1277 = vadd.f32 %v1275, %v1276
      %v1278 = vsel %vm1219, %v1264, 0.0
      %v1279 = vadd.f32 %v1277, %v1278
      %v1280 = vrot.slane %v1279, 4
      %v1281 = vadd.f32 %v1279, %v1280
      %v1282 = vrot.slane %v1281, 2
      %v1283 = vadd.f32 %v1281, %v1282
      %v1284 = vrot.slane %v1283, 1
      %v1285 = vadd.f32 %v1283, %v1284
      %v1286 = vrcp.pop %v1285
      %v1287 = vmul.f32 %v1250, %v1286
      %v1288 = vmul.f32 %v1252, %v1286
      %v1289 = vmul.f32 %v1254, %v1286
      %v1290 = vmul.f32 %v1256, %v1286
      %v1291 = vmul.f32 %v1258, %v1286
      %v1292 = vmul.f32 %v1260, %v1286
      %v1293 = vmul.f32 %v1262, %v1286
      %v1294 = vmul.f32 %v1264, %v1286
      %v1296 = vsel %vm1219, %v929, 0
      %1298 = vmatprep.subr.mxu0 0.0
      %1299 = vmatpush1.msra.mxu0 %v1287
      %1300 = vmatprep.subr.mxu0 0.0
      %1301 = vmatpush1.msra.mxu0 %v1288
      %1302 = vmatprep.subr.mxu0 0.0
      %1303 = vmatpush1.msra.mxu0 %v1289
      %1304 = vmatprep.subr.mxu0 0.0
      %1305 = vmatpush1.msra.mxu0 %v1290
      %1306 = vmatprep.subr.mxu0 0.0
      %1307 = vmatpush1.msra.mxu0 %v1291
      %1308 = vmatprep.subr.mxu0 0.0
      %1309 = vmatpush1.msra.mxu0 %v1292
      %1310 = vmatprep.subr.mxu0 0.0
      %1311 = vmatpush1.msra.mxu0 %v1293
      %1312 = vmatprep.subr.mxu0 0.0
      %1313 = vmatpush1.msra.mxu0 %v1294
      %1314 = vmatprep.subr.mxu0 0.0
      %1315 = vmatpush1.msra.mxu0 0.0
      %1316 = vmatprep.subr.mxu0 0.0
      %1317 = vmatpush1.msra.mxu0 0.0
      %1318 = vmatprep.subr.mxu0 0.0
      %1319 = vmatpush1.msra.mxu0 0.0
      %1320 = vmatprep.subr.mxu0 0.0
      %1321 = vmatpush1.msra.mxu0 0.0
      %1322 = vmatprep.subr.mxu0 0.0
      %1323 = vmatpush1.msra.mxu0 0.0
      %1324 = vmatprep.subr.mxu0 0.0
      %1325 = vmatpush1.msra.mxu0 0.0
      %1326 = vmatprep.subr.mxu0 0.0
      %1327 = vmatpush1.msra.mxu0 0.0
      %1328 = vmatprep.subr.mxu0 0.0
      %1329 = vmatpush1.msra.mxu0 0.0
      %1330 = vmatprep.subr.mxu0 0.0
      %1331 = vmatpush1.msra.mxu0 0.0
      %1332 = vmatprep.subr.mxu0 0.0
      %1333 = vmatpush1.msra.mxu0 0.0
      %1334 = vmatprep.subr.mxu0 0.0
      %1335 = vmatpush1.msra.mxu0 0.0
      %1336 = vmatprep.subr.mxu0 0.0
      %1337 = vmatpush1.msra.mxu0 0.0
      %1338 = vmatprep.subr.mxu0 0.0
      %1339 = vmatpush1.msra.mxu0 0.0
      %1340 = vmatprep.subr.mxu0 0.0
      %1341 = vmatpush1.msra.mxu0 0.0
      %1342 = vmatprep.subr.mxu0 0.0
      %1343 = vmatpush1.msra.mxu0 0.0
      %1344 = vmatprep.subr.mxu0 0.0
      %1345 = vmatpush1.msra.mxu0 0.0
      %1346 = vmatprep.subr.mxu0 0.0
      %1347 = vmatpush1.msra.mxu0 0.0
      %1348 = vmatprep.subr.mxu0 0.0
      %1349 = vmatpush1.msra.mxu0 0.0
      %1350 = vmatprep.subr.mxu0 0.0
      %1351 = vmatpush1.msra.mxu0 0.0
      %1352 = vmatprep.subr.mxu0 0.0
      %1353 = vmatpush1.msra.mxu0 0.0
      %1354 = vmatprep.subr.mxu0 0.0
      %1355 = vmatpush1.msra.mxu0 0.0
      %1356 = vmatprep.subr.mxu0 0.0
      %1357 = vmatpush1.msra.mxu0 0.0
      %1358 = vmatprep.subr.mxu0 0.0
      %1359 = vmatpush1.msra.mxu0 0.0
      %1360 = vmatprep.subr.mxu0 0.0
      %1361 = vmatpush1.msra.mxu0 0.0
      %1362 = vmatprep.mubr.f32.mxu0 0.0
      %1363 = vmatmul.mubr.f32.gmra.mrb[0].mxu0 %v1296
      %v1364 = vpop.f32.mrb[0].mxu0
      %v1365 = vadd.f32 0.0, %v1364
      %v1366 = vpop.f32.mrb[0].mxu0
      %1367 = vdwg.mxu0
      %v1368 = vld [vmem:[%s12] sm:$0xf]
      %v1369 = vld [vmem:[%s13] sm:$0xf]
      %1371 = vset.pattern.permute.xlu0 0
      %1372 = vperm.xlu0 %1371, %v1369
      %v1373 = vpop.permute.xlu0 %1372
      %v1376 = vsel %vm854, %v1368, 0
      %v1379 = vsel %vm858, %v1365, 0
      %1381 = vmatprep.subr.mxu0 0.0
      %1382 = vmatpush1.msra.mxu0 %v1379
      %1383 = vmatprep.subr.mxu0 0.0
      %1384 = vmatpush1.msra.mxu0 0.0
      %1385 = vmatprep.subr.mxu0 0.0
      %1386 = vmatpush1.msra.mxu0 0.0
      %1387 = vmatprep.subr.mxu0 0.0
      %1388 = vmatpush1.msra.mxu0 0.0
      %1389 = vmatprep.subr.mxu0 0.0
      %1390 = vmatpush1.msra.mxu0 0.0
      %1391 = vmatprep.subr.mxu0 0.0
      %1392 = vmatpush1.msra.mxu0 0.0
      %1393 = vmatprep.subr.mxu0 0.0
      %1394 = vmatpush1.msra.mxu0 0.0
      %1395 = vmatprep.subr.mxu0 0.0
      %1396 = vmatpush1.msra.mxu0 0.0
      %1397 = vmatprep.subr.mxu0 0.0
      %1398 = vmatpush1.msra.mxu0 0.0
      %1399 = vmatprep.subr.mxu0 0.0
      %1400 = vmatpush1.msra.mxu0 0.0
      %1401 = vmatprep.subr.mxu0 0.0
      %1402 = vmatpush1.msra.mxu0 0.0
      %1403 = vmatprep.subr.mxu0 0.0
      %1404 = vmatpush1.msra.mxu0 0.0
      %1405 = vmatprep.subr.mxu0 0.0
      %1406 = vmatpush1.msra.mxu0 0.0
      %1407 = vmatprep.subr.mxu0 0.0
      %1408 = vmatpush1.msra.mxu0 0.0
      %1409 = vmatprep.subr.mxu0 0.0
      %1410 = vmatpush1.msra.mxu0 0.0
      %1411 = vmatprep.subr.mxu0 0.0
      %1412 = vmatpush1.msra.mxu0 0.0
      %1413 = vmatprep.subr.mxu0 0.0
      %1414 = vmatpush1.msra.mxu0 0.0
      %1415 = vmatprep.subr.mxu0 0.0
      %1416 = vmatpush1.msra.mxu0 0.0
      %1417 = vmatprep.subr.mxu0 0.0
      %1418 = vmatpush1.msra.mxu0 0.0
      %1419 = vmatprep.subr.mxu0 0.0
      %1420 = vmatpush1.msra.mxu0 0.0
      %1421 = vmatprep.subr.mxu0 0.0
      %1422 = vmatpush1.msra.mxu0 0.0
      %1423 = vmatprep.subr.mxu0 0.0
      %1424 = vmatpush1.msra.mxu0 0.0
      %1425 = vmatprep.subr.mxu0 0.0
      %1426 = vmatpush1.msra.mxu0 0.0
      %1427 = vmatprep.subr.mxu0 0.0
      %1428 = vmatpush1.msra.mxu0 0.0
      %1429 = vmatprep.subr.mxu0 0.0
      %1430 = vmatpush1.msra.mxu0 0.0
      %1431 = vmatprep.subr.mxu0 0.0
      %1432 = vmatpush1.msra.mxu0 0.0
      %1433 = vmatprep.subr.mxu0 0.0
      %1434 = vmatpush1.msra.mxu0 0.0
      %1435 = vmatprep.subr.mxu0 0.0
      %1436 = vmatpush1.msra.mxu0 0.0
      %1437 = vmatprep.subr.mxu0 0.0
      %1438 = vmatpush1.msra.mxu0 0.0
      %1439 = vmatprep.subr.mxu0 0.0
      %1440 = vmatpush1.msra.mxu0 0.0
      %1441 = vmatprep.subr.mxu0 0.0
      %1442 = vmatpush1.msra.mxu0 0.0
      %1443 = vmatprep.subr.mxu0 0.0
      %1444 = vmatpush1.msra.mxu0 0.0
      %1445 = vmatprep.mubr.f32.mxu0 0.0
      %1446 = vmatmul.mubr.f32.gmra.mrb[0].mxu0 %v1376
      %v1447 = vpop.f32.mrb[0].mxu0
      %v1448 = vadd.f32 %v1373, %v1447
      %v1449 = vpop.f32.mrb[0].mxu0
      %1450 = vdwg.mxu0
      %v1451 = vadd.f32 %v1448, %v929
      %vm1452 = vcmask 519168
      %v1453 = vsel %vm1452, %v1451, 0.0
      %v1454 = vrot.slane %v1453, 4
      %v1455 = vadd.f32 %v1453, %v1454
      %v1456 = vrot.slane %v1455, 2
      %v1457 = vadd.f32 %v1455, %v1456
      %v1458 = vrot.slane %v1457, 1
      %v1459 = vadd.f32 %v1457, %v1458
      %v1460 = vrcp.pop 4.0
      %v1461 = vmul.f32 %v1459, %v1460
      %v1462 = vsub.f32 %v1451, %v1461
      %v1463 = vmul.f32 %v1462, %v1462
      %v1464 = vsel %vm1452, %v1463, 0.0
      %v1465 = vrot.slane %v1464, 4
      %v1466 = vadd.f32 %v1464, %v1465
      %v1467 = vrot.slane %v1466, 2
      %v1468 = vadd.f32 %v1466, %v1467
      %v1469 = vrot.slane %v1468, 1
      %v1470 = vadd.f32 %v1468, %v1469
      %v1471 = vmul.f32 %v1470, %v1460
      %v1472 = vadd.f32 %v1471, 1e-05
      %v1473 = vrsqrt.pop %v1472
      %v1474 = vmul.f32 %v1462, %v1473
      %v1475 = vld [vmem:[%s14] sm:$0xf]
      %1477 = vset.pattern.permute.xlu0 0
      %1478 = vperm.xlu0 %1477, %v1475
      %v1479 = vpop.permute.xlu0 %1478
      %v1481 = vmul.f32 %v1474, %v1479
      %v1482 = vld [vmem:[%s15] sm:$0xf]
      %1484 = vset.pattern.permute.xlu0 0
      %1485 = vperm.xlu0 %1484, %v1482
      %v1486 = vpop.permute.xlu0 %1485
      %v1488 = vadd.f32 %v1481, %v1486
      %v1489 = vld [vmem:[%s16] sm:$0xff]
      %v1490 = vld [vmem:[%s16 + $0x8] sm:$0xff]
      %v1491 = vld [vmem:[%s16 + $0x10] sm:$0xff]
      %v1492 = vld [vmem:[%s16 + $0x18] sm:$0xff]
      %v1493 = vld [vmem:[%s16 + $0x20] sm:$0xff]
      %v1494 = vld [vmem:[%s16 + $0x28] sm:$0xff]
      %v1495 = vld [vmem:[%s16 + $0x30] sm:$0xff]
      %v1496 = vld [vmem:[%s16 + $0x38] sm:$0xff]
      %v1497 = vld [vmem:[%s16 + $0x40] sm:$0xff]
      %v1498 = vld [vmem:[%s16 + $0x48] sm:$0xff]
      %v1499 = vld [vmem:[%s16 + $0x50] sm:$0xff]
      %v1500 = vld [vmem:[%s16 + $0x58] sm:$0xff]
      %v1501 = vld [vmem:[%s16 + $0x60] sm:$0xff]
      %v1502 = vld [vmem:[%s16 + $0x68] sm:$0xff]
      %v1503 = vld [vmem:[%s16 + $0x70] sm:$0xff]
      %v1504 = vld [vmem:[%s16 + $0x78] sm:$0xff]
      %v1506 = vsel %vm1219, %v1488, 0
      %1508 = vmatprep.subr.mxu0 %v1490
      %1509 = vmatpush1.msra.mxu0 %v1489
      %1510 = vmatprep.subr.mxu0 %v1492
      %1511 = vmatpush1.msra.mxu0 %v1491
      %1512 = vmatprep.subr.mxu0 %v1494
      %1513 = vmatpush1.msra.mxu0 %v1493
      %1514 = vmatprep.subr.mxu0 %v1496
      %1515 = vmatpush1.msra.mxu0 %v1495
      %1516 = vmatprep.subr.mxu0 %v1498
      %1517 = vmatpush1.msra.mxu0 %v1497
      %1518 = vmatprep.subr.mxu0 %v1500
      %1519 = vmatpush1.msra.mxu0 %v1499
      %1520 = vmatprep.subr.mxu0 %v1502
      %1521 = vmatpush1.msra.mxu0 %v1501
      %1522 = vmatprep.subr.mxu0 %v1504
      %1523 = vmatpush1.msra.mxu0 %v1503
      %1524 = vmatprep.subr.mxu0 0.0
      %1525 = vmatpush1.msra.mxu0 0.0
      %1526 = vmatprep.subr.mxu0 0.0
      %1527 = vmatpush1.msra.mxu0 0.0
      %1528 = vmatprep.subr.mxu0 0.0
      %1529 = vmatpush1.msra.mxu0 0.0
      %1530 = vmatprep.subr.mxu0 0.0
      %1531 = vmatpush1.msra.mxu0 0.0
      %1532 = vmatprep.subr.mxu0 0.0
      %1533 = vmatpush1.msra.mxu0 0.0
      %1534 = vmatprep.subr.mxu0 0.0
      %1535 = vmatpush1.msra.mxu0 0.0
      %1536 = vmatprep.subr.mxu0 0.0
      %1537 = vmatpush1.msra.mxu0 0.0
      %1538 = vmatprep.subr.mxu0 0.0
      %1539 = vmatpush1.msra.mxu0 0.0
      %1540 = vmatprep.subr.mxu0 0.0
      %1541 = vmatpush1.msra.mxu0 0.0
      %1542 = vmatprep.subr.mxu0 0.0
      %1543 = vmatpush1.msra.mxu0 0.0
      %1544 = vmatprep.subr.mxu0 0.0
      %1545 = vmatpush1.msra.mxu0 0.0
      %1546 = vmatprep.subr.mxu0 0.0
      %1547 = vmatpush1.msra.mxu0 0.0
      %1548 = vmatprep.subr.mxu0 0.0
      %1549 = vmatpush1.msra.mxu0 0.0
      %1550 = vmatprep.subr.mxu0 0.0
      %1551 = vmatpush1.msra.mxu0 0.0
      %1552 = vmatprep.subr.mxu0 0.0
      %1553 = vmatpush1.msra.mxu0 0.0
      %1554 = vmatprep.subr.mxu0 0.0
      %1555 = vmatpush1.msra.mxu0 0.0
      %1556 = vmatprep.subr.mxu0 0.0
      %1557 = vmatpush1.msra.mxu0 0.0
      %1558 = vmatprep.subr.mxu0 0.0
      %1559 = vmatpush1.msra.mxu0 0.0
      %1560 = vmatprep.subr.mxu0 0.0
      %1561 = vmatpush1.msra.mxu0 0.0
      %1562 = vmatprep.subr.mxu0 0.0
      %1563 = vmatpush1.msra.mxu0 0.0
      %1564 = vmatprep.subr.mxu0 0.0
      %1565 = vmatpush1.msra.mxu0 0.0
      %1566 = vmatprep.subr.mxu0 0.0
      %1567 = vmatpush1.msra.mxu0 0.0
      %1568 = vmatprep.subr.mxu0 0.0
      %1569 = vmatpush1.msra.mxu0 0.0
      %1570 = vmatprep.subr.mxu0 0.0
      %1571 = vmatpush1.msra.mxu0 0.0
      %1572 = vmatprep.mubr.f32.mxu0 0.0
      %1573 = vmatmul.mubr.f32.gmra.mrb[0].mxu0 %v1506
      %v1574 = vpop.f32.mrb[0].mxu0
      %v1575 = vadd.f32 0.0, %v1574
      %v1576 = vpop.f32.mrb[0].mxu0
      %v1577 = vadd.f32 0.0, %v1576
      %1578 = vdwg.mxu0
      %v1581 = vcombine.low %v1575, %v1577
      %1583 = vst [vmem:[%s832] sm:$0xff] %v1581
      %1584 = vrot.lane.b32.xlu0 %v1575, 17
      %v1585 = vpop.permute.xlu0 %1584
      %1586 = vrot.lane.b32.xlu0 %v1577, 17
      %v1587 = vpop.permute.xlu0 %1586
      %vm1588 = vcmask 138240
      %v1589 = vsel %vm1588, %v1585, %v1587
      %v1592 = vsel %vm1588, 0.0, %v1585
      %v1593 = vld [vmem:[%s19] sm:$0x3]
      %v1595 = vlaneseq
      %v1596 = vshrl.u32 %v1595, 7
      %v1597 = vsub.s32 0, %v1596
      %v1598 = vrot.slane %v1593, %v1597
      %v1599 = vlaneseq
      %v1600 = vshrl.u32 %v1599, 7
      %v1601 = vsub.s32 1, %v1600
      %v1602 = vrot.slane %v1593, %v1601
      %v1605 = vmul.f32 %v1592, %v1598
      %v1606 = vmul.f32 %v1589, %v1602
      %v1607 = vld [vmem:[%s17] sm:$0xf]
      %1609 = vset.pattern.permute.xlu0 0
      %1610 = vperm.xlu0 %1609, %v1607
      %v1611 = vpop.permute.xlu0 %1610
      %v1613 = vmul.f32 %v1605, %v1611
      %v1614 = vmul.f32 %v1606, %v1611
      %1615 = vrot.lane.b32.xlu0 %v1575, 16
      %v1616 = vpop.permute.xlu0 %1615
      %1617 = vrot.lane.b32.xlu0 %v1577, 16
      %v1618 = vpop.permute.xlu0 %1617
      %vm1619 = vcmask 130048
      %v1620 = vsel %vm1619, %v1616, %v1618
      %v1623 = vsel %vm1619, 0.0, %v1616
      %s1624 = scalar_lea.vmem %s19, 2
      %v1625 = vld [vmem:[%s1624] sm:$0x3]
      %v1627 = vlaneseq
      %v1628 = vshrl.u32 %v1627, 7
      %v1629 = vsub.s32 0, %v1628
      %v1630 = vrot.slane %v1625, %v1629
      %v1631 = vlaneseq
      %v1632 = vshrl.u32 %v1631, 7
      %v1633 = vsub.s32 1, %v1632
      %v1634 = vrot.slane %v1625, %v1633
      %v1637 = vmul.f32 %v1623, %v1630
      %v1638 = vmul.f32 %v1620, %v1634
      %s1639 = scalar_lea.vmem %s17, 4
      %v1640 = vld [vmem:[%s1639] sm:$0xf]
      %1642 = vset.pattern.permute.xlu0 0
      %1643 = vperm.xlu0 %1642, %v1640
      %v1644 = vpop.permute.xlu0 %1643
      %v1646 = vmul.f32 %v1637, %v1644
      %v1647 = vmul.f32 %v1638, %v1644
      %v1648 = vadd.f32 %v1613, %v1646
      %v1649 = vadd.f32 %v1614, %v1647
      %1650 = vrot.lane.b32.xlu0 %v1575, 15
      %v1651 = vpop.permute.xlu0 %1650
      %1652 = vrot.lane.b32.xlu0 %v1577, 15
      %v1653 = vpop.permute.xlu0 %1652
      %vm1654 = vcmask 121856
      %v1655 = vsel %vm1654, %v1651, %v1653
      %v1658 = vsel %vm1654, 0.0, %v1651
      %s1659 = scalar_lea.vmem %s19, 4
      %v1660 = vld [vmem:[%s1659] sm:$0x3]
      %v1662 = vlaneseq
      %v1663 = vshrl.u32 %v1662, 7
      %v1664 = vsub.s32 0, %v1663
      %v1665 = vrot.slane %v1660, %v1664
      %v1666 = vlaneseq
      %v1667 = vshrl.u32 %v1666, 7
      %v1668 = vsub.s32 1, %v1667
      %v1669 = vrot.slane %v1660, %v1668
      %v1672 = vmul.f32 %v1658, %v1665
      %v1673 = vmul.f32 %v1655, %v1669
      %s1674 = scalar_lea.vmem %s17, 8
      %v1675 = vld [vmem:[%s1674] sm:$0xf]
      %1677 = vset.pattern.permute.xlu0 0
      %1678 = vperm.xlu0 %1677, %v1675
      %v1679 = vpop.permute.xlu0 %1678
      %v1681 = vmul.f32 %v1672, %v1679
      %v1682 = vmul.f32 %v1673, %v1679
      %v1683 = vadd.f32 %v1648, %v1681
      %v1684 = vadd.f32 %v1649, %v1682
      %1685 = vrot.lane.b32.xlu0 %v1575, 1
      %v1686 = vpop.permute.xlu0 %1685
      %1687 = vrot.lane.b32.xlu0 %v1577, 1
      %v1688 = vpop.permute.xlu0 %1687
      %vm1689 = vcmask 7168
      %v1690 = vsel %vm1689, %v1686, %v1688
      %v1693 = vsel %vm1689, 0.0, %v1686
      %s1694 = scalar_lea.vmem %s19, 6
      %v1695 = vld [vmem:[%s1694] sm:$0x3]
      %v1697 = vlaneseq
      %v1698 = vshrl.u32 %v1697, 7
      %v1699 = vsub.s32 0, %v1698
      %v1700 = vrot.slane %v1695, %v1699
      %v1701 = vlaneseq
      %v1702 = vshrl.u32 %v1701, 7
      %v1703 = vsub.s32 1, %v1702
      %v1704 = vrot.slane %v1695, %v1703
      %v1707 = vmul.f32 %v1693, %v1700
      %v1708 = vmul.f32 %v1690, %v1704
      %s1709 = scalar_lea.vmem %s17, 12
      %v1710 = vld [vmem:[%s1709] sm:$0xf]
      %1712 = vset.pattern.permute.xlu0 0
      %1713 = vperm.xlu0 %1712, %v1710
      %v1714 = vpop.permute.xlu0 %1713
      %v1716 = vmul.f32 %v1707, %v1714
      %v1717 = vmul.f32 %v1708, %v1714
      %v1718 = vadd.f32 %v1683, %v1716
      %v1719 = vadd.f32 %v1684, %v1717
      %s1720 = scalar_lea.vmem %s19, 8
      %v1721 = vld [vmem:[%s1720] sm:$0x3]
      %v1723 = vlaneseq
      %v1724 = vshrl.u32 %v1723, 7
      %v1725 = vsub.s32 0, %v1724
      %v1726 = vrot.slane %v1721, %v1725
      %v1727 = vlaneseq
      %v1728 = vshrl.u32 %v1727, 7
      %v1729 = vsub.s32 1, %v1728
      %v1730 = vrot.slane %v1721, %v1729
      %v1733 = vmul.f32 %v1575, %v1726
      %v1734 = vmul.f32 %v1577, %v1730
      %s1735 = scalar_lea.vmem %s17, 16
      %v1736 = vld [vmem:[%s1735] sm:$0xf]
      %1738 = vset.pattern.permute.xlu0 0
      %1739 = vperm.xlu0 %1738, %v1736
      %v1740 = vpop.permute.xlu0 %1739
      %v1742 = vmul.f32 %v1733, %v1740
      %v1743 = vmul.f32 %v1734, %v1740
      %v1744 = vadd.f32 %v1718, %v1742
      %v1745 = vadd.f32 %v1719, %v1743
      %1746 = vrot.lane.b32.xlu0 %v1575, 127
      %v1747 = vpop.permute.xlu0 %1746
      %1748 = vrot.lane.b32.xlu0 %v1577, 127
      %v1749 = vpop.permute.xlu0 %1748
      %vm1750 = vcmask 1039360
      %v1751 = vsel %vm1750, %v1747, %v1749
      %v1754 = vsel %vm1750, %v1749, 0.0
      %s1755 = scalar_lea.vmem %s19, 10
      %v1756 = vld [vmem:[%s1755] sm:$0x3]
      %v1758 = vlaneseq
      %v1759 = vshrl.u32 %v1758, 7
      %v1760 = vsub.s32 0, %v1759
      %v1761 = vrot.slane %v1756, %v1760
      %v1762 = vlaneseq
      %v1763 = vshrl.u32 %v1762, 7
      %v1764 = vsub.s32 1, %v1763
      %v1765 = vrot.slane %v1756, %v1764
      %v1768 = vmul.f32 %v1751, %v1761
      %v1769 = vmul.f32 %v1754, %v1765
      %s1770 = scalar_lea.vmem %s17, 20
      %v1771 = vld [vmem:[%s1770] sm:$0xf]
      %1773 = vset.pattern.permute.xlu0 0
      %1774 = vperm.xlu0 %1773, %v1771
      %v1775 = vpop.permute.xlu0 %1774
      %v1777 = vmul.f32 %v1768, %v1775
      %v1778 = vmul.f32 %v1769, %v1775
      %v1779 = vadd.f32 %v1744, %v1777
      %v1780 = vadd.f32 %v1745, %v1778
      %1781 = vrot.lane.b32.xlu0 %v1575, 113
      %v1782 = vpop.permute.xlu0 %1781
      %1783 = vrot.lane.b32.xlu0 %v1577, 113
      %v1784 = vpop.permute.xlu0 %1783
      %vm1785 = vcmask 924672
      %v1786 = vsel %vm1785, %v1782, %v1784
      %v1789 = vsel %vm1785, %v1784, 0.0
      %s1790 = scalar_lea.vmem %s19, 12
      %v1791 = vld [vmem:[%s1790] sm:$0x3]
      %v1793 = vlaneseq
      %v1794 = vshrl.u32 %v1793, 7
      %v1795 = vsub.s32 0, %v1794
      %v1796 = vrot.slane %v1791, %v1795
      %v1797 = vlaneseq
      %v1798 = vshrl.u32 %v1797, 7
      %v1799 = vsub.s32 1, %v1798
      %v1800 = vrot.slane %v1791, %v1799
      %v1803 = vmul.f32 %v1786, %v1796
      %v1804 = vmul.f32 %v1789, %v1800
      %s1805 = scalar_lea.vmem %s17, 24
      %v1806 = vld [vmem:[%s1805] sm:$0xf]
      %1808 = vset.pattern.permute.xlu0 0
      %1809 = vperm.xlu0 %1808, %v1806
      %v1810 = vpop.permute.xlu0 %1809
      %v1812 = vmul.f32 %v1803, %v1810
      %v1813 = vmul.f32 %v1804, %v1810
      %v1814 = vadd.f32 %v1779, %v1812
      %v1815 = vadd.f32 %v1780, %v1813
      %1816 = vrot.lane.b32.xlu0 %v1575, 112
      %v1817 = vpop.permute.xlu0 %1816
      %1818 = vrot.lane.b32.xlu0 %v1577, 112
      %v1819 = vpop.permute.xlu0 %1818
      %vm1820 = vcmask 916480
      %v1821 = vsel %vm1820, %v1817, %v1819
      %v1824 = vsel %vm1820, %v1819, 0.0
      %s1825 = scalar_lea.vmem %s19, 14
      %v1826 = vld [vmem:[%s1825] sm:$0x3]
      %v1828 = vlaneseq
      %v1829 = vshrl.u32 %v1828, 7
      %v1830 = vsub.s32 0, %v1829
      %v1831 = vrot.slane %v1826, %v1830
      %v1832 = vlaneseq
      %v1833 = vshrl.u32 %v1832, 7
      %v1834 = vsub.s32 1, %v1833
      %v1835 = vrot.slane %v1826, %v1834
      %v1838 = vmul.f32 %v1821, %v1831
      %v1839 = vmul.f32 %v1824, %v1835
      %s1840 = scalar_lea.vmem %s17, 28
      %v1841 = vld [vmem:[%s1840] sm:$0xf]
      %1843 = vset.pattern.permute.xlu0 0
      %1844 = vperm.xlu0 %1843, %v1841
      %v1845 = vpop.permute.xlu0 %1844
      %v1847 = vmul.f32 %v1838, %v1845
      %v1848 = vmul.f32 %v1839, %v1845
      %v1849 = vadd.f32 %v1814, %v1847
      %v1850 = vadd.f32 %v1815, %v1848
      %1851 = vrot.lane.b32.xlu0 %v1575, 111
      %v1852 = vpop.permute.xlu0 %1851
      %1853 = vrot.lane.b32.xlu0 %v1577, 111
      %v1854 = vpop.permute.xlu0 %1853
      %vm1855 = vcmask 908288
      %v1856 = vsel %vm1855, %v1852, %v1854
      %v1859 = vsel %vm1855, %v1854, 0.0
      %s1860 = scalar_lea.vmem %s19, 16
      %v1861 = vld [vmem:[%s1860] sm:$0x3]
      %v1863 = vlaneseq
      %v1864 = vshrl.u32 %v1863, 7
      %v1865 = vsub.s32 0, %v1864
      %v1866 = vrot.slane %v1861, %v1865
      %v1867 = vlaneseq
      %v1868 = vshrl.u32 %v1867, 7
      %v1869 = vsub.s32 1, %v1868
      %v1870 = vrot.slane %v1861, %v1869
      %v1873 = vmul.f32 %v1856, %v1866
      %v1874 = vmul.f32 %v1859, %v1870
      %s1875 = scalar_lea.vmem %s17, 32
      %v1876 = vld [vmem:[%s1875] sm:$0xf]
      %1878 = vset.pattern.permute.xlu0 0
      %1879 = vperm.xlu0 %1878, %v1876
      %v1880 = vpop.permute.xlu0 %1879
      %v1882 = vmul.f32 %v1873, %v1880
      %v1883 = vmul.f32 %v1874, %v1880
      %v1884 = vadd.f32 %v1849, %v1882
      %v1885 = vadd.f32 %v1850, %v1883
      %v1886 = vld [vmem:[%s18] sm:$0xf]
      %1888 = vset.pattern.permute.xlu0 0
      %1889 = vperm.xlu0 %1888, %v1886
      %v1890 = vpop.permute.xlu0 %1889
      %v1892 = vadd.f32 %v1884, %v1890
      %v1893 = vadd.f32 %v1885, %v1890
      %v1894 = vmul.f32 %v1892, 0.5
      %v1895 = vmul.f32 %v1893, 0.5
      %v1896 = vmul.f32 %v1892, 0.70710677
      %v1897 = vmul.f32 %v1893, 0.70710677
      %v1898 = vand.u32 2147483647, %v1896
      %v1899 = vand.u32 2147483647, %v1897
      %v1900 = vmul.f32 %v1898, 0.3275911
      %v1901 = vmul.f32 %v1899, 0.3275911
      %v1902 = vadd.f32 %v1900, 1.0
      %v1903 = vadd.f32 %v1901, 1.0
      %v1904 = vrcp.pop %v1902
      %v1905 = vmul.f32 1.0, %v1904
      %v1906 = vrcp.pop %v1903
      %v1907 = vmul.f32 1.0, %v1906
      %v1908 = vmul.f32 %v1905, 1.0614054
      %v1909 = vmul.f32 %v1907, 1.0614054
      %v1910 = vadd.f32 %v1908, -1.4531521
      %v1911 = vadd.f32 %v1909, -1.4531521
      %v1912 = vmul.f32 %v1910, %v1905
      %v1913 = vmul.f32 %v1911, %v1907
      %v1914 = vadd.f32 %v1912, 1.4214138
      %v1915 = vadd.f32 %v1913, 1.4214138
      %v1916 = vmul.f32 %v1914, %v1905
      %v1917 = vmul.f32 %v1915, %v1907
      %v1918 = vadd.f32 %v1916, -0.28449672
      %v1919 = vadd.f32 %v1917, -0.28449672
      %v1920 = vmul.f32 %v1918, %v1905
      %v1921 = vmul.f32 %v1919, %v1907
      %v1922 = vadd.f32 %v1920, 0.2548296
      %v1923 = vadd.f32 %v1921, 0.2548296
      %v1924 = vmul.f32 %v1922, %v1905
      %v1925 = vmul.f32 %v1923, %v1907
      %v1926 = vsub.f32 0.0, %v1898
      %v1927 = vsub.f32 0.0, %v1899
      %v1928 = vmul.f32 %v1926, %v1898
      %v1929 = vmul.f32 %v1927, %v1899
      %v1930 = vmul.f32 %v1928, 1.442695
      %v1931 = vpow.pop %v1930
      %v1932 = vmul.f32 %v1929, 1.442695
      %v1933 = vpow.pop %v1932
      %v1934 = vmul.f32 %v1924, %v1931
      %v1935 = vmul.f32 %v1925, %v1933
      %v1936 = vsub.f32 1.0, %v1934
      %v1937 = vsub.f32 1.0, %v1935
      %vm1938 = vcmp.ge.f32.partialorder %v1896, 0.0
      %vm1939 = vcmp.ge.f32.partialorder %v1897, 0.0
      %v1940 = vsub.f32 0.0, %v1936
      %v1941 = vsub.f32 0.0, %v1937
      %v1942 = vsel %vm1938, %v1936, %v1940
      %v1943 = vsel %vm1939, %v1937, %v1941
      %v1944 = vadd.f32 %v1942, 1.0
      %v1945 = vadd.f32 %v1943, 1.0
      %v1946 = vmul.f32 %v1894, %v1944
      %v1947 = vmul.f32 %v1895, %v1945
      %v1948 = vld [vmem:[%s20] sm:$0xf]
      %v1949 = vld [vmem:[%s21] sm:$0xf]
      %1951 = vset.pattern.permute.xlu0 0
      %1952 = vperm.xlu0 %1951, %v1949
      %v1953 = vpop.permute.xlu0 %1952
      %v1956 = vsel %vm854, %v1948, 0
      %v1959 = vsel %vm858, %v1946, 0
      %v1962 = vsel %vm858, %v1947, 0
      %1964 = vmatprep.subr.mxu0 %v1962
      %1965 = vmatpush1.msra.mxu0 %v1959
      %1966 = vmatprep.subr.mxu0 0.0
      %1967 = vmatpush1.msra.mxu0 0.0
      %1968 = vmatprep.subr.mxu0 0.0
      %1969 = vmatpush1.msra.mxu0 0.0
      %1970 = vmatprep.subr.mxu0 0.0
      %1971 = vmatpush1.msra.mxu0 0.0
      %1972 = vmatprep.subr.mxu0 0.0
      %1973 = vmatpush1.msra.mxu0 0.0
      %1974 = vmatprep.subr.mxu0 0.0
      %1975 = vmatpush1.msra.mxu0 0.0
      %1976 = vmatprep.subr.mxu0 0.0
      %1977 = vmatpush1.msra.mxu0 0.0
      %1978 = vmatprep.subr.mxu0 0.0
      %1979 = vmatpush1.msra.mxu0 0.0
      %1980 = vmatprep.subr.mxu0 0.0
      %1981 = vmatpush1.msra.mxu0 0.0
      %1982 = vmatprep.subr.mxu0 0.0
      %1983 = vmatpush1.msra.mxu0 0.0
      %1984 = vmatprep.subr.mxu0 0.0
      %1985 = vmatpush1.msra.mxu0 0.0
      %1986 = vmatprep.subr.mxu0 0.0
      %1987 = vmatpush1.msra.mxu0 0.0
      %1988 = vmatprep.subr.mxu0 0.0
      %1989 = vmatpush1.msra.mxu0 0.0
      %1990 = vmatprep.subr.mxu0 0.0
      %1991 = vmatpush1.msra.mxu0 0.0
      %1992 = vmatprep.subr.mxu0 0.0
      %1993 = vmatpush1.msra.mxu0 0.0
      %1994 = vmatprep.subr.mxu0 0.0
      %1995 = vmatpush1.msra.mxu0 0.0
      %1996 = vmatprep.subr.mxu0 0.0
      %1997 = vmatpush1.msra.mxu0 0.0
      %1998 = vmatprep.subr.mxu0 0.0
      %1999 = vmatpush1.msra.mxu0 0.0
      %2000 = vmatprep.subr.mxu0 0.0
      %2001 = vmatpush1.msra.mxu0 0.0
      %2002 = vmatprep.subr.mxu0 0.0
      %2003 = vmatpush1.msra.mxu0 0.0
      %2004 = vmatprep.subr.mxu0 0.0
      %2005 = vmatpush1.msra.mxu0 0.0
      %2006 = vmatprep.subr.mxu0 0.0
      %2007 = vmatpush1.msra.mxu0 0.0
      %2008 = vmatprep.subr.mxu0 0.0
      %2009 = vmatpush1.msra.mxu0 0.0
      %2010 = vmatprep.subr.mxu0 0.0
      %2011 = vmatpush1.msra.mxu0 0.0
      %2012 = vmatprep.subr.mxu0 0.0
      %2013 = vmatpush1.msra.mxu0 0.0
      %2014 = vmatprep.subr.mxu0 0.0
      %2015 = vmatpush1.msra.mxu0 0.0
      %2016 = vmatprep.subr.mxu0 0.0
      %2017 = vmatpush1.msra.mxu0 0.0
      %2018 = vmatprep.subr.mxu0 0.0
      %2019 = vmatpush1.msra.mxu0 0.0
      %2020 = vmatprep.subr.mxu0 0.0
      %2021 = vmatpush1.msra.mxu0 0.0
      %2022 = vmatprep.subr.mxu0 0.0
      %2023 = vmatpush1.msra.mxu0 0.0
      %2024 = vmatprep.subr.mxu0 0.0
      %2025 = vmatpush1.msra.mxu0 0.0
      %2026 = vmatprep.subr.mxu0 0.0
      %2027 = vmatpush1.msra.mxu0 0.0
      %2028 = vmatprep.mubr.f32.mxu0 0.0
      %2029 = vmatmul.mubr.f32.gmra.mrb[0].mxu0 %v1956
      %v2030 = vpop.f32.mrb[0].mxu0
      %v2031 = vadd.f32 %v1953, %v2030
      %v2032 = vpop.f32.mrb[0].mxu0
      %v2033 = vadd.f32 %v1953, %v2032
      %2034 = vdwg.mxu0
      %v2037 = vcombine.low %v2031, %v2033
      %2039 = vst [vmem:[%s837] sm:$0xff] %v2037
      %v2040 = vsel %vm858, %v2031, 0.0
      %v2041 = vsel %vm858, %v2033, 0.0
      %v2042 = vadd.f32 %v2040, %v2041
      %2043 = vadd.xlane.f32.xlu0 %v2042
      %v2044 = vpop.xlane.xlu0 %2043
      %v2045 = vrcp.pop 256.0
      %v2046 = vmul.f32 %v2044, %v2045
      %v2047 = vsub.f32 %v2031, %v2046
      %v2048 = vsub.f32 %v2033, %v2046
      %v2049 = vmul.f32 %v2047, %v2047
      %v2050 = vmul.f32 %v2048, %v2048
      %v2051 = vsel %vm858, %v2049, 0.0
      %v2052 = vsel %vm858, %v2050, 0.0
      %v2053 = vadd.f32 %v2051, %v2052
      %2054 = vadd.xlane.f32.xlu0 %v2053
      %v2055 = vpop.xlane.xlu0 %2054
      %vm2056 = vcmask 3072
      %2057 = vst.msk [vmem:[%s841] sm:$0xf] %vm2056, %v2046
      %2058 = vst.msk [vmem:[%s845] sm:$0xf] %vm2056, %v2055
      %p2059 = scmp.lt.s32.totalorder %s37, 1
      %s2060 = scalar_select %p2059, %s37, 1
      %s2061 = smul.addr %s2060, 2
      %s2062 = smul.addr %s2061, 4
      %s2063 = scalar_lea.vmem %s22, %s2062
      %p2064 = scmp.lt.s32.totalorder %s37, 1
      %s2065 = scalar_select %p2064, %s37, 1
      %s2066 = smul.addr %s2065, 2
      %s2067 = smul.addr %s2066, 4
      %s2068 = scalar_lea.vmem %s23, %s2067
      %p2069 = scmp.lt.s32.totalorder %s37, 1
      %s2070 = scalar_select %p2069, %s37, 1
      %s2071 = smul.addr %s2070, 4
      %s2072 = scalar_lea.vmem %s24, %s2071
      %p2073 = scmp.lt.s32.totalorder %s37, 1
      %s2074 = scalar_select %p2073, %s37, 1
      %s2075 = smul.addr %s2074, 4
      %s2076 = scalar_lea.vmem %s25, %s2075
      // Predicated region
      $region109: #{hpb_forward.4} parent=107 // pred_check
        %p2077 = pneg %p537
      $region110: #{hpb_forward.4} parent=107 // pred_check_branch
        %2079 = sbr.rel (%p2077) target = $region112
      $region111: #{hpb_forward.4} parent=107 // pred_region
        _
      $region112: #{hpb_forward.4} parent=107 // pred_fallthru
        _
      // Predicated region
      $region113: #{hpb_forward.4} parent=107 // pred_check
        %p2080 = pneg %p563
      $region114: #{hpb_forward.4} parent=107 // pred_check_branch
        %2082 = sbr.rel (%p2080) target = $region116
      $region115: #{hpb_forward.4} parent=107 // pred_region
        _
      $region116: #{hpb_forward.4} parent=107 // pred_fallthru
        _
      // Predicated region
      $region117: #{hpb_forward.4} parent=107 // pred_check
        %p2083 = pneg %p589
      $region118: #{hpb_forward.4} parent=107 // pred_check_branch
        %2085 = sbr.rel (%p2083) target = $region120
      $region119: #{hpb_forward.4} parent=107 // pred_region
        _
      $region120: #{hpb_forward.4} parent=107 // pred_fallthru
        _
      // Predicated region
      $region121: #{hpb_forward.4} parent=107 // pred_check
        %p2086 = pneg %p615
      $region122: #{hpb_forward.4} parent=107 // pred_check_branch
        %2088 = sbr.rel (%p2086) target = $region124
      $region123: #{hpb_forward.4} parent=107 // pred_region
        _
      $region124: #{hpb_forward.4} parent=107 // pred_fallthru
        _
    $region108: #{hpb_forward.4} parent=5 // pred_fallthru
      _
    %p2089 = scmp.le.s32.totalorder 2, %s32
    // Predicated region
    $region125: #{hpb_forward.4} parent=5 // pred_check
      %p2090 = pneg %p2089
    $region126: #{hpb_forward.4} parent=5 // pred_check_branch
      %2092 = sbr.rel (%p2090) target = $region128
    $region127: #{hpb_forward.4} parent=5 // pred_region
      %s2093 = ssub.s32 %s32, 2
      // Predicated region
      $region129: #{hpb_forward.4} parent=127 // pred_check
        %p2094 = pneg %p543
      $region130: #{hpb_forward.4} parent=127 // pred_check_branch
        %2096 = sbr.rel (%p2094) target = $region132
      $region131: #{hpb_forward.4} parent=127 // pred_region
        %p2097 = scmp.lt.s32.totalorder %s38, 1
        %s2098 = scalar_select %p2097, %s38, 1
        %s2099 = smul.addr %s2098, 2
        %s2100 = smul.addr %s2099, 4
        %s2101 = scalar_lea.vmem %s22, %s2100
      $region132: #{hpb_forward.4} parent=127 // pred_fallthru
        _
      // Predicated region
      $region133: #{hpb_forward.4} parent=127 // pred_check
        %p2102 = pneg %p569
      $region134: #{hpb_forward.4} parent=127 // pred_check_branch
        %2104 = sbr.rel (%p2102) target = $region136
      $region135: #{hpb_forward.4} parent=127 // pred_region
        %p2105 = scmp.lt.s32.totalorder %s38, 1
        %s2106 = scalar_select %p2105, %s38, 1
        %s2107 = smul.addr %s2106, 2
        %s2108 = smul.addr %s2107, 4
        %s2109 = scalar_lea.vmem %s23, %s2108
      $region136: #{hpb_forward.4} parent=127 // pred_fallthru
        _
      // Predicated region
      $region137: #{hpb_forward.4} parent=127 // pred_check
        %p2110 = pneg %p595
      $region138: #{hpb_forward.4} parent=127 // pred_check_branch
        %2112 = sbr.rel (%p2110) target = $region140
      $region139: #{hpb_forward.4} parent=127 // pred_region
        %p2113 = scmp.lt.s32.totalorder %s38, 1
        %s2114 = scalar_select %p2113, %s38, 1
        %s2115 = smul.addr %s2114, 4
        %s2116 = scalar_lea.vmem %s24, %s2115
      $region140: #{hpb_forward.4} parent=127 // pred_fallthru
        _
      // Predicated region
      $region141: #{hpb_forward.4} parent=127 // pred_check
        %p2117 = pneg %p621
      $region142: #{hpb_forward.4} parent=127 // pred_check_branch
        %2119 = sbr.rel (%p2117) target = $region144
      $region143: #{hpb_forward.4} parent=127 // pred_region
        %p2120 = scmp.lt.s32.totalorder %s38, 1
        %s2121 = scalar_select %p2120, %s38, 1
        %s2122 = smul.addr %s2121, 4
        %s2123 = scalar_lea.vmem %s25, %s2122
      $region144: #{hpb_forward.4} parent=127 // pred_fallthru
        _
    $region128: #{hpb_forward.4} parent=5 // pred_fallthru
      _
  $region6: #{hpb_forward.4} parent=0 // loop_footer
    %s36 = sadd.s32 1, %s32
  $region7: #{hpb_forward.4} parent=0 // loop_footer_branch
    %31 = sbr.rel target = $region3
  $region8: #{hpb_forward.4} parent=0 // loop_exit
    _

</llo_original>
